<compile_context>
chip_gen: v5e
topology: v5e:2x2
jax: 0.10.0
libtpu: 0.0.40
codegen_flags: <defaults>
</compile_context>

<pallas_src>
import math

import jax
import jax.numpy as jnp
from jax import lax
from jax.experimental import pallas as pl
from jax.experimental.pallas import tpu as pltpu

# ----------------------- model hyper-parameters ---------------------------
NUM_AGENTS = 8       # rows of h
VIBE_DIM   = 32      # vibe_dim
N_HEADS    = 4
HEAD_DIM   = VIBE_DIM // N_HEADS
TIME_STEPS = 4       # torch.linspace(0.0, 1.0, time_steps)
DT         = 1.0 / (TIME_STEPS - 1)   # uniform spacing of linspace(0, 1, T)


# ------------------------------ Pallas kernel ------------------------------
def fused_rk4_kernel(h_ref, wqkv_ref, bqkv_ref, wout_ref, bout_ref, o_ref):
    """Integrate dh/dt = tanh(out_net(MHSA(qkv_net(h)))) from t=0 to t=1
    with fixed-step RK4, entirely on-chip.  Writes only the final h."""
    # Weights are resident bf16 (MXU-native operands, half the vreg bytes).
    wqkv = wqkv_ref[...]                                        # bf16 [D, 3D], Q pre-scaled
    wout = wout_ref[...]                                        # bf16 [D, D]
    # Hoist bias broadcasts out of the time loop (JAX does not CSE broadcast_in_dim).
    bqkv = jnp.broadcast_to(bqkv_ref[...], (NUM_AGENTS, 3 * VIBE_DIM))  # f32
    bout = jnp.broadcast_to(bout_ref[...], (NUM_AGENTS, VIBE_DIM))      # f32

    def f(h):
        # Single qkv projection (one MXU push), f32 accumulate + f32 bias.
        qkv = jnp.dot(h.astype(jnp.bfloat16), wqkv,
                      preferred_element_type=jnp.float32) + bqkv        # [N, 3D] f32
        qkv_b = qkv.astype(jnp.bfloat16)                                # dot operands

        ctx_heads = []
        for hd in range(N_HEADS):                                       # static head loop
            lo = hd * HEAD_DIM
            qh = qkv_b[:, lo:lo + HEAD_DIM]                             # bf16 [N, hd] (scaled)
            kh = qkv_b[:, VIBE_DIM + lo:VIBE_DIM + lo + HEAD_DIM]
            vh = qkv_b[:, 2 * VIBE_DIM + lo:2 * VIBE_DIM + lo + HEAD_DIM]

            # q @ k^T via dot_general contracting dim 1 of both (no transpose).
            scores = lax.dot_general(qh, kh, (((1,), (1,)), ((), ())),
                                     preferred_element_type=jnp.float32)  # [N, N] f32

            # Softmax over agents.  Max-subtraction dropped: scores are O(1)
            # here (bounded weights, tanh-bounded state, folded 1/sqrt(hd)),
            # so exp cannot overflow.  f32 elementwise path (v5e-safe).
            e = jnp.exp(scores)
            inv = pl.reciprocal(jnp.sum(e, axis=-1, keepdims=True), approx=True)
            probs = e * inv

            ctx_heads.append(jnp.dot(probs.astype(jnp.bfloat16), vh,
                                     preferred_element_type=jnp.float32))  # [N, hd] f32

        # One lane-concat (XLU) + ONE [8,32]@[32,32] out-projection dot instead
        # of 4 per-head dots + 3 VPU adds.
        ctx_all = jnp.concatenate(ctx_heads, axis=-1).astype(jnp.bfloat16)  # [N, D]
        update = jnp.dot(ctx_all, wout, preferred_element_type=jnp.float32) + bout
        return jnp.tanh(update)                                            # f32

    h = h_ref[...].astype(jnp.float32)
    for _ in range(TIME_STEPS - 1):        # 3 RK4 steps, fully unrolled (tiny trip count)
        k1 = f(h)
        k2 = f(h + (0.5 * DT) * k1)
        k3 = f(h + (0.5 * DT) * k2)
        k4 = f(h + DT * k3)
        h = h + (DT / 6.0) * (k1 + 2.0 * k2 + 2.0 * k3 + k4)

    o_ref[...] = h.astype(o_ref.dtype)


def _vmem_spec():
    return pl.BlockSpec(memory_space=pltpu.MemorySpace.VMEM)


# ------------------------- forward wrapper (one launch) --------------------
@jax.jit
def nightclub_ode_forward(initial_vibe, w_qkv_b, b_qkv, w_out_b, b_out):
    """Single pallas_call covering the full RK4 trajectory."""
    return pl.pallas_call(
        fused_rk4_kernel,
        out_shape=jax.ShapeDtypeStruct((NUM_AGENTS, VIBE_DIM), jnp.float32),
        in_specs=[_vmem_spec()] * 5,
        out_specs=_vmem_spec(),
    )(initial_vibe.astype(jnp.float32), w_qkv_b, b_qkv, w_out_b, b_out)


# ------------------------------ parameter init ------------------------------
def init_params(key):
    """Deterministic init mirroring nn.Linear's shapes (stored input-major).

    qkv_net: Linear(D, 3D)  -> w_qkv [D, 3D], b_qkv [1, 3D]
    out_net: Linear(D, D)   -> w_out [D, D],  b_out [1, D]
    """
    k1, k2, k3, k4 = jax.random.split(key, 4)
    bound = 1.0 / math.sqrt(VIBE_DIM)
    w_qkv = jax.random.uniform(k1, (VIBE_DIM, 3 * VIBE_DIM), jnp.float32, -bound, bound)
    b_qkv = jax.random.uniform(k2, (1, 3 * VIBE_DIM), jnp.float32, -bound, bound)
    w_out = jax.random.uniform(k3, (VIBE_DIM, VIBE_DIM), jnp.float32, -bound, bound)
    b_out = jax.random.uniform(k4, (1, VIBE_DIM), jnp.float32, -bound, bound)
    return w_qkv, b_qkv, w_out, b_out


def prepare_params(w_qkv, b_qkv, w_out, b_out):
    """One-time host-side prep: fold 1/sqrt(HEAD_DIM) into the Q slice of the
    qkv projection and cast the weight matrices to bf16 (MXU-native operands).
    Biases stay f32 (they are added on the VPU in f32)."""
    scale = 1.0 / math.sqrt(HEAD_DIM)
    w_qkv_s = jnp.concatenate([w_qkv[:, :VIBE_DIM] * scale, w_qkv[:, VIBE_DIM:]], axis=1)
    b_qkv_s = jnp.concatenate([b_qkv[:, :VIBE_DIM] * scale, b_qkv[:, VIBE_DIM:]], axis=1)
    return (w_qkv_s.astype(jnp.bfloat16), b_qkv_s,
            w_out.astype(jnp.bfloat16), b_out)


# ------------------------- pure-JAX f32 reference --------------------------
def _ode_f_reference(h, w_qkv, b_qkv, w_out, b_out):
    hi = jax.lax.Precision.HIGHEST
    qkv = jnp.dot(h, w_qkv, precision=hi) + b_qkv
    q, k, v = jnp.split(qkv, 3, axis=-1)
    q = q.reshape(NUM_AGENTS, N_HEADS, HEAD_DIM).transpose(1, 0, 2)
    k = k.reshape(NUM_AGENTS, N_HEADS, HEAD_DIM).transpose(1, 0, 2)
    v = v.reshape(NUM_AGENTS, N_HEADS, HEAD_DIM).transpose(1, 0, 2)
    scores = jnp.einsum('hqd,hkd->hqk', q, k, precision=hi) / math.sqrt(HEAD_DIM)
    probs = jax.nn.softmax(scores, axis=-1)
    ctx = jnp.einsum('hqk,hkd->hqd', probs, v, precision=hi)
    ctx = ctx.transpose(1, 0, 2).reshape(NUM_AGENTS, VIBE_DIM)
    return jnp.tanh(jnp.dot(ctx, w_out, precision=hi) + b_out)


def nightclub_ode_reference(h, w_qkv, b_qkv, w_out, b_out):
    f = lambda x: _ode_f_reference(x, w_qkv, b_qkv, w_out, b_out)
    for _ in range(TIME_STEPS - 1):
        k1 = f(h)
        k2 = f(h + 0.5 * DT * k1)
        k3 = f(h + 0.5 * DT * k2)
        k4 = f(h + DT * k3)
        h = h + (DT / 6.0) * (k1 + 2.0 * k2 + 2.0 * k3 + k4)
    return h


# ---------------------------------- main ------------------------------------
if __name__ == "__main__":
    key = jax.random.PRNGKey(0)
    pkey, xkey = jax.random.split(key)

    w_qkv, b_qkv, w_out, b_out = init_params(pkey)
    params = prepare_params(w_qkv, b_qkv, w_out, b_out)      # one-time, host side
    initial_vibe = jax.random.normal(xkey, (NUM_AGENTS, VIBE_DIM), jnp.float32)

    final_vibe = nightclub_ode_forward(initial_vibe, *params)
    final_vibe = jax.block_until_ready(final_vibe)

    assert final_vibe.shape == (NUM_AGENTS, VIBE_DIM)
    assert bool(jnp.all(jnp.isfinite(final_vibe)))

    # Sanity check vs a pure-JAX f32 reference.  Loose tolerance covers bf16
    # MXU operands, the approx EUP reciprocal and the dropped max-subtraction
    # accumulated over 3 RK4 steps (expected max-abs error is ~1e-2).
    ref = nightclub_ode_reference(initial_vibe, w_qkv, b_qkv, w_out, b_out)
    max_err = float(jnp.max(jnp.abs(final_vibe - ref)))
    assert max_err < 2e-1, f"kernel deviates from f32 reference: {max_err}"

    print("KERNEL_OK")
</pallas_src>

<mosaic_0001>
module attributes {stable_mosaic.version = 11 : i64} {
  func.func @fused_rk4_kernel(%arg0: memref<8x32xf32, #tpu.memory_space<vmem>>, %arg1: memref<32x96xbf16, #tpu.memory_space<vmem>>, %arg2: memref<1x96xf32, #tpu.memory_space<vmem>>, %arg3: memref<32x32xbf16, #tpu.memory_space<vmem>>, %arg4: memref<1x32xf32, #tpu.memory_space<vmem>>, %arg5: memref<8x32xf32, #tpu.memory_space<vmem>>) attributes {dimension_semantics = [], scalar_prefetch = 0 : i64, scratch_operands = 0 : i64, tpu.core_type = #tpu.core_type<tc>} {
    %c0 = arith.constant 0 : index
    %c0_0 = arith.constant 0 : index
    %0 = vector.load %arg1[%c0, %c0_0] : memref<32x96xbf16, #tpu.memory_space<vmem>>, vector<32x96xbf16>
    %c0_1 = arith.constant 0 : index
    %c0_2 = arith.constant 0 : index
    %1 = vector.load %arg3[%c0_1, %c0_2] : memref<32x32xbf16, #tpu.memory_space<vmem>>, vector<32x32xbf16>
    %c0_3 = arith.constant 0 : index
    %c0_4 = arith.constant 0 : index
    %2 = vector.load %arg2[%c0_3, %c0_4] : memref<1x96xf32, #tpu.memory_space<vmem>>, vector<1x96xf32>
    %3 = vector.shape_cast %2 : vector<1x96xf32> to vector<1x96xf32>
    %4 = vector.broadcast %3 : vector<1x96xf32> to vector<8x96xf32>
    %c0_5 = arith.constant 0 : index
    %c0_6 = arith.constant 0 : index
    %5 = vector.load %arg4[%c0_5, %c0_6] : memref<1x32xf32, #tpu.memory_space<vmem>>, vector<1x32xf32>
    %6 = vector.shape_cast %5 : vector<1x32xf32> to vector<1x32xf32>
    %7 = vector.broadcast %6 : vector<1x32xf32> to vector<8x32xf32>
    %c0_7 = arith.constant 0 : index
    %c0_8 = arith.constant 0 : index
    %8 = vector.load %arg0[%c0_7, %c0_8] : memref<8x32xf32, #tpu.memory_space<vmem>>, vector<8x32xf32>
    %9 = arith.truncf %8 : vector<8x32xf32> to vector<8x32xbf16>
    %cst = arith.constant dense<0.000000e+00> : vector<8x96xf32>
    %10 = tpu.matmul %9, %0, %cst {dimension_numbers = #tpu.dot_dimension_numbers<[1], [0], [0], [1], [0, 0, 1, 1], [], []>} : vector<8x32xbf16>, vector<32x96xbf16>, vector<8x96xf32> -> vector<8x96xf32>
    %11 = arith.addf %10, %4 : vector<8x96xf32>
    %12 = arith.truncf %11 : vector<8x96xf32> to vector<8x96xbf16>
    %13 = vector.extract_strided_slice %12 {offsets = [0, 0], sizes = [8, 8], strides = [1, 1]} : vector<8x96xbf16> to vector<8x8xbf16>
    %14 = vector.extract_strided_slice %12 {offsets = [0, 32], sizes = [8, 8], strides = [1, 1]} : vector<8x96xbf16> to vector<8x8xbf16>
    %15 = vector.extract_strided_slice %12 {offsets = [0, 64], sizes = [8, 8], strides = [1, 1]} : vector<8x96xbf16> to vector<8x8xbf16>
    %cst_9 = arith.constant dense<0.000000e+00> : vector<8x8xf32>
    %16 = tpu.matmul %13, %14, %cst_9 {dimension_numbers = #tpu.dot_dimension_numbers<[1], [1], [0], [0], [0, 0, 1, 0], [], []>} : vector<8x8xbf16>, vector<8x8xbf16>, vector<8x8xf32> -> vector<8x8xf32>
    %17 = math.exp %16 : vector<8x8xf32>
    %cst_10 = arith.constant dense<0.000000e+00> : vector<8xf32>
    %18 = vector.multi_reduction <add>, %17, %cst_10 [1] : vector<8x8xf32> to vector<8xf32>
    %19 = vector.shape_cast %18 : vector<8xf32> to vector<8x1xf32>
    %20 = tpu.reciprocal %19 {approx = true} : vector<8x1xf32> -> vector<8x1xf32>
    %21 = vector.broadcast %20 : vector<8x1xf32> to vector<8x8xf32>
    %22 = arith.mulf %17, %21 : vector<8x8xf32>
    %23 = arith.truncf %22 : vector<8x8xf32> to vector<8x8xbf16>
    %cst_11 = arith.constant dense<0.000000e+00> : vector<8x8xf32>
    %24 = tpu.matmul %23, %15, %cst_11 {dimension_numbers = #tpu.dot_dimension_numbers<[1], [0], [0], [1], [0, 0, 1, 1], [], []>} : vector<8x8xbf16>, vector<8x8xbf16>, vector<8x8xf32> -> vector<8x8xf32>
    %25 = vector.extract_strided_slice %12 {offsets = [0, 8], sizes = [8, 8], strides = [1, 1]} : vector<8x96xbf16> to vector<8x8xbf16>
    %26 = vector.extract_strided_slice %12 {offsets = [0, 40], sizes = [8, 8], strides = [1, 1]} : vector<8x96xbf16> to vector<8x8xbf16>
    %27 = vector.extract_strided_slice %12 {offsets = [0, 72], sizes = [8, 8], strides = [1, 1]} : vector<8x96xbf16> to vector<8x8xbf16>
    %cst_12 = arith.constant dense<0.000000e+00> : vector<8x8xf32>
    %28 = tpu.matmul %25, %26, %cst_12 {dimension_numbers = #tpu.dot_dimension_numbers<[1], [1], [0], [0], [0, 0, 1, 0], [], []>} : vector<8x8xbf16>, vector<8x8xbf16>, vector<8x8xf32> -> vector<8x8xf32>
    %29 = math.exp %28 : vector<8x8xf32>
    %cst_13 = arith.constant dense<0.000000e+00> : vector<8xf32>
    %30 = vector.multi_reduction <add>, %29, %cst_13 [1] : vector<8x8xf32> to vector<8xf32>
    %31 = vector.shape_cast %30 : vector<8xf32> to vector<8x1xf32>
    %32 = tpu.reciprocal %31 {approx = true} : vector<8x1xf32> -> vector<8x1xf32>
    %33 = vector.broadcast %32 : vector<8x1xf32> to vector<8x8xf32>
    %34 = arith.mulf %29, %33 : vector<8x8xf32>
    %35 = arith.truncf %34 : vector<8x8xf32> to vector<8x8xbf16>
    %cst_14 = arith.constant dense<0.000000e+00> : vector<8x8xf32>
    %36 = tpu.matmul %35, %27, %cst_14 {dimension_numbers = #tpu.dot_dimension_numbers<[1], [0], [0], [1], [0, 0, 1, 1], [], []>} : vector<8x8xbf16>, vector<8x8xbf16>, vector<8x8xf32> -> vector<8x8xf32>
    %37 = vector.extract_strided_slice %12 {offsets = [0, 16], sizes = [8, 8], strides = [1, 1]} : vector<8x96xbf16> to vector<8x8xbf16>
    %38 = vector.extract_strided_slice %12 {offsets = [0, 48], sizes = [8, 8], strides = [1, 1]} : vector<8x96xbf16> to vector<8x8xbf16>
    %39 = vector.extract_strided_slice %12 {offsets = [0, 80], sizes = [8, 8], strides = [1, 1]} : vector<8x96xbf16> to vector<8x8xbf16>
    %cst_15 = arith.constant dense<0.000000e+00> : vector<8x8xf32>
    %40 = tpu.matmul %37, %38, %cst_15 {dimension_numbers = #tpu.dot_dimension_numbers<[1], [1], [0], [0], [0, 0, 1, 0], [], []>} : vector<8x8xbf16>, vector<8x8xbf16>, vector<8x8xf32> -> vector<8x8xf32>
    %41 = math.exp %40 : vector<8x8xf32>
    %cst_16 = arith.constant dense<0.000000e+00> : vector<8xf32>
    %42 = vector.multi_reduction <add>, %41, %cst_16 [1] : vector<8x8xf32> to vector<8xf32>
    %43 = vector.shape_cast %42 : vector<8xf32> to vector<8x1xf32>
    %44 = tpu.reciprocal %43 {approx = true} : vector<8x1xf32> -> vector<8x1xf32>
    %45 = vector.broadcast %44 : vector<8x1xf32> to vector<8x8xf32>
    %46 = arith.mulf %41, %45 : vector<8x8xf32>
    %47 = arith.truncf %46 : vector<8x8xf32> to vector<8x8xbf16>
    %cst_17 = arith.constant dense<0.000000e+00> : vector<8x8xf32>
    %48 = tpu.matmul %47, %39, %cst_17 {dimension_numbers = #tpu.dot_dimension_numbers<[1], [0], [0], [1], [0, 0, 1, 1], [], []>} : vector<8x8xbf16>, vector<8x8xbf16>, vector<8x8xf32> -> vector<8x8xf32>
    %49 = vector.extract_strided_slice %12 {offsets = [0, 24], sizes = [8, 8], strides = [1, 1]} : vector<8x96xbf16> to vector<8x8xbf16>
    %50 = vector.extract_strided_slice %12 {offsets = [0, 56], sizes = [8, 8], strides = [1, 1]} : vector<8x96xbf16> to vector<8x8xbf16>
    %51 = vector.extract_strided_slice %12 {offsets = [0, 88], sizes = [8, 8], strides = [1, 1]} : vector<8x96xbf16> to vector<8x8xbf16>
    %cst_18 = arith.constant dense<0.000000e+00> : vector<8x8xf32>
    %52 = tpu.matmul %49, %50, %cst_18 {dimension_numbers = #tpu.dot_dimension_numbers<[1], [1], [0], [0], [0, 0, 1, 0], [], []>} : vector<8x8xbf16>, vector<8x8xbf16>, vector<8x8xf32> -> vector<8x8xf32>
    %53 = math.exp %52 : vector<8x8xf32>
    %cst_19 = arith.constant dense<0.000000e+00> : vector<8xf32>
    %54 = vector.multi_reduction <add>, %53, %cst_19 [1] : vector<8x8xf32> to vector<8xf32>
    %55 = vector.shape_cast %54 : vector<8xf32> to vector<8x1xf32>
    %56 = tpu.reciprocal %55 {approx = true} : vector<8x1xf32> -> vector<8x1xf32>
    %57 = vector.broadcast %56 : vector<8x1xf32> to vector<8x8xf32>
    %58 = arith.mulf %53, %57 : vector<8x8xf32>
    %59 = arith.truncf %58 : vector<8x8xf32> to vector<8x8xbf16>
    %cst_20 = arith.constant dense<0.000000e+00> : vector<8x8xf32>
    %60 = tpu.matmul %59, %51, %cst_20 {dimension_numbers = #tpu.dot_dimension_numbers<[1], [0], [0], [1], [0, 0, 1, 1], [], []>} : vector<8x8xbf16>, vector<8x8xbf16>, vector<8x8xf32> -> vector<8x8xf32>
    %61 = tpu.concatenate %24, %36, %48, %60 in 1 : vector<8x8xf32>, vector<8x8xf32>, vector<8x8xf32>, vector<8x8xf32> -> vector<8x32xf32>
    %62 = arith.truncf %61 : vector<8x32xf32> to vector<8x32xbf16>
    %cst_21 = arith.constant dense<0.000000e+00> : vector<8x32xf32>
    %63 = tpu.matmul %62, %1, %cst_21 {dimension_numbers = #tpu.dot_dimension_numbers<[1], [0], [0], [1], [0, 0, 1, 1], [], []>} : vector<8x32xbf16>, vector<32x32xbf16>, vector<8x32xf32> -> vector<8x32xf32>
    %64 = arith.addf %63, %7 : vector<8x32xf32>
    %65 = math.tanh %64 : vector<8x32xf32>
    %cst_22 = arith.constant 0.166666672 : f32
    %66 = vector.broadcast %cst_22 : f32 to vector<8x32xf32>
    %67 = arith.mulf %66, %65 : vector<8x32xf32>
    %68 = arith.addf %8, %67 : vector<8x32xf32>
    %69 = arith.truncf %68 : vector<8x32xf32> to vector<8x32xbf16>
    %cst_23 = arith.constant dense<0.000000e+00> : vector<8x96xf32>
    %70 = tpu.matmul %69, %0, %cst_23 {dimension_numbers = #tpu.dot_dimension_numbers<[1], [0], [0], [1], [0, 0, 1, 1], [], []>} : vector<8x32xbf16>, vector<32x96xbf16>, vector<8x96xf32> -> vector<8x96xf32>
    %71 = arith.addf %70, %4 : vector<8x96xf32>
    %72 = arith.truncf %71 : vector<8x96xf32> to vector<8x96xbf16>
    %73 = vector.extract_strided_slice %72 {offsets = [0, 0], sizes = [8, 8], strides = [1, 1]} : vector<8x96xbf16> to vector<8x8xbf16>
    %74 = vector.extract_strided_slice %72 {offsets = [0, 32], sizes = [8, 8], strides = [1, 1]} : vector<8x96xbf16> to vector<8x8xbf16>
    %75 = vector.extract_strided_slice %72 {offsets = [0, 64], sizes = [8, 8], strides = [1, 1]} : vector<8x96xbf16> to vector<8x8xbf16>
    %cst_24 = arith.constant dense<0.000000e+00> : vector<8x8xf32>
    %76 = tpu.matmul %73, %74, %cst_24 {dimension_numbers = #tpu.dot_dimension_numbers<[1], [1], [0], [0], [0, 0, 1, 0], [], []>} : vector<8x8xbf16>, vector<8x8xbf16>, vector<8x8xf32> -> vector<8x8xf32>
    %77 = math.exp %76 : vector<8x8xf32>
    %cst_25 = arith.constant dense<0.000000e+00> : vector<8xf32>
    %78 = vector.multi_reduction <add>, %77, %cst_25 [1] : vector<8x8xf32> to vector<8xf32>
    %79 = vector.shape_cast %78 : vector<8xf32> to vector<8x1xf32>
    %80 = tpu.reciprocal %79 {approx = true} : vector<8x1xf32> -> vector<8x1xf32>
    %81 = vector.broadcast %80 : vector<8x1xf32> to vector<8x8xf32>
    %82 = arith.mulf %77, %81 : vector<8x8xf32>
    %83 = arith.truncf %82 : vector<8x8xf32> to vector<8x8xbf16>
    %cst_26 = arith.constant dense<0.000000e+00> : vector<8x8xf32>
    %84 = tpu.matmul %83, %75, %cst_26 {dimension_numbers = #tpu.dot_dimension_numbers<[1], [0], [0], [1], [0, 0, 1, 1], [], []>} : vector<8x8xbf16>, vector<8x8xbf16>, vector<8x8xf32> -> vector<8x8xf32>
    %85 = vector.extract_strided_slice %72 {offsets = [0, 8], sizes = [8, 8], strides = [1, 1]} : vector<8x96xbf16> to vector<8x8xbf16>
    %86 = vector.extract_strided_slice %72 {offsets = [0, 40], sizes = [8, 8], strides = [1, 1]} : vector<8x96xbf16> to vector<8x8xbf16>
    %87 = vector.extract_strided_slice %72 {offsets = [0, 72], sizes = [8, 8], strides = [1, 1]} : vector<8x96xbf16> to vector<8x8xbf16>
    %cst_27 = arith.constant dense<0.000000e+00> : vector<8x8xf32>
    %88 = tpu.matmul %85, %86, %cst_27 {dimension_numbers = #tpu.dot_dimension_numbers<[1], [1], [0], [0], [0, 0, 1, 0], [], []>} : vector<8x8xbf16>, vector<8x8xbf16>, vector<8x8xf32> -> vector<8x8xf32>
    %89 = math.exp %88 : vector<8x8xf32>
    %cst_28 = arith.constant dense<0.000000e+00> : vector<8xf32>
    %90 = vector.multi_reduction <add>, %89, %cst_28 [1] : vector<8x8xf32> to vector<8xf32>
    %91 = vector.shape_cast %90 : vector<8xf32> to vector<8x1xf32>
    %92 = tpu.reciprocal %91 {approx = true} : vector<8x1xf32> -> vector<8x1xf32>
    %93 = vector.broadcast %92 : vector<8x1xf32> to vector<8x8xf32>
    %94 = arith.mulf %89, %93 : vector<8x8xf32>
    %95 = arith.truncf %94 : vector<8x8xf32> to vector<8x8xbf16>
    %cst_29 = arith.constant dense<0.000000e+00> : vector<8x8xf32>
    %96 = tpu.matmul %95, %87, %cst_29 {dimension_numbers = #tpu.dot_dimension_numbers<[1], [0], [0], [1], [0, 0, 1, 1], [], []>} : vector<8x8xbf16>, vector<8x8xbf16>, vector<8x8xf32> -> vector<8x8xf32>
    %97 = vector.extract_strided_slice %72 {offsets = [0, 16], sizes = [8, 8], strides = [1, 1]} : vector<8x96xbf16> to vector<8x8xbf16>
    %98 = vector.extract_strided_slice %72 {offsets = [0, 48], sizes = [8, 8], strides = [1, 1]} : vector<8x96xbf16> to vector<8x8xbf16>
    %99 = vector.extract_strided_slice %72 {offsets = [0, 80], sizes = [8, 8], strides = [1, 1]} : vector<8x96xbf16> to vector<8x8xbf16>
    %cst_30 = arith.constant dense<0.000000e+00> : vector<8x8xf32>
    %100 = tpu.matmul %97, %98, %cst_30 {dimension_numbers = #tpu.dot_dimension_numbers<[1], [1], [0], [0], [0, 0, 1, 0], [], []>} : vector<8x8xbf16>, vector<8x8xbf16>, vector<8x8xf32> -> vector<8x8xf32>
    %101 = math.exp %100 : vector<8x8xf32>
    %cst_31 = arith.constant dense<0.000000e+00> : vector<8xf32>
    %102 = vector.multi_reduction <add>, %101, %cst_31 [1] : vector<8x8xf32> to vector<8xf32>
    %103 = vector.shape_cast %102 : vector<8xf32> to vector<8x1xf32>
    %104 = tpu.reciprocal %103 {approx = true} : vector<8x1xf32> -> vector<8x1xf32>
    %105 = vector.broadcast %104 : vector<8x1xf32> to vector<8x8xf32>
    %106 = arith.mulf %101, %105 : vector<8x8xf32>
    %107 = arith.truncf %106 : vector<8x8xf32> to vector<8x8xbf16>
    %cst_32 = arith.constant dense<0.000000e+00> : vector<8x8xf32>
    %108 = tpu.matmul %107, %99, %cst_32 {dimension_numbers = #tpu.dot_dimension_numbers<[1], [0], [0], [1], [0, 0, 1, 1], [], []>} : vector<8x8xbf16>, vector<8x8xbf16>, vector<8x8xf32> -> vector<8x8xf32>
    %109 = vector.extract_strided_slice %72 {offsets = [0, 24], sizes = [8, 8], strides = [1, 1]} : vector<8x96xbf16> to vector<8x8xbf16>
    %110 = vector.extract_strided_slice %72 {offsets = [0, 56], sizes = [8, 8], strides = [1, 1]} : vector<8x96xbf16> to vector<8x8xbf16>
    %111 = vector.extract_strided_slice %72 {offsets = [0, 88], sizes = [8, 8], strides = [1, 1]} : vector<8x96xbf16> to vector<8x8xbf16>
    %cst_33 = arith.constant dense<0.000000e+00> : vector<8x8xf32>
    %112 = tpu.matmul %109, %110, %cst_33 {dimension_numbers = #tpu.dot_dimension_numbers<[1], [1], [0], [0], [0, 0, 1, 0], [], []>} : vector<8x8xbf16>, vector<8x8xbf16>, vector<8x8xf32> -> vector<8x8xf32>
    %113 = math.exp %112 : vector<8x8xf32>
    %cst_34 = arith.constant dense<0.000000e+00> : vector<8xf32>
    %114 = vector.multi_reduction <add>, %113, %cst_34 [1] : vector<8x8xf32> to vector<8xf32>
    %115 = vector.shape_cast %114 : vector<8xf32> to vector<8x1xf32>
    %116 = tpu.reciprocal %115 {approx = true} : vector<8x1xf32> -> vector<8x1xf32>
    %117 = vector.broadcast %116 : vector<8x1xf32> to vector<8x8xf32>
    %118 = arith.mulf %113, %117 : vector<8x8xf32>
    %119 = arith.truncf %118 : vector<8x8xf32> to vector<8x8xbf16>
    %cst_35 = arith.constant dense<0.000000e+00> : vector<8x8xf32>
    %120 = tpu.matmul %119, %111, %cst_35 {dimension_numbers = #tpu.dot_dimension_numbers<[1], [0], [0], [1], [0, 0, 1, 1], [], []>} : vector<8x8xbf16>, vector<8x8xbf16>, vector<8x8xf32> -> vector<8x8xf32>
    %121 = tpu.concatenate %84, %96, %108, %120 in 1 : vector<8x8xf32>, vector<8x8xf32>, vector<8x8xf32>, vector<8x8xf32> -> vector<8x32xf32>
    %122 = arith.truncf %121 : vector<8x32xf32> to vector<8x32xbf16>
    %cst_36 = arith.constant dense<0.000000e+00> : vector<8x32xf32>
    %123 = tpu.matmul %122, %1, %cst_36 {dimension_numbers = #tpu.dot_dimension_numbers<[1], [0], [0], [1], [0, 0, 1, 1], [], []>} : vector<8x32xbf16>, vector<32x32xbf16>, vector<8x32xf32> -> vector<8x32xf32>
    %124 = arith.addf %123, %7 : vector<8x32xf32>
    %125 = math.tanh %124 : vector<8x32xf32>
    %cst_37 = arith.constant 0.166666672 : f32
    %126 = vector.broadcast %cst_37 : f32 to vector<8x32xf32>
    %127 = arith.mulf %126, %125 : vector<8x32xf32>
    %128 = arith.addf %8, %127 : vector<8x32xf32>
    %129 = arith.truncf %128 : vector<8x32xf32> to vector<8x32xbf16>
    %cst_38 = arith.constant dense<0.000000e+00> : vector<8x96xf32>
    %130 = tpu.matmul %129, %0, %cst_38 {dimension_numbers = #tpu.dot_dimension_numbers<[1], [0], [0], [1], [0, 0, 1, 1], [], []>} : vector<8x32xbf16>, vector<32x96xbf16>, vector<8x96xf32> -> vector<8x96xf32>
    %131 = arith.addf %130, %4 : vector<8x96xf32>
    %132 = arith.truncf %131 : vector<8x96xf32> to vector<8x96xbf16>
    %133 = vector.extract_strided_slice %132 {offsets = [0, 0], sizes = [8, 8], strides = [1, 1]} : vector<8x96xbf16> to vector<8x8xbf16>
    %134 = vector.extract_strided_slice %132 {offsets = [0, 32], sizes = [8, 8], strides = [1, 1]} : vector<8x96xbf16> to vector<8x8xbf16>
    %135 = vector.extract_strided_slice %132 {offsets = [0, 64], sizes = [8, 8], strides = [1, 1]} : vector<8x96xbf16> to vector<8x8xbf16>
    %cst_39 = arith.constant dense<0.000000e+00> : vector<8x8xf32>
    %136 = tpu.matmul %133, %134, %cst_39 {dimension_numbers = #tpu.dot_dimension_numbers<[1], [1], [0], [0], [0, 0, 1, 0], [], []>} : vector<8x8xbf16>, vector<8x8xbf16>, vector<8x8xf32> -> vector<8x8xf32>
    %137 = math.exp %136 : vector<8x8xf32>
    %cst_40 = arith.constant dense<0.000000e+00> : vector<8xf32>
    %138 = vector.multi_reduction <add>, %137, %cst_40 [1] : vector<8x8xf32> to vector<8xf32>
    %139 = vector.shape_cast %138 : vector<8xf32> to vector<8x1xf32>
    %140 = tpu.reciprocal %139 {approx = true} : vector<8x1xf32> -> vector<8x1xf32>
    %141 = vector.broadcast %140 : vector<8x1xf32> to vector<8x8xf32>
    %142 = arith.mulf %137, %141 : vector<8x8xf32>
    %143 = arith.truncf %142 : vector<8x8xf32> to vector<8x8xbf16>
    %cst_41 = arith.constant dense<0.000000e+00> : vector<8x8xf32>
    %144 = tpu.matmul %143, %135, %cst_41 {dimension_numbers = #tpu.dot_dimension_numbers<[1], [0], [0], [1], [0, 0, 1, 1], [], []>} : vector<8x8xbf16>, vector<8x8xbf16>, vector<8x8xf32> -> vector<8x8xf32>
    %145 = vector.extract_strided_slice %132 {offsets = [0, 8], sizes = [8, 8], strides = [1, 1]} : vector<8x96xbf16> to vector<8x8xbf16>
    %146 = vector.extract_strided_slice %132 {offsets = [0, 40], sizes = [8, 8], strides = [1, 1]} : vector<8x96xbf16> to vector<8x8xbf16>
    %147 = vector.extract_strided_slice %132 {offsets = [0, 72], sizes = [8, 8], strides = [1, 1]} : vector<8x96xbf16> to vector<8x8xbf16>
    %cst_42 = arith.constant dense<0.000000e+00> : vector<8x8xf32>
    %148 = tpu.matmul %145, %146, %cst_42 {dimension_numbers = #tpu.dot_dimension_numbers<[1], [1], [0], [0], [0, 0, 1, 0], [], []>} : vector<8x8xbf16>, vector<8x8xbf16>, vector<8x8xf32> -> vector<8x8xf32>
    %149 = math.exp %148 : vector<8x8xf32>
    %cst_43 = arith.constant dense<0.000000e+00> : vector<8xf32>
    %150 = vector.multi_reduction <add>, %149, %cst_43 [1] : vector<8x8xf32> to vector<8xf32>
    %151 = vector.shape_cast %150 : vector<8xf32> to vector<8x1xf32>
    %152 = tpu.reciprocal %151 {approx = true} : vector<8x1xf32> -> vector<8x1xf32>
    %153 = vector.broadcast %152 : vector<8x1xf32> to vector<8x8xf32>
    %154 = arith.mulf %149, %153 : vector<8x8xf32>
    %155 = arith.truncf %154 : vector<8x8xf32> to vector<8x8xbf16>
    %cst_44 = arith.constant dense<0.000000e+00> : vector<8x8xf32>
    %156 = tpu.matmul %155, %147, %cst_44 {dimension_numbers = #tpu.dot_dimension_numbers<[1], [0], [0], [1], [0, 0, 1, 1], [], []>} : vector<8x8xbf16>, vector<8x8xbf16>, vector<8x8xf32> -> vector<8x8xf32>
    %157 = vector.extract_strided_slice %132 {offsets = [0, 16], sizes = [8, 8], strides = [1, 1]} : vector<8x96xbf16> to vector<8x8xbf16>
    %158 = vector.extract_strided_slice %132 {offsets = [0, 48], sizes = [8, 8], strides = [1, 1]} : vector<8x96xbf16> to vector<8x8xbf16>
    %159 = vector.extract_strided_slice %132 {offsets = [0, 80], sizes = [8, 8], strides = [1, 1]} : vector<8x96xbf16> to vector<8x8xbf16>
    %cst_45 = arith.constant dense<0.000000e+00> : vector<8x8xf32>
    %160 = tpu.matmul %157, %158, %cst_45 {dimension_numbers = #tpu.dot_dimension_numbers<[1], [1], [0], [0], [0, 0, 1, 0], [], []>} : vector<8x8xbf16>, vector<8x8xbf16>, vector<8x8xf32> -> vector<8x8xf32>
    %161 = math.exp %160 : vector<8x8xf32>
    %cst_46 = arith.constant dense<0.000000e+00> : vector<8xf32>
    %162 = vector.multi_reduction <add>, %161, %cst_46 [1] : vector<8x8xf32> to vector<8xf32>
    %163 = vector.shape_cast %162 : vector<8xf32> to vector<8x1xf32>
    %164 = tpu.reciprocal %163 {approx = true} : vector<8x1xf32> -> vector<8x1xf32>
    %165 = vector.broadcast %164 : vector<8x1xf32> to vector<8x8xf32>
    %166 = arith.mulf %161, %165 : vector<8x8xf32>
    %167 = arith.truncf %166 : vector<8x8xf32> to vector<8x8xbf16>
    %cst_47 = arith.constant dense<0.000000e+00> : vector<8x8xf32>
    %168 = tpu.matmul %167, %159, %cst_47 {dimension_numbers = #tpu.dot_dimension_numbers<[1], [0], [0], [1], [0, 0, 1, 1], [], []>} : vector<8x8xbf16>, vector<8x8xbf16>, vector<8x8xf32> -> vector<8x8xf32>
    %169 = vector.extract_strided_slice %132 {offsets = [0, 24], sizes = [8, 8], strides = [1, 1]} : vector<8x96xbf16> to vector<8x8xbf16>
    %170 = vector.extract_strided_slice %132 {offsets = [0, 56], sizes = [8, 8], strides = [1, 1]} : vector<8x96xbf16> to vector<8x8xbf16>
    %171 = vector.extract_strided_slice %132 {offsets = [0, 88], sizes = [8, 8], strides = [1, 1]} : vector<8x96xbf16> to vector<8x8xbf16>
    %cst_48 = arith.constant dense<0.000000e+00> : vector<8x8xf32>
    %172 = tpu.matmul %169, %170, %cst_48 {dimension_numbers = #tpu.dot_dimension_numbers<[1], [1], [0], [0], [0, 0, 1, 0], [], []>} : vector<8x8xbf16>, vector<8x8xbf16>, vector<8x8xf32> -> vector<8x8xf32>
    %173 = math.exp %172 : vector<8x8xf32>
    %cst_49 = arith.constant dense<0.000000e+00> : vector<8xf32>
    %174 = vector.multi_reduction <add>, %173, %cst_49 [1] : vector<8x8xf32> to vector<8xf32>
    %175 = vector.shape_cast %174 : vector<8xf32> to vector<8x1xf32>
    %176 = tpu.reciprocal %175 {approx = true} : vector<8x1xf32> -> vector<8x1xf32>
    %177 = vector.broadcast %176 : vector<8x1xf32> to vector<8x8xf32>
    %178 = arith.mulf %173, %177 : vector<8x8xf32>
    %179 = arith.truncf %178 : vector<8x8xf32> to vector<8x8xbf16>
    %cst_50 = arith.constant dense<0.000000e+00> : vector<8x8xf32>
    %180 = tpu.matmul %179, %171, %cst_50 {dimension_numbers = #tpu.dot_dimension_numbers<[1], [0], [0], [1], [0, 0, 1, 1], [], []>} : vector<8x8xbf16>, vector<8x8xbf16>, vector<8x8xf32> -> vector<8x8xf32>
    %181 = tpu.concatenate %144, %156, %168, %180 in 1 : vector<8x8xf32>, vector<8x8xf32>, vector<8x8xf32>, vector<8x8xf32> -> vector<8x32xf32>
    %182 = arith.truncf %181 : vector<8x32xf32> to vector<8x32xbf16>
    %cst_51 = arith.constant dense<0.000000e+00> : vector<8x32xf32>
    %183 = tpu.matmul %182, %1, %cst_51 {dimension_numbers = #tpu.dot_dimension_numbers<[1], [0], [0], [1], [0, 0, 1, 1], [], []>} : vector<8x32xbf16>, vector<32x32xbf16>, vector<8x32xf32> -> vector<8x32xf32>
    %184 = arith.addf %183, %7 : vector<8x32xf32>
    %185 = math.tanh %184 : vector<8x32xf32>
    %cst_52 = arith.constant 0.333333343 : f32
    %186 = vector.broadcast %cst_52 : f32 to vector<8x32xf32>
    %187 = arith.mulf %186, %185 : vector<8x32xf32>
    %188 = arith.addf %8, %187 : vector<8x32xf32>
    %189 = arith.truncf %188 : vector<8x32xf32> to vector<8x32xbf16>
    %cst_53 = arith.constant dense<0.000000e+00> : vector<8x96xf32>
    %190 = tpu.matmul %189, %0, %cst_53 {dimension_numbers = #tpu.dot_dimension_numbers<[1], [0], [0], [1], [0, 0, 1, 1], [], []>} : vector<8x32xbf16>, vector<32x96xbf16>, vector<8x96xf32> -> vector<8x96xf32>
    %191 = arith.addf %190, %4 : vector<8x96xf32>
    %192 = arith.truncf %191 : vector<8x96xf32> to vector<8x96xbf16>
    %193 = vector.extract_strided_slice %192 {offsets = [0, 0], sizes = [8, 8], strides = [1, 1]} : vector<8x96xbf16> to vector<8x8xbf16>
    %194 = vector.extract_strided_slice %192 {offsets = [0, 32], sizes = [8, 8], strides = [1, 1]} : vector<8x96xbf16> to vector<8x8xbf16>
    %195 = vector.extract_strided_slice %192 {offsets = [0, 64], sizes = [8, 8], strides = [1, 1]} : vector<8x96xbf16> to vector<8x8xbf16>
    %cst_54 = arith.constant dense<0.000000e+00> : vector<8x8xf32>
    %196 = tpu.matmul %193, %194, %cst_54 {dimension_numbers = #tpu.dot_dimension_numbers<[1], [1], [0], [0], [0, 0, 1, 0], [], []>} : vector<8x8xbf16>, vector<8x8xbf16>, vector<8x8xf32> -> vector<8x8xf32>
    %197 = math.exp %196 : vector<8x8xf32>
    %cst_55 = arith.constant dense<0.000000e+00> : vector<8xf32>
    %198 = vector.multi_reduction <add>, %197, %cst_55 [1] : vector<8x8xf32> to vector<8xf32>
    %199 = vector.shape_cast %198 : vector<8xf32> to vector<8x1xf32>
    %200 = tpu.reciprocal %199 {approx = true} : vector<8x1xf32> -> vector<8x1xf32>
    %201 = vector.broadcast %200 : vector<8x1xf32> to vector<8x8xf32>
    %202 = arith.mulf %197, %201 : vector<8x8xf32>
    %203 = arith.truncf %202 : vector<8x8xf32> to vector<8x8xbf16>
    %cst_56 = arith.constant dense<0.000000e+00> : vector<8x8xf32>
    %204 = tpu.matmul %203, %195, %cst_56 {dimension_numbers = #tpu.dot_dimension_numbers<[1], [0], [0], [1], [0, 0, 1, 1], [], []>} : vector<8x8xbf16>, vector<8x8xbf16>, vector<8x8xf32> -> vector<8x8xf32>
    %205 = vector.extract_strided_slice %192 {offsets = [0, 8], sizes = [8, 8], strides = [1, 1]} : vector<8x96xbf16> to vector<8x8xbf16>
    %206 = vector.extract_strided_slice %192 {offsets = [0, 40], sizes = [8, 8], strides = [1, 1]} : vector<8x96xbf16> to vector<8x8xbf16>
    %207 = vector.extract_strided_slice %192 {offsets = [0, 72], sizes = [8, 8], strides = [1, 1]} : vector<8x96xbf16> to vector<8x8xbf16>
    %cst_57 = arith.constant dense<0.000000e+00> : vector<8x8xf32>
    %208 = tpu.matmul %205, %206, %cst_57 {dimension_numbers = #tpu.dot_dimension_numbers<[1], [1], [0], [0], [0, 0, 1, 0], [], []>} : vector<8x8xbf16>, vector<8x8xbf16>, vector<8x8xf32> -> vector<8x8xf32>
    %209 = math.exp %208 : vector<8x8xf32>
    %cst_58 = arith.constant dense<0.000000e+00> : vector<8xf32>
    %210 = vector.multi_reduction <add>, %209, %cst_58 [1] : vector<8x8xf32> to vector<8xf32>
    %211 = vector.shape_cast %210 : vector<8xf32> to vector<8x1xf32>
    %212 = tpu.reciprocal %211 {approx = true} : vector<8x1xf32> -> vector<8x1xf32>
    %213 = vector.broadcast %212 : vector<8x1xf32> to vector<8x8xf32>
    %214 = arith.mulf %209, %213 : vector<8x8xf32>
    %215 = arith.truncf %214 : vector<8x8xf32> to vector<8x8xbf16>
    %cst_59 = arith.constant dense<0.000000e+00> : vector<8x8xf32>
    %216 = tpu.matmul %215, %207, %cst_59 {dimension_numbers = #tpu.dot_dimension_numbers<[1], [0], [0], [1], [0, 0, 1, 1], [], []>} : vector<8x8xbf16>, vector<8x8xbf16>, vector<8x8xf32> -> vector<8x8xf32>
    %217 = vector.extract_strided_slice %192 {offsets = [0, 16], sizes = [8, 8], strides = [1, 1]} : vector<8x96xbf16> to vector<8x8xbf16>
    %218 = vector.extract_strided_slice %192 {offsets = [0, 48], sizes = [8, 8], strides = [1, 1]} : vector<8x96xbf16> to vector<8x8xbf16>
    %219 = vector.extract_strided_slice %192 {offsets = [0, 80], sizes = [8, 8], strides = [1, 1]} : vector<8x96xbf16> to vector<8x8xbf16>
    %cst_60 = arith.constant dense<0.000000e+00> : vector<8x8xf32>
    %220 = tpu.matmul %217, %218, %cst_60 {dimension_numbers = #tpu.dot_dimension_numbers<[1], [1], [0], [0], [0, 0, 1, 0], [], []>} : vector<8x8xbf16>, vector<8x8xbf16>, vector<8x8xf32> -> vector<8x8xf32>
    %221 = math.exp %220 : vector<8x8xf32>
    %cst_61 = arith.constant dense<0.000000e+00> : vector<8xf32>
    %222 = vector.multi_reduction <add>, %221, %cst_61 [1] : vector<8x8xf32> to vector<8xf32>
    %223 = vector.shape_cast %222 : vector<8xf32> to vector<8x1xf32>
    %224 = tpu.reciprocal %223 {approx = true} : vector<8x1xf32> -> vector<8x1xf32>
    %225 = vector.broadcast %224 : vector<8x1xf32> to vector<8x8xf32>
    %226 = arith.mulf %221, %225 : vector<8x8xf32>
    %227 = arith.truncf %226 : vector<8x8xf32> to vector<8x8xbf16>
    %cst_62 = arith.constant dense<0.000000e+00> : vector<8x8xf32>
    %228 = tpu.matmul %227, %219, %cst_62 {dimension_numbers = #tpu.dot_dimension_numbers<[1], [0], [0], [1], [0, 0, 1, 1], [], []>} : vector<8x8xbf16>, vector<8x8xbf16>, vector<8x8xf32> -> vector<8x8xf32>
    %229 = vector.extract_strided_slice %192 {offsets = [0, 24], sizes = [8, 8], strides = [1, 1]} : vector<8x96xbf16> to vector<8x8xbf16>
    %230 = vector.extract_strided_slice %192 {offsets = [0, 56], sizes = [8, 8], strides = [1, 1]} : vector<8x96xbf16> to vector<8x8xbf16>
    %231 = vector.extract_strided_slice %192 {offsets = [0, 88], sizes = [8, 8], strides = [1, 1]} : vector<8x96xbf16> to vector<8x8xbf16>
    %cst_63 = arith.constant dense<0.000000e+00> : vector<8x8xf32>
    %232 = tpu.matmul %229, %230, %cst_63 {dimension_numbers = #tpu.dot_dimension_numbers<[1], [1], [0], [0], [0, 0, 1, 0], [], []>} : vector<8x8xbf16>, vector<8x8xbf16>, vector<8x8xf32> -> vector<8x8xf32>
    %233 = math.exp %232 : vector<8x8xf32>
    %cst_64 = arith.constant dense<0.000000e+00> : vector<8xf32>
    %234 = vector.multi_reduction <add>, %233, %cst_64 [1] : vector<8x8xf32> to vector<8xf32>
    %235 = vector.shape_cast %234 : vector<8xf32> to vector<8x1xf32>
    %236 = tpu.reciprocal %235 {approx = true} : vector<8x1xf32> -> vector<8x1xf32>
    %237 = vector.broadcast %236 : vector<8x1xf32> to vector<8x8xf32>
    %238 = arith.mulf %233, %237 : vector<8x8xf32>
    %239 = arith.truncf %238 : vector<8x8xf32> to vector<8x8xbf16>
    %cst_65 = arith.constant dense<0.000000e+00> : vector<8x8xf32>
    %240 = tpu.matmul %239, %231, %cst_65 {dimension_numbers = #tpu.dot_dimension_numbers<[1], [0], [0], [1], [0, 0, 1, 1], [], []>} : vector<8x8xbf16>, vector<8x8xbf16>, vector<8x8xf32> -> vector<8x8xf32>
    %241 = tpu.concatenate %204, %216, %228, %240 in 1 : vector<8x8xf32>, vector<8x8xf32>, vector<8x8xf32>, vector<8x8xf32> -> vector<8x32xf32>
    %242 = arith.truncf %241 : vector<8x32xf32> to vector<8x32xbf16>
    %cst_66 = arith.constant dense<0.000000e+00> : vector<8x32xf32>
    %243 = tpu.matmul %242, %1, %cst_66 {dimension_numbers = #tpu.dot_dimension_numbers<[1], [0], [0], [1], [0, 0, 1, 1], [], []>} : vector<8x32xbf16>, vector<32x32xbf16>, vector<8x32xf32> -> vector<8x32xf32>
    %244 = arith.addf %243, %7 : vector<8x32xf32>
    %245 = math.tanh %244 : vector<8x32xf32>
    %cst_67 = arith.constant 2.000000e+00 : f32
    %246 = vector.broadcast %cst_67 : f32 to vector<8x32xf32>
    %247 = arith.mulf %246, %125 : vector<8x32xf32>
    %248 = arith.addf %65, %247 : vector<8x32xf32>
    %cst_68 = arith.constant 2.000000e+00 : f32
    %249 = vector.broadcast %cst_68 : f32 to vector<8x32xf32>
    %250 = arith.mulf %249, %185 : vector<8x32xf32>
    %251 = arith.addf %248, %250 : vector<8x32xf32>
    %252 = arith.addf %251, %245 : vector<8x32xf32>
    %cst_69 = arith.constant 0.055555556 : f32
    %253 = vector.broadcast %cst_69 : f32 to vector<8x32xf32>
    %254 = arith.mulf %253, %252 : vector<8x32xf32>
    %255 = arith.addf %8, %254 : vector<8x32xf32>
    %256 = arith.truncf %255 : vector<8x32xf32> to vector<8x32xbf16>
    %cst_70 = arith.constant dense<0.000000e+00> : vector<8x96xf32>
    %257 = tpu.matmul %256, %0, %cst_70 {dimension_numbers = #tpu.dot_dimension_numbers<[1], [0], [0], [1], [0, 0, 1, 1], [], []>} : vector<8x32xbf16>, vector<32x96xbf16>, vector<8x96xf32> -> vector<8x96xf32>
    %258 = arith.addf %257, %4 : vector<8x96xf32>
    %259 = arith.truncf %258 : vector<8x96xf32> to vector<8x96xbf16>
    %260 = vector.extract_strided_slice %259 {offsets = [0, 0], sizes = [8, 8], strides = [1, 1]} : vector<8x96xbf16> to vector<8x8xbf16>
    %261 = vector.extract_strided_slice %259 {offsets = [0, 32], sizes = [8, 8], strides = [1, 1]} : vector<8x96xbf16> to vector<8x8xbf16>
    %262 = vector.extract_strided_slice %259 {offsets = [0, 64], sizes = [8, 8], strides = [1, 1]} : vector<8x96xbf16> to vector<8x8xbf16>
    %cst_71 = arith.constant dense<0.000000e+00> : vector<8x8xf32>
    %263 = tpu.matmul %260, %261, %cst_71 {dimension_numbers = #tpu.dot_dimension_numbers<[1], [1], [0], [0], [0, 0, 1, 0], [], []>} : vector<8x8xbf16>, vector<8x8xbf16>, vector<8x8xf32> -> vector<8x8xf32>
    %264 = math.exp %263 : vector<8x8xf32>
    %cst_72 = arith.constant dense<0.000000e+00> : vector<8xf32>
    %265 = vector.multi_reduction <add>, %264, %cst_72 [1] : vector<8x8xf32> to vector<8xf32>
    %266 = vector.shape_cast %265 : vector<8xf32> to vector<8x1xf32>
    %267 = tpu.reciprocal %266 {approx = true} : vector<8x1xf32> -> vector<8x1xf32>
    %268 = vector.broadcast %267 : vector<8x1xf32> to vector<8x8xf32>
    %269 = arith.mulf %264, %268 : vector<8x8xf32>
    %270 = arith.truncf %269 : vector<8x8xf32> to vector<8x8xbf16>
    %cst_73 = arith.constant dense<0.000000e+00> : vector<8x8xf32>
    %271 = tpu.matmul %270, %262, %cst_73 {dimension_numbers = #tpu.dot_dimension_numbers<[1], [0], [0], [1], [0, 0, 1, 1], [], []>} : vector<8x8xbf16>, vector<8x8xbf16>, vector<8x8xf32> -> vector<8x8xf32>
    %272 = vector.extract_strided_slice %259 {offsets = [0, 8], sizes = [8, 8], strides = [1, 1]} : vector<8x96xbf16> to vector<8x8xbf16>
    %273 = vector.extract_strided_slice %259 {offsets = [0, 40], sizes = [8, 8], strides = [1, 1]} : vector<8x96xbf16> to vector<8x8xbf16>
    %274 = vector.extract_strided_slice %259 {offsets = [0, 72], sizes = [8, 8], strides = [1, 1]} : vector<8x96xbf16> to vector<8x8xbf16>
    %cst_74 = arith.constant dense<0.000000e+00> : vector<8x8xf32>
    %275 = tpu.matmul %272, %273, %cst_74 {dimension_numbers = #tpu.dot_dimension_numbers<[1], [1], [0], [0], [0, 0, 1, 0], [], []>} : vector<8x8xbf16>, vector<8x8xbf16>, vector<8x8xf32> -> vector<8x8xf32>
    %276 = math.exp %275 : vector<8x8xf32>
    %cst_75 = arith.constant dense<0.000000e+00> : vector<8xf32>
    %277 = vector.multi_reduction <add>, %276, %cst_75 [1] : vector<8x8xf32> to vector<8xf32>
    %278 = vector.shape_cast %277 : vector<8xf32> to vector<8x1xf32>
    %279 = tpu.reciprocal %278 {approx = true} : vector<8x1xf32> -> vector<8x1xf32>
    %280 = vector.broadcast %279 : vector<8x1xf32> to vector<8x8xf32>
    %281 = arith.mulf %276, %280 : vector<8x8xf32>
    %282 = arith.truncf %281 : vector<8x8xf32> to vector<8x8xbf16>
    %cst_76 = arith.constant dense<0.000000e+00> : vector<8x8xf32>
    %283 = tpu.matmul %282, %274, %cst_76 {dimension_numbers = #tpu.dot_dimension_numbers<[1], [0], [0], [1], [0, 0, 1, 1], [], []>} : vector<8x8xbf16>, vector<8x8xbf16>, vector<8x8xf32> -> vector<8x8xf32>
    %284 = vector.extract_strided_slice %259 {offsets = [0, 16], sizes = [8, 8], strides = [1, 1]} : vector<8x96xbf16> to vector<8x8xbf16>
    %285 = vector.extract_strided_slice %259 {offsets = [0, 48], sizes = [8, 8], strides = [1, 1]} : vector<8x96xbf16> to vector<8x8xbf16>
    %286 = vector.extract_strided_slice %259 {offsets = [0, 80], sizes = [8, 8], strides = [1, 1]} : vector<8x96xbf16> to vector<8x8xbf16>
    %cst_77 = arith.constant dense<0.000000e+00> : vector<8x8xf32>
    %287 = tpu.matmul %284, %285, %cst_77 {dimension_numbers = #tpu.dot_dimension_numbers<[1], [1], [0], [0], [0, 0, 1, 0], [], []>} : vector<8x8xbf16>, vector<8x8xbf16>, vector<8x8xf32> -> vector<8x8xf32>
    %288 = math.exp %287 : vector<8x8xf32>
    %cst_78 = arith.constant dense<0.000000e+00> : vector<8xf32>
    %289 = vector.multi_reduction <add>, %288, %cst_78 [1] : vector<8x8xf32> to vector<8xf32>
    %290 = vector.shape_cast %289 : vector<8xf32> to vector<8x1xf32>
    %291 = tpu.reciprocal %290 {approx = true} : vector<8x1xf32> -> vector<8x1xf32>
    %292 = vector.broadcast %291 : vector<8x1xf32> to vector<8x8xf32>
    %293 = arith.mulf %288, %292 : vector<8x8xf32>
    %294 = arith.truncf %293 : vector<8x8xf32> to vector<8x8xbf16>
    %cst_79 = arith.constant dense<0.000000e+00> : vector<8x8xf32>
    %295 = tpu.matmul %294, %286, %cst_79 {dimension_numbers = #tpu.dot_dimension_numbers<[1], [0], [0], [1], [0, 0, 1, 1], [], []>} : vector<8x8xbf16>, vector<8x8xbf16>, vector<8x8xf32> -> vector<8x8xf32>
    %296 = vector.extract_strided_slice %259 {offsets = [0, 24], sizes = [8, 8], strides = [1, 1]} : vector<8x96xbf16> to vector<8x8xbf16>
    %297 = vector.extract_strided_slice %259 {offsets = [0, 56], sizes = [8, 8], strides = [1, 1]} : vector<8x96xbf16> to vector<8x8xbf16>
    %298 = vector.extract_strided_slice %259 {offsets = [0, 88], sizes = [8, 8], strides = [1, 1]} : vector<8x96xbf16> to vector<8x8xbf16>
    %cst_80 = arith.constant dense<0.000000e+00> : vector<8x8xf32>
    %299 = tpu.matmul %296, %297, %cst_80 {dimension_numbers = #tpu.dot_dimension_numbers<[1], [1], [0], [0], [0, 0, 1, 0], [], []>} : vector<8x8xbf16>, vector<8x8xbf16>, vector<8x8xf32> -> vector<8x8xf32>
    %300 = math.exp %299 : vector<8x8xf32>
    %cst_81 = arith.constant dense<0.000000e+00> : vector<8xf32>
    %301 = vector.multi_reduction <add>, %300, %cst_81 [1] : vector<8x8xf32> to vector<8xf32>
    %302 = vector.shape_cast %301 : vector<8xf32> to vector<8x1xf32>
    %303 = tpu.reciprocal %302 {approx = true} : vector<8x1xf32> -> vector<8x1xf32>
    %304 = vector.broadcast %303 : vector<8x1xf32> to vector<8x8xf32>
    %305 = arith.mulf %300, %304 : vector<8x8xf32>
    %306 = arith.truncf %305 : vector<8x8xf32> to vector<8x8xbf16>
    %cst_82 = arith.constant dense<0.000000e+00> : vector<8x8xf32>
    %307 = tpu.matmul %306, %298, %cst_82 {dimension_numbers = #tpu.dot_dimension_numbers<[1], [0], [0], [1], [0, 0, 1, 1], [], []>} : vector<8x8xbf16>, vector<8x8xbf16>, vector<8x8xf32> -> vector<8x8xf32>
    %308 = tpu.concatenate %271, %283, %295, %307 in 1 : vector<8x8xf32>, vector<8x8xf32>, vector<8x8xf32>, vector<8x8xf32> -> vector<8x32xf32>
    %309 = arith.truncf %308 : vector<8x32xf32> to vector<8x32xbf16>
    %cst_83 = arith.constant dense<0.000000e+00> : vector<8x32xf32>
    %310 = tpu.matmul %309, %1, %cst_83 {dimension_numbers = #tpu.dot_dimension_numbers<[1], [0], [0], [1], [0, 0, 1, 1], [], []>} : vector<8x32xbf16>, vector<32x32xbf16>, vector<8x32xf32> -> vector<8x32xf32>
    %311 = arith.addf %310, %7 : vector<8x32xf32>
    %312 = math.tanh %311 : vector<8x32xf32>
    %cst_84 = arith.constant 0.166666672 : f32
    %313 = vector.broadcast %cst_84 : f32 to vector<8x32xf32>
    %314 = arith.mulf %313, %312 : vector<8x32xf32>
    %315 = arith.addf %255, %314 : vector<8x32xf32>
    %316 = arith.truncf %315 : vector<8x32xf32> to vector<8x32xbf16>
    %cst_85 = arith.constant dense<0.000000e+00> : vector<8x96xf32>
    %317 = tpu.matmul %316, %0, %cst_85 {dimension_numbers = #tpu.dot_dimension_numbers<[1], [0], [0], [1], [0, 0, 1, 1], [], []>} : vector<8x32xbf16>, vector<32x96xbf16>, vector<8x96xf32> -> vector<8x96xf32>
    %318 = arith.addf %317, %4 : vector<8x96xf32>
    %319 = arith.truncf %318 : vector<8x96xf32> to vector<8x96xbf16>
    %320 = vector.extract_strided_slice %319 {offsets = [0, 0], sizes = [8, 8], strides = [1, 1]} : vector<8x96xbf16> to vector<8x8xbf16>
    %321 = vector.extract_strided_slice %319 {offsets = [0, 32], sizes = [8, 8], strides = [1, 1]} : vector<8x96xbf16> to vector<8x8xbf16>
    %322 = vector.extract_strided_slice %319 {offsets = [0, 64], sizes = [8, 8], strides = [1, 1]} : vector<8x96xbf16> to vector<8x8xbf16>
    %cst_86 = arith.constant dense<0.000000e+00> : vector<8x8xf32>
    %323 = tpu.matmul %320, %321, %cst_86 {dimension_numbers = #tpu.dot_dimension_numbers<[1], [1], [0], [0], [0, 0, 1, 0], [], []>} : vector<8x8xbf16>, vector<8x8xbf16>, vector<8x8xf32> -> vector<8x8xf32>
    %324 = math.exp %323 : vector<8x8xf32>
    %cst_87 = arith.constant dense<0.000000e+00> : vector<8xf32>
    %325 = vector.multi_reduction <add>, %324, %cst_87 [1] : vector<8x8xf32> to vector<8xf32>
    %326 = vector.shape_cast %325 : vector<8xf32> to vector<8x1xf32>
    %327 = tpu.reciprocal %326 {approx = true} : vector<8x1xf32> -> vector<8x1xf32>
    %328 = vector.broadcast %327 : vector<8x1xf32> to vector<8x8xf32>
    %329 = arith.mulf %324, %328 : vector<8x8xf32>
    %330 = arith.truncf %329 : vector<8x8xf32> to vector<8x8xbf16>
    %cst_88 = arith.constant dense<0.000000e+00> : vector<8x8xf32>
    %331 = tpu.matmul %330, %322, %cst_88 {dimension_numbers = #tpu.dot_dimension_numbers<[1], [0], [0], [1], [0, 0, 1, 1], [], []>} : vector<8x8xbf16>, vector<8x8xbf16>, vector<8x8xf32> -> vector<8x8xf32>
    %332 = vector.extract_strided_slice %319 {offsets = [0, 8], sizes = [8, 8], strides = [1, 1]} : vector<8x96xbf16> to vector<8x8xbf16>
    %333 = vector.extract_strided_slice %319 {offsets = [0, 40], sizes = [8, 8], strides = [1, 1]} : vector<8x96xbf16> to vector<8x8xbf16>
    %334 = vector.extract_strided_slice %319 {offsets = [0, 72], sizes = [8, 8], strides = [1, 1]} : vector<8x96xbf16> to vector<8x8xbf16>
    %cst_89 = arith.constant dense<0.000000e+00> : vector<8x8xf32>
    %335 = tpu.matmul %332, %333, %cst_89 {dimension_numbers = #tpu.dot_dimension_numbers<[1], [1], [0], [0], [0, 0, 1, 0], [], []>} : vector<8x8xbf16>, vector<8x8xbf16>, vector<8x8xf32> -> vector<8x8xf32>
    %336 = math.exp %335 : vector<8x8xf32>
    %cst_90 = arith.constant dense<0.000000e+00> : vector<8xf32>
    %337 = vector.multi_reduction <add>, %336, %cst_90 [1] : vector<8x8xf32> to vector<8xf32>
    %338 = vector.shape_cast %337 : vector<8xf32> to vector<8x1xf32>
    %339 = tpu.reciprocal %338 {approx = true} : vector<8x1xf32> -> vector<8x1xf32>
    %340 = vector.broadcast %339 : vector<8x1xf32> to vector<8x8xf32>
    %341 = arith.mulf %336, %340 : vector<8x8xf32>
    %342 = arith.truncf %341 : vector<8x8xf32> to vector<8x8xbf16>
    %cst_91 = arith.constant dense<0.000000e+00> : vector<8x8xf32>
    %343 = tpu.matmul %342, %334, %cst_91 {dimension_numbers = #tpu.dot_dimension_numbers<[1], [0], [0], [1], [0, 0, 1, 1], [], []>} : vector<8x8xbf16>, vector<8x8xbf16>, vector<8x8xf32> -> vector<8x8xf32>
    %344 = vector.extract_strided_slice %319 {offsets = [0, 16], sizes = [8, 8], strides = [1, 1]} : vector<8x96xbf16> to vector<8x8xbf16>
    %345 = vector.extract_strided_slice %319 {offsets = [0, 48], sizes = [8, 8], strides = [1, 1]} : vector<8x96xbf16> to vector<8x8xbf16>
    %346 = vector.extract_strided_slice %319 {offsets = [0, 80], sizes = [8, 8], strides = [1, 1]} : vector<8x96xbf16> to vector<8x8xbf16>
    %cst_92 = arith.constant dense<0.000000e+00> : vector<8x8xf32>
    %347 = tpu.matmul %344, %345, %cst_92 {dimension_numbers = #tpu.dot_dimension_numbers<[1], [1], [0], [0], [0, 0, 1, 0], [], []>} : vector<8x8xbf16>, vector<8x8xbf16>, vector<8x8xf32> -> vector<8x8xf32>
    %348 = math.exp %347 : vector<8x8xf32>
    %cst_93 = arith.constant dense<0.000000e+00> : vector<8xf32>
    %349 = vector.multi_reduction <add>, %348, %cst_93 [1] : vector<8x8xf32> to vector<8xf32>
    %350 = vector.shape_cast %349 : vector<8xf32> to vector<8x1xf32>
    %351 = tpu.reciprocal %350 {approx = true} : vector<8x1xf32> -> vector<8x1xf32>
    %352 = vector.broadcast %351 : vector<8x1xf32> to vector<8x8xf32>
    %353 = arith.mulf %348, %352 : vector<8x8xf32>
    %354 = arith.truncf %353 : vector<8x8xf32> to vector<8x8xbf16>
    %cst_94 = arith.constant dense<0.000000e+00> : vector<8x8xf32>
    %355 = tpu.matmul %354, %346, %cst_94 {dimension_numbers = #tpu.dot_dimension_numbers<[1], [0], [0], [1], [0, 0, 1, 1], [], []>} : vector<8x8xbf16>, vector<8x8xbf16>, vector<8x8xf32> -> vector<8x8xf32>
    %356 = vector.extract_strided_slice %319 {offsets = [0, 24], sizes = [8, 8], strides = [1, 1]} : vector<8x96xbf16> to vector<8x8xbf16>
    %357 = vector.extract_strided_slice %319 {offsets = [0, 56], sizes = [8, 8], strides = [1, 1]} : vector<8x96xbf16> to vector<8x8xbf16>
    %358 = vector.extract_strided_slice %319 {offsets = [0, 88], sizes = [8, 8], strides = [1, 1]} : vector<8x96xbf16> to vector<8x8xbf16>
    %cst_95 = arith.constant dense<0.000000e+00> : vector<8x8xf32>
    %359 = tpu.matmul %356, %357, %cst_95 {dimension_numbers = #tpu.dot_dimension_numbers<[1], [1], [0], [0], [0, 0, 1, 0], [], []>} : vector<8x8xbf16>, vector<8x8xbf16>, vector<8x8xf32> -> vector<8x8xf32>
    %360 = math.exp %359 : vector<8x8xf32>
    %cst_96 = arith.constant dense<0.000000e+00> : vector<8xf32>
    %361 = vector.multi_reduction <add>, %360, %cst_96 [1] : vector<8x8xf32> to vector<8xf32>
    %362 = vector.shape_cast %361 : vector<8xf32> to vector<8x1xf32>
    %363 = tpu.reciprocal %362 {approx = true} : vector<8x1xf32> -> vector<8x1xf32>
    %364 = vector.broadcast %363 : vector<8x1xf32> to vector<8x8xf32>
    %365 = arith.mulf %360, %364 : vector<8x8xf32>
    %366 = arith.truncf %365 : vector<8x8xf32> to vector<8x8xbf16>
    %cst_97 = arith.constant dense<0.000000e+00> : vector<8x8xf32>
    %367 = tpu.matmul %366, %358, %cst_97 {dimension_numbers = #tpu.dot_dimension_numbers<[1], [0], [0], [1], [0, 0, 1, 1], [], []>} : vector<8x8xbf16>, vector<8x8xbf16>, vector<8x8xf32> -> vector<8x8xf32>
    %368 = tpu.concatenate %331, %343, %355, %367 in 1 : vector<8x8xf32>, vector<8x8xf32>, vector<8x8xf32>, vector<8x8xf32> -> vector<8x32xf32>
    %369 = arith.truncf %368 : vector<8x32xf32> to vector<8x32xbf16>
    %cst_98 = arith.constant dense<0.000000e+00> : vector<8x32xf32>
    %370 = tpu.matmul %369, %1, %cst_98 {dimension_numbers = #tpu.dot_dimension_numbers<[1], [0], [0], [1], [0, 0, 1, 1], [], []>} : vector<8x32xbf16>, vector<32x32xbf16>, vector<8x32xf32> -> vector<8x32xf32>
    %371 = arith.addf %370, %7 : vector<8x32xf32>
    %372 = math.tanh %371 : vector<8x32xf32>
    %cst_99 = arith.constant 0.166666672 : f32
    %373 = vector.broadcast %cst_99 : f32 to vector<8x32xf32>
    %374 = arith.mulf %373, %372 : vector<8x32xf32>
    %375 = arith.addf %255, %374 : vector<8x32xf32>
    %376 = arith.truncf %375 : vector<8x32xf32> to vector<8x32xbf16>
    %cst_100 = arith.constant dense<0.000000e+00> : vector<8x96xf32>
    %377 = tpu.matmul %376, %0, %cst_100 {dimension_numbers = #tpu.dot_dimension_numbers<[1], [0], [0], [1], [0, 0, 1, 1], [], []>} : vector<8x32xbf16>, vector<32x96xbf16>, vector<8x96xf32> -> vector<8x96xf32>
    %378 = arith.addf %377, %4 : vector<8x96xf32>
    %379 = arith.truncf %378 : vector<8x96xf32> to vector<8x96xbf16>
    %380 = vector.extract_strided_slice %379 {offsets = [0, 0], sizes = [8, 8], strides = [1, 1]} : vector<8x96xbf16> to vector<8x8xbf16>
    %381 = vector.extract_strided_slice %379 {offsets = [0, 32], sizes = [8, 8], strides = [1, 1]} : vector<8x96xbf16> to vector<8x8xbf16>
    %382 = vector.extract_strided_slice %379 {offsets = [0, 64], sizes = [8, 8], strides = [1, 1]} : vector<8x96xbf16> to vector<8x8xbf16>
    %cst_101 = arith.constant dense<0.000000e+00> : vector<8x8xf32>
    %383 = tpu.matmul %380, %381, %cst_101 {dimension_numbers = #tpu.dot_dimension_numbers<[1], [1], [0], [0], [0, 0, 1, 0], [], []>} : vector<8x8xbf16>, vector<8x8xbf16>, vector<8x8xf32> -> vector<8x8xf32>
    %384 = math.exp %383 : vector<8x8xf32>
    %cst_102 = arith.constant dense<0.000000e+00> : vector<8xf32>
    %385 = vector.multi_reduction <add>, %384, %cst_102 [1] : vector<8x8xf32> to vector<8xf32>
    %386 = vector.shape_cast %385 : vector<8xf32> to vector<8x1xf32>
    %387 = tpu.reciprocal %386 {approx = true} : vector<8x1xf32> -> vector<8x1xf32>
    %388 = vector.broadcast %387 : vector<8x1xf32> to vector<8x8xf32>
    %389 = arith.mulf %384, %388 : vector<8x8xf32>
    %390 = arith.truncf %389 : vector<8x8xf32> to vector<8x8xbf16>
    %cst_103 = arith.constant dense<0.000000e+00> : vector<8x8xf32>
    %391 = tpu.matmul %390, %382, %cst_103 {dimension_numbers = #tpu.dot_dimension_numbers<[1], [0], [0], [1], [0, 0, 1, 1], [], []>} : vector<8x8xbf16>, vector<8x8xbf16>, vector<8x8xf32> -> vector<8x8xf32>
    %392 = vector.extract_strided_slice %379 {offsets = [0, 8], sizes = [8, 8], strides = [1, 1]} : vector<8x96xbf16> to vector<8x8xbf16>
    %393 = vector.extract_strided_slice %379 {offsets = [0, 40], sizes = [8, 8], strides = [1, 1]} : vector<8x96xbf16> to vector<8x8xbf16>
    %394 = vector.extract_strided_slice %379 {offsets = [0, 72], sizes = [8, 8], strides = [1, 1]} : vector<8x96xbf16> to vector<8x8xbf16>
    %cst_104 = arith.constant dense<0.000000e+00> : vector<8x8xf32>
    %395 = tpu.matmul %392, %393, %cst_104 {dimension_numbers = #tpu.dot_dimension_numbers<[1], [1], [0], [0], [0, 0, 1, 0], [], []>} : vector<8x8xbf16>, vector<8x8xbf16>, vector<8x8xf32> -> vector<8x8xf32>
    %396 = math.exp %395 : vector<8x8xf32>
    %cst_105 = arith.constant dense<0.000000e+00> : vector<8xf32>
    %397 = vector.multi_reduction <add>, %396, %cst_105 [1] : vector<8x8xf32> to vector<8xf32>
    %398 = vector.shape_cast %397 : vector<8xf32> to vector<8x1xf32>
    %399 = tpu.reciprocal %398 {approx = true} : vector<8x1xf32> -> vector<8x1xf32>
    %400 = vector.broadcast %399 : vector<8x1xf32> to vector<8x8xf32>
    %401 = arith.mulf %396, %400 : vector<8x8xf32>
    %402 = arith.truncf %401 : vector<8x8xf32> to vector<8x8xbf16>
    %cst_106 = arith.constant dense<0.000000e+00> : vector<8x8xf32>
    %403 = tpu.matmul %402, %394, %cst_106 {dimension_numbers = #tpu.dot_dimension_numbers<[1], [0], [0], [1], [0, 0, 1, 1], [], []>} : vector<8x8xbf16>, vector<8x8xbf16>, vector<8x8xf32> -> vector<8x8xf32>
    %404 = vector.extract_strided_slice %379 {offsets = [0, 16], sizes = [8, 8], strides = [1, 1]} : vector<8x96xbf16> to vector<8x8xbf16>
    %405 = vector.extract_strided_slice %379 {offsets = [0, 48], sizes = [8, 8], strides = [1, 1]} : vector<8x96xbf16> to vector<8x8xbf16>
    %406 = vector.extract_strided_slice %379 {offsets = [0, 80], sizes = [8, 8], strides = [1, 1]} : vector<8x96xbf16> to vector<8x8xbf16>
    %cst_107 = arith.constant dense<0.000000e+00> : vector<8x8xf32>
    %407 = tpu.matmul %404, %405, %cst_107 {dimension_numbers = #tpu.dot_dimension_numbers<[1], [1], [0], [0], [0, 0, 1, 0], [], []>} : vector<8x8xbf16>, vector<8x8xbf16>, vector<8x8xf32> -> vector<8x8xf32>
    %408 = math.exp %407 : vector<8x8xf32>
    %cst_108 = arith.constant dense<0.000000e+00> : vector<8xf32>
    %409 = vector.multi_reduction <add>, %408, %cst_108 [1] : vector<8x8xf32> to vector<8xf32>
    %410 = vector.shape_cast %409 : vector<8xf32> to vector<8x1xf32>
    %411 = tpu.reciprocal %410 {approx = true} : vector<8x1xf32> -> vector<8x1xf32>
    %412 = vector.broadcast %411 : vector<8x1xf32> to vector<8x8xf32>
    %413 = arith.mulf %408, %412 : vector<8x8xf32>
    %414 = arith.truncf %413 : vector<8x8xf32> to vector<8x8xbf16>
    %cst_109 = arith.constant dense<0.000000e+00> : vector<8x8xf32>
    %415 = tpu.matmul %414, %406, %cst_109 {dimension_numbers = #tpu.dot_dimension_numbers<[1], [0], [0], [1], [0, 0, 1, 1], [], []>} : vector<8x8xbf16>, vector<8x8xbf16>, vector<8x8xf32> -> vector<8x8xf32>
    %416 = vector.extract_strided_slice %379 {offsets = [0, 24], sizes = [8, 8], strides = [1, 1]} : vector<8x96xbf16> to vector<8x8xbf16>
    %417 = vector.extract_strided_slice %379 {offsets = [0, 56], sizes = [8, 8], strides = [1, 1]} : vector<8x96xbf16> to vector<8x8xbf16>
    %418 = vector.extract_strided_slice %379 {offsets = [0, 88], sizes = [8, 8], strides = [1, 1]} : vector<8x96xbf16> to vector<8x8xbf16>
    %cst_110 = arith.constant dense<0.000000e+00> : vector<8x8xf32>
    %419 = tpu.matmul %416, %417, %cst_110 {dimension_numbers = #tpu.dot_dimension_numbers<[1], [1], [0], [0], [0, 0, 1, 0], [], []>} : vector<8x8xbf16>, vector<8x8xbf16>, vector<8x8xf32> -> vector<8x8xf32>
    %420 = math.exp %419 : vector<8x8xf32>
    %cst_111 = arith.constant dense<0.000000e+00> : vector<8xf32>
    %421 = vector.multi_reduction <add>, %420, %cst_111 [1] : vector<8x8xf32> to vector<8xf32>
    %422 = vector.shape_cast %421 : vector<8xf32> to vector<8x1xf32>
    %423 = tpu.reciprocal %422 {approx = true} : vector<8x1xf32> -> vector<8x1xf32>
    %424 = vector.broadcast %423 : vector<8x1xf32> to vector<8x8xf32>
    %425 = arith.mulf %420, %424 : vector<8x8xf32>
    %426 = arith.truncf %425 : vector<8x8xf32> to vector<8x8xbf16>
    %cst_112 = arith.constant dense<0.000000e+00> : vector<8x8xf32>
    %427 = tpu.matmul %426, %418, %cst_112 {dimension_numbers = #tpu.dot_dimension_numbers<[1], [0], [0], [1], [0, 0, 1, 1], [], []>} : vector<8x8xbf16>, vector<8x8xbf16>, vector<8x8xf32> -> vector<8x8xf32>
    %428 = tpu.concatenate %391, %403, %415, %427 in 1 : vector<8x8xf32>, vector<8x8xf32>, vector<8x8xf32>, vector<8x8xf32> -> vector<8x32xf32>
    %429 = arith.truncf %428 : vector<8x32xf32> to vector<8x32xbf16>
    %cst_113 = arith.constant dense<0.000000e+00> : vector<8x32xf32>
    %430 = tpu.matmul %429, %1, %cst_113 {dimension_numbers = #tpu.dot_dimension_numbers<[1], [0], [0], [1], [0, 0, 1, 1], [], []>} : vector<8x32xbf16>, vector<32x32xbf16>, vector<8x32xf32> -> vector<8x32xf32>
    %431 = arith.addf %430, %7 : vector<8x32xf32>
    %432 = math.tanh %431 : vector<8x32xf32>
    %cst_114 = arith.constant 0.333333343 : f32
    %433 = vector.broadcast %cst_114 : f32 to vector<8x32xf32>
    %434 = arith.mulf %433, %432 : vector<8x32xf32>
    %435 = arith.addf %255, %434 : vector<8x32xf32>
    %436 = arith.truncf %435 : vector<8x32xf32> to vector<8x32xbf16>
    %cst_115 = arith.constant dense<0.000000e+00> : vector<8x96xf32>
    %437 = tpu.matmul %436, %0, %cst_115 {dimension_numbers = #tpu.dot_dimension_numbers<[1], [0], [0], [1], [0, 0, 1, 1], [], []>} : vector<8x32xbf16>, vector<32x96xbf16>, vector<8x96xf32> -> vector<8x96xf32>
    %438 = arith.addf %437, %4 : vector<8x96xf32>
    %439 = arith.truncf %438 : vector<8x96xf32> to vector<8x96xbf16>
    %440 = vector.extract_strided_slice %439 {offsets = [0, 0], sizes = [8, 8], strides = [1, 1]} : vector<8x96xbf16> to vector<8x8xbf16>
    %441 = vector.extract_strided_slice %439 {offsets = [0, 32], sizes = [8, 8], strides = [1, 1]} : vector<8x96xbf16> to vector<8x8xbf16>
    %442 = vector.extract_strided_slice %439 {offsets = [0, 64], sizes = [8, 8], strides = [1, 1]} : vector<8x96xbf16> to vector<8x8xbf16>
    %cst_116 = arith.constant dense<0.000000e+00> : vector<8x8xf32>
    %443 = tpu.matmul %440, %441, %cst_116 {dimension_numbers = #tpu.dot_dimension_numbers<[1], [1], [0], [0], [0, 0, 1, 0], [], []>} : vector<8x8xbf16>, vector<8x8xbf16>, vector<8x8xf32> -> vector<8x8xf32>
    %444 = math.exp %443 : vector<8x8xf32>
    %cst_117 = arith.constant dense<0.000000e+00> : vector<8xf32>
    %445 = vector.multi_reduction <add>, %444, %cst_117 [1] : vector<8x8xf32> to vector<8xf32>
    %446 = vector.shape_cast %445 : vector<8xf32> to vector<8x1xf32>
    %447 = tpu.reciprocal %446 {approx = true} : vector<8x1xf32> -> vector<8x1xf32>
    %448 = vector.broadcast %447 : vector<8x1xf32> to vector<8x8xf32>
    %449 = arith.mulf %444, %448 : vector<8x8xf32>
    %450 = arith.truncf %449 : vector<8x8xf32> to vector<8x8xbf16>
    %cst_118 = arith.constant dense<0.000000e+00> : vector<8x8xf32>
    %451 = tpu.matmul %450, %442, %cst_118 {dimension_numbers = #tpu.dot_dimension_numbers<[1], [0], [0], [1], [0, 0, 1, 1], [], []>} : vector<8x8xbf16>, vector<8x8xbf16>, vector<8x8xf32> -> vector<8x8xf32>
    %452 = vector.extract_strided_slice %439 {offsets = [0, 8], sizes = [8, 8], strides = [1, 1]} : vector<8x96xbf16> to vector<8x8xbf16>
    %453 = vector.extract_strided_slice %439 {offsets = [0, 40], sizes = [8, 8], strides = [1, 1]} : vector<8x96xbf16> to vector<8x8xbf16>
    %454 = vector.extract_strided_slice %439 {offsets = [0, 72], sizes = [8, 8], strides = [1, 1]} : vector<8x96xbf16> to vector<8x8xbf16>
    %cst_119 = arith.constant dense<0.000000e+00> : vector<8x8xf32>
    %455 = tpu.matmul %452, %453, %cst_119 {dimension_numbers = #tpu.dot_dimension_numbers<[1], [1], [0], [0], [0, 0, 1, 0], [], []>} : vector<8x8xbf16>, vector<8x8xbf16>, vector<8x8xf32> -> vector<8x8xf32>
    %456 = math.exp %455 : vector<8x8xf32>
    %cst_120 = arith.constant dense<0.000000e+00> : vector<8xf32>
    %457 = vector.multi_reduction <add>, %456, %cst_120 [1] : vector<8x8xf32> to vector<8xf32>
    %458 = vector.shape_cast %457 : vector<8xf32> to vector<8x1xf32>
    %459 = tpu.reciprocal %458 {approx = true} : vector<8x1xf32> -> vector<8x1xf32>
    %460 = vector.broadcast %459 : vector<8x1xf32> to vector<8x8xf32>
    %461 = arith.mulf %456, %460 : vector<8x8xf32>
    %462 = arith.truncf %461 : vector<8x8xf32> to vector<8x8xbf16>
    %cst_121 = arith.constant dense<0.000000e+00> : vector<8x8xf32>
    %463 = tpu.matmul %462, %454, %cst_121 {dimension_numbers = #tpu.dot_dimension_numbers<[1], [0], [0], [1], [0, 0, 1, 1], [], []>} : vector<8x8xbf16>, vector<8x8xbf16>, vector<8x8xf32> -> vector<8x8xf32>
    %464 = vector.extract_strided_slice %439 {offsets = [0, 16], sizes = [8, 8], strides = [1, 1]} : vector<8x96xbf16> to vector<8x8xbf16>
    %465 = vector.extract_strided_slice %439 {offsets = [0, 48], sizes = [8, 8], strides = [1, 1]} : vector<8x96xbf16> to vector<8x8xbf16>
    %466 = vector.extract_strided_slice %439 {offsets = [0, 80], sizes = [8, 8], strides = [1, 1]} : vector<8x96xbf16> to vector<8x8xbf16>
    %cst_122 = arith.constant dense<0.000000e+00> : vector<8x8xf32>
    %467 = tpu.matmul %464, %465, %cst_122 {dimension_numbers = #tpu.dot_dimension_numbers<[1], [1], [0], [0], [0, 0, 1, 0], [], []>} : vector<8x8xbf16>, vector<8x8xbf16>, vector<8x8xf32> -> vector<8x8xf32>
    %468 = math.exp %467 : vector<8x8xf32>
    %cst_123 = arith.constant dense<0.000000e+00> : vector<8xf32>
    %469 = vector.multi_reduction <add>, %468, %cst_123 [1] : vector<8x8xf32> to vector<8xf32>
    %470 = vector.shape_cast %469 : vector<8xf32> to vector<8x1xf32>
    %471 = tpu.reciprocal %470 {approx = true} : vector<8x1xf32> -> vector<8x1xf32>
    %472 = vector.broadcast %471 : vector<8x1xf32> to vector<8x8xf32>
    %473 = arith.mulf %468, %472 : vector<8x8xf32>
    %474 = arith.truncf %473 : vector<8x8xf32> to vector<8x8xbf16>
    %cst_124 = arith.constant dense<0.000000e+00> : vector<8x8xf32>
    %475 = tpu.matmul %474, %466, %cst_124 {dimension_numbers = #tpu.dot_dimension_numbers<[1], [0], [0], [1], [0, 0, 1, 1], [], []>} : vector<8x8xbf16>, vector<8x8xbf16>, vector<8x8xf32> -> vector<8x8xf32>
    %476 = vector.extract_strided_slice %439 {offsets = [0, 24], sizes = [8, 8], strides = [1, 1]} : vector<8x96xbf16> to vector<8x8xbf16>
    %477 = vector.extract_strided_slice %439 {offsets = [0, 56], sizes = [8, 8], strides = [1, 1]} : vector<8x96xbf16> to vector<8x8xbf16>
    %478 = vector.extract_strided_slice %439 {offsets = [0, 88], sizes = [8, 8], strides = [1, 1]} : vector<8x96xbf16> to vector<8x8xbf16>
    %cst_125 = arith.constant dense<0.000000e+00> : vector<8x8xf32>
    %479 = tpu.matmul %476, %477, %cst_125 {dimension_numbers = #tpu.dot_dimension_numbers<[1], [1], [0], [0], [0, 0, 1, 0], [], []>} : vector<8x8xbf16>, vector<8x8xbf16>, vector<8x8xf32> -> vector<8x8xf32>
    %480 = math.exp %479 : vector<8x8xf32>
    %cst_126 = arith.constant dense<0.000000e+00> : vector<8xf32>
    %481 = vector.multi_reduction <add>, %480, %cst_126 [1] : vector<8x8xf32> to vector<8xf32>
    %482 = vector.shape_cast %481 : vector<8xf32> to vector<8x1xf32>
    %483 = tpu.reciprocal %482 {approx = true} : vector<8x1xf32> -> vector<8x1xf32>
    %484 = vector.broadcast %483 : vector<8x1xf32> to vector<8x8xf32>
    %485 = arith.mulf %480, %484 : vector<8x8xf32>
    %486 = arith.truncf %485 : vector<8x8xf32> to vector<8x8xbf16>
    %cst_127 = arith.constant dense<0.000000e+00> : vector<8x8xf32>
    %487 = tpu.matmul %486, %478, %cst_127 {dimension_numbers = #tpu.dot_dimension_numbers<[1], [0], [0], [1], [0, 0, 1, 1], [], []>} : vector<8x8xbf16>, vector<8x8xbf16>, vector<8x8xf32> -> vector<8x8xf32>
    %488 = tpu.concatenate %451, %463, %475, %487 in 1 : vector<8x8xf32>, vector<8x8xf32>, vector<8x8xf32>, vector<8x8xf32> -> vector<8x32xf32>
    %489 = arith.truncf %488 : vector<8x32xf32> to vector<8x32xbf16>
    %cst_128 = arith.constant dense<0.000000e+00> : vector<8x32xf32>
    %490 = tpu.matmul %489, %1, %cst_128 {dimension_numbers = #tpu.dot_dimension_numbers<[1], [0], [0], [1], [0, 0, 1, 1], [], []>} : vector<8x32xbf16>, vector<32x32xbf16>, vector<8x32xf32> -> vector<8x32xf32>
    %491 = arith.addf %490, %7 : vector<8x32xf32>
    %492 = math.tanh %491 : vector<8x32xf32>
    %cst_129 = arith.constant 2.000000e+00 : f32
    %493 = vector.broadcast %cst_129 : f32 to vector<8x32xf32>
    %494 = arith.mulf %493, %372 : vector<8x32xf32>
    %495 = arith.addf %312, %494 : vector<8x32xf32>
    %cst_130 = arith.constant 2.000000e+00 : f32
    %496 = vector.broadcast %cst_130 : f32 to vector<8x32xf32>
    %497 = arith.mulf %496, %432 : vector<8x32xf32>
    %498 = arith.addf %495, %497 : vector<8x32xf32>
    %499 = arith.addf %498, %492 : vector<8x32xf32>
    %cst_131 = arith.constant 0.055555556 : f32
    %500 = vector.broadcast %cst_131 : f32 to vector<8x32xf32>
    %501 = arith.mulf %500, %499 : vector<8x32xf32>
    %502 = arith.addf %255, %501 : vector<8x32xf32>
    %503 = arith.truncf %502 : vector<8x32xf32> to vector<8x32xbf16>
    %cst_132 = arith.constant dense<0.000000e+00> : vector<8x96xf32>
    %504 = tpu.matmul %503, %0, %cst_132 {dimension_numbers = #tpu.dot_dimension_numbers<[1], [0], [0], [1], [0, 0, 1, 1], [], []>} : vector<8x32xbf16>, vector<32x96xbf16>, vector<8x96xf32> -> vector<8x96xf32>
    %505 = arith.addf %504, %4 : vector<8x96xf32>
    %506 = arith.truncf %505 : vector<8x96xf32> to vector<8x96xbf16>
    %507 = vector.extract_strided_slice %506 {offsets = [0, 0], sizes = [8, 8], strides = [1, 1]} : vector<8x96xbf16> to vector<8x8xbf16>
    %508 = vector.extract_strided_slice %506 {offsets = [0, 32], sizes = [8, 8], strides = [1, 1]} : vector<8x96xbf16> to vector<8x8xbf16>
    %509 = vector.extract_strided_slice %506 {offsets = [0, 64], sizes = [8, 8], strides = [1, 1]} : vector<8x96xbf16> to vector<8x8xbf16>
    %cst_133 = arith.constant dense<0.000000e+00> : vector<8x8xf32>
    %510 = tpu.matmul %507, %508, %cst_133 {dimension_numbers = #tpu.dot_dimension_numbers<[1], [1], [0], [0], [0, 0, 1, 0], [], []>} : vector<8x8xbf16>, vector<8x8xbf16>, vector<8x8xf32> -> vector<8x8xf32>
    %511 = math.exp %510 : vector<8x8xf32>
    %cst_134 = arith.constant dense<0.000000e+00> : vector<8xf32>
    %512 = vector.multi_reduction <add>, %511, %cst_134 [1] : vector<8x8xf32> to vector<8xf32>
    %513 = vector.shape_cast %512 : vector<8xf32> to vector<8x1xf32>
    %514 = tpu.reciprocal %513 {approx = true} : vector<8x1xf32> -> vector<8x1xf32>
    %515 = vector.broadcast %514 : vector<8x1xf32> to vector<8x8xf32>
    %516 = arith.mulf %511, %515 : vector<8x8xf32>
    %517 = arith.truncf %516 : vector<8x8xf32> to vector<8x8xbf16>
    %cst_135 = arith.constant dense<0.000000e+00> : vector<8x8xf32>
    %518 = tpu.matmul %517, %509, %cst_135 {dimension_numbers = #tpu.dot_dimension_numbers<[1], [0], [0], [1], [0, 0, 1, 1], [], []>} : vector<8x8xbf16>, vector<8x8xbf16>, vector<8x8xf32> -> vector<8x8xf32>
    %519 = vector.extract_strided_slice %506 {offsets = [0, 8], sizes = [8, 8], strides = [1, 1]} : vector<8x96xbf16> to vector<8x8xbf16>
    %520 = vector.extract_strided_slice %506 {offsets = [0, 40], sizes = [8, 8], strides = [1, 1]} : vector<8x96xbf16> to vector<8x8xbf16>
    %521 = vector.extract_strided_slice %506 {offsets = [0, 72], sizes = [8, 8], strides = [1, 1]} : vector<8x96xbf16> to vector<8x8xbf16>
    %cst_136 = arith.constant dense<0.000000e+00> : vector<8x8xf32>
    %522 = tpu.matmul %519, %520, %cst_136 {dimension_numbers = #tpu.dot_dimension_numbers<[1], [1], [0], [0], [0, 0, 1, 0], [], []>} : vector<8x8xbf16>, vector<8x8xbf16>, vector<8x8xf32> -> vector<8x8xf32>
    %523 = math.exp %522 : vector<8x8xf32>
    %cst_137 = arith.constant dense<0.000000e+00> : vector<8xf32>
    %524 = vector.multi_reduction <add>, %523, %cst_137 [1] : vector<8x8xf32> to vector<8xf32>
    %525 = vector.shape_cast %524 : vector<8xf32> to vector<8x1xf32>
    %526 = tpu.reciprocal %525 {approx = true} : vector<8x1xf32> -> vector<8x1xf32>
    %527 = vector.broadcast %526 : vector<8x1xf32> to vector<8x8xf32>
    %528 = arith.mulf %523, %527 : vector<8x8xf32>
    %529 = arith.truncf %528 : vector<8x8xf32> to vector<8x8xbf16>
    %cst_138 = arith.constant dense<0.000000e+00> : vector<8x8xf32>
    %530 = tpu.matmul %529, %521, %cst_138 {dimension_numbers = #tpu.dot_dimension_numbers<[1], [0], [0], [1], [0, 0, 1, 1], [], []>} : vector<8x8xbf16>, vector<8x8xbf16>, vector<8x8xf32> -> vector<8x8xf32>
    %531 = vector.extract_strided_slice %506 {offsets = [0, 16], sizes = [8, 8], strides = [1, 1]} : vector<8x96xbf16> to vector<8x8xbf16>
    %532 = vector.extract_strided_slice %506 {offsets = [0, 48], sizes = [8, 8], strides = [1, 1]} : vector<8x96xbf16> to vector<8x8xbf16>
    %533 = vector.extract_strided_slice %506 {offsets = [0, 80], sizes = [8, 8], strides = [1, 1]} : vector<8x96xbf16> to vector<8x8xbf16>
    %cst_139 = arith.constant dense<0.000000e+00> : vector<8x8xf32>
    %534 = tpu.matmul %531, %532, %cst_139 {dimension_numbers = #tpu.dot_dimension_numbers<[1], [1], [0], [0], [0, 0, 1, 0], [], []>} : vector<8x8xbf16>, vector<8x8xbf16>, vector<8x8xf32> -> vector<8x8xf32>
    %535 = math.exp %534 : vector<8x8xf32>
    %cst_140 = arith.constant dense<0.000000e+00> : vector<8xf32>
    %536 = vector.multi_reduction <add>, %535, %cst_140 [1] : vector<8x8xf32> to vector<8xf32>
    %537 = vector.shape_cast %536 : vector<8xf32> to vector<8x1xf32>
    %538 = tpu.reciprocal %537 {approx = true} : vector<8x1xf32> -> vector<8x1xf32>
    %539 = vector.broadcast %538 : vector<8x1xf32> to vector<8x8xf32>
    %540 = arith.mulf %535, %539 : vector<8x8xf32>
    %541 = arith.truncf %540 : vector<8x8xf32> to vector<8x8xbf16>
    %cst_141 = arith.constant dense<0.000000e+00> : vector<8x8xf32>
    %542 = tpu.matmul %541, %533, %cst_141 {dimension_numbers = #tpu.dot_dimension_numbers<[1], [0], [0], [1], [0, 0, 1, 1], [], []>} : vector<8x8xbf16>, vector<8x8xbf16>, vector<8x8xf32> -> vector<8x8xf32>
    %543 = vector.extract_strided_slice %506 {offsets = [0, 24], sizes = [8, 8], strides = [1, 1]} : vector<8x96xbf16> to vector<8x8xbf16>
    %544 = vector.extract_strided_slice %506 {offsets = [0, 56], sizes = [8, 8], strides = [1, 1]} : vector<8x96xbf16> to vector<8x8xbf16>
    %545 = vector.extract_strided_slice %506 {offsets = [0, 88], sizes = [8, 8], strides = [1, 1]} : vector<8x96xbf16> to vector<8x8xbf16>
    %cst_142 = arith.constant dense<0.000000e+00> : vector<8x8xf32>
    %546 = tpu.matmul %543, %544, %cst_142 {dimension_numbers = #tpu.dot_dimension_numbers<[1], [1], [0], [0], [0, 0, 1, 0], [], []>} : vector<8x8xbf16>, vector<8x8xbf16>, vector<8x8xf32> -> vector<8x8xf32>
    %547 = math.exp %546 : vector<8x8xf32>
    %cst_143 = arith.constant dense<0.000000e+00> : vector<8xf32>
    %548 = vector.multi_reduction <add>, %547, %cst_143 [1] : vector<8x8xf32> to vector<8xf32>
    %549 = vector.shape_cast %548 : vector<8xf32> to vector<8x1xf32>
    %550 = tpu.reciprocal %549 {approx = true} : vector<8x1xf32> -> vector<8x1xf32>
    %551 = vector.broadcast %550 : vector<8x1xf32> to vector<8x8xf32>
    %552 = arith.mulf %547, %551 : vector<8x8xf32>
    %553 = arith.truncf %552 : vector<8x8xf32> to vector<8x8xbf16>
    %cst_144 = arith.constant dense<0.000000e+00> : vector<8x8xf32>
    %554 = tpu.matmul %553, %545, %cst_144 {dimension_numbers = #tpu.dot_dimension_numbers<[1], [0], [0], [1], [0, 0, 1, 1], [], []>} : vector<8x8xbf16>, vector<8x8xbf16>, vector<8x8xf32> -> vector<8x8xf32>
    %555 = tpu.concatenate %518, %530, %542, %554 in 1 : vector<8x8xf32>, vector<8x8xf32>, vector<8x8xf32>, vector<8x8xf32> -> vector<8x32xf32>
    %556 = arith.truncf %555 : vector<8x32xf32> to vector<8x32xbf16>
    %cst_145 = arith.constant dense<0.000000e+00> : vector<8x32xf32>
    %557 = tpu.matmul %556, %1, %cst_145 {dimension_numbers = #tpu.dot_dimension_numbers<[1], [0], [0], [1], [0, 0, 1, 1], [], []>} : vector<8x32xbf16>, vector<32x32xbf16>, vector<8x32xf32> -> vector<8x32xf32>
    %558 = arith.addf %557, %7 : vector<8x32xf32>
    %559 = math.tanh %558 : vector<8x32xf32>
    %cst_146 = arith.constant 0.166666672 : f32
    %560 = vector.broadcast %cst_146 : f32 to vector<8x32xf32>
    %561 = arith.mulf %560, %559 : vector<8x32xf32>
    %562 = arith.addf %502, %561 : vector<8x32xf32>
    %563 = arith.truncf %562 : vector<8x32xf32> to vector<8x32xbf16>
    %cst_147 = arith.constant dense<0.000000e+00> : vector<8x96xf32>
    %564 = tpu.matmul %563, %0, %cst_147 {dimension_numbers = #tpu.dot_dimension_numbers<[1], [0], [0], [1], [0, 0, 1, 1], [], []>} : vector<8x32xbf16>, vector<32x96xbf16>, vector<8x96xf32> -> vector<8x96xf32>
    %565 = arith.addf %564, %4 : vector<8x96xf32>
    %566 = arith.truncf %565 : vector<8x96xf32> to vector<8x96xbf16>
    %567 = vector.extract_strided_slice %566 {offsets = [0, 0], sizes = [8, 8], strides = [1, 1]} : vector<8x96xbf16> to vector<8x8xbf16>
    %568 = vector.extract_strided_slice %566 {offsets = [0, 32], sizes = [8, 8], strides = [1, 1]} : vector<8x96xbf16> to vector<8x8xbf16>
    %569 = vector.extract_strided_slice %566 {offsets = [0, 64], sizes = [8, 8], strides = [1, 1]} : vector<8x96xbf16> to vector<8x8xbf16>
    %cst_148 = arith.constant dense<0.000000e+00> : vector<8x8xf32>
    %570 = tpu.matmul %567, %568, %cst_148 {dimension_numbers = #tpu.dot_dimension_numbers<[1], [1], [0], [0], [0, 0, 1, 0], [], []>} : vector<8x8xbf16>, vector<8x8xbf16>, vector<8x8xf32> -> vector<8x8xf32>
    %571 = math.exp %570 : vector<8x8xf32>
    %cst_149 = arith.constant dense<0.000000e+00> : vector<8xf32>
    %572 = vector.multi_reduction <add>, %571, %cst_149 [1] : vector<8x8xf32> to vector<8xf32>
    %573 = vector.shape_cast %572 : vector<8xf32> to vector<8x1xf32>
    %574 = tpu.reciprocal %573 {approx = true} : vector<8x1xf32> -> vector<8x1xf32>
    %575 = vector.broadcast %574 : vector<8x1xf32> to vector<8x8xf32>
    %576 = arith.mulf %571, %575 : vector<8x8xf32>
    %577 = arith.truncf %576 : vector<8x8xf32> to vector<8x8xbf16>
    %cst_150 = arith.constant dense<0.000000e+00> : vector<8x8xf32>
    %578 = tpu.matmul %577, %569, %cst_150 {dimension_numbers = #tpu.dot_dimension_numbers<[1], [0], [0], [1], [0, 0, 1, 1], [], []>} : vector<8x8xbf16>, vector<8x8xbf16>, vector<8x8xf32> -> vector<8x8xf32>
    %579 = vector.extract_strided_slice %566 {offsets = [0, 8], sizes = [8, 8], strides = [1, 1]} : vector<8x96xbf16> to vector<8x8xbf16>
    %580 = vector.extract_strided_slice %566 {offsets = [0, 40], sizes = [8, 8], strides = [1, 1]} : vector<8x96xbf16> to vector<8x8xbf16>
    %581 = vector.extract_strided_slice %566 {offsets = [0, 72], sizes = [8, 8], strides = [1, 1]} : vector<8x96xbf16> to vector<8x8xbf16>
    %cst_151 = arith.constant dense<0.000000e+00> : vector<8x8xf32>
    %582 = tpu.matmul %579, %580, %cst_151 {dimension_numbers = #tpu.dot_dimension_numbers<[1], [1], [0], [0], [0, 0, 1, 0], [], []>} : vector<8x8xbf16>, vector<8x8xbf16>, vector<8x8xf32> -> vector<8x8xf32>
    %583 = math.exp %582 : vector<8x8xf32>
    %cst_152 = arith.constant dense<0.000000e+00> : vector<8xf32>
    %584 = vector.multi_reduction <add>, %583, %cst_152 [1] : vector<8x8xf32> to vector<8xf32>
    %585 = vector.shape_cast %584 : vector<8xf32> to vector<8x1xf32>
    %586 = tpu.reciprocal %585 {approx = true} : vector<8x1xf32> -> vector<8x1xf32>
    %587 = vector.broadcast %586 : vector<8x1xf32> to vector<8x8xf32>
    %588 = arith.mulf %583, %587 : vector<8x8xf32>
    %589 = arith.truncf %588 : vector<8x8xf32> to vector<8x8xbf16>
    %cst_153 = arith.constant dense<0.000000e+00> : vector<8x8xf32>
    %590 = tpu.matmul %589, %581, %cst_153 {dimension_numbers = #tpu.dot_dimension_numbers<[1], [0], [0], [1], [0, 0, 1, 1], [], []>} : vector<8x8xbf16>, vector<8x8xbf16>, vector<8x8xf32> -> vector<8x8xf32>
    %591 = vector.extract_strided_slice %566 {offsets = [0, 16], sizes = [8, 8], strides = [1, 1]} : vector<8x96xbf16> to vector<8x8xbf16>
    %592 = vector.extract_strided_slice %566 {offsets = [0, 48], sizes = [8, 8], strides = [1, 1]} : vector<8x96xbf16> to vector<8x8xbf16>
    %593 = vector.extract_strided_slice %566 {offsets = [0, 80], sizes = [8, 8], strides = [1, 1]} : vector<8x96xbf16> to vector<8x8xbf16>
    %cst_154 = arith.constant dense<0.000000e+00> : vector<8x8xf32>
    %594 = tpu.matmul %591, %592, %cst_154 {dimension_numbers = #tpu.dot_dimension_numbers<[1], [1], [0], [0], [0, 0, 1, 0], [], []>} : vector<8x8xbf16>, vector<8x8xbf16>, vector<8x8xf32> -> vector<8x8xf32>
    %595 = math.exp %594 : vector<8x8xf32>
    %cst_155 = arith.constant dense<0.000000e+00> : vector<8xf32>
    %596 = vector.multi_reduction <add>, %595, %cst_155 [1] : vector<8x8xf32> to vector<8xf32>
    %597 = vector.shape_cast %596 : vector<8xf32> to vector<8x1xf32>
    %598 = tpu.reciprocal %597 {approx = true} : vector<8x1xf32> -> vector<8x1xf32>
    %599 = vector.broadcast %598 : vector<8x1xf32> to vector<8x8xf32>
    %600 = arith.mulf %595, %599 : vector<8x8xf32>
    %601 = arith.truncf %600 : vector<8x8xf32> to vector<8x8xbf16>
    %cst_156 = arith.constant dense<0.000000e+00> : vector<8x8xf32>
    %602 = tpu.matmul %601, %593, %cst_156 {dimension_numbers = #tpu.dot_dimension_numbers<[1], [0], [0], [1], [0, 0, 1, 1], [], []>} : vector<8x8xbf16>, vector<8x8xbf16>, vector<8x8xf32> -> vector<8x8xf32>
    %603 = vector.extract_strided_slice %566 {offsets = [0, 24], sizes = [8, 8], strides = [1, 1]} : vector<8x96xbf16> to vector<8x8xbf16>
    %604 = vector.extract_strided_slice %566 {offsets = [0, 56], sizes = [8, 8], strides = [1, 1]} : vector<8x96xbf16> to vector<8x8xbf16>
    %605 = vector.extract_strided_slice %566 {offsets = [0, 88], sizes = [8, 8], strides = [1, 1]} : vector<8x96xbf16> to vector<8x8xbf16>
    %cst_157 = arith.constant dense<0.000000e+00> : vector<8x8xf32>
    %606 = tpu.matmul %603, %604, %cst_157 {dimension_numbers = #tpu.dot_dimension_numbers<[1], [1], [0], [0], [0, 0, 1, 0], [], []>} : vector<8x8xbf16>, vector<8x8xbf16>, vector<8x8xf32> -> vector<8x8xf32>
    %607 = math.exp %606 : vector<8x8xf32>
    %cst_158 = arith.constant dense<0.000000e+00> : vector<8xf32>
    %608 = vector.multi_reduction <add>, %607, %cst_158 [1] : vector<8x8xf32> to vector<8xf32>
    %609 = vector.shape_cast %608 : vector<8xf32> to vector<8x1xf32>
    %610 = tpu.reciprocal %609 {approx = true} : vector<8x1xf32> -> vector<8x1xf32>
    %611 = vector.broadcast %610 : vector<8x1xf32> to vector<8x8xf32>
    %612 = arith.mulf %607, %611 : vector<8x8xf32>
    %613 = arith.truncf %612 : vector<8x8xf32> to vector<8x8xbf16>
    %cst_159 = arith.constant dense<0.000000e+00> : vector<8x8xf32>
    %614 = tpu.matmul %613, %605, %cst_159 {dimension_numbers = #tpu.dot_dimension_numbers<[1], [0], [0], [1], [0, 0, 1, 1], [], []>} : vector<8x8xbf16>, vector<8x8xbf16>, vector<8x8xf32> -> vector<8x8xf32>
    %615 = tpu.concatenate %578, %590, %602, %614 in 1 : vector<8x8xf32>, vector<8x8xf32>, vector<8x8xf32>, vector<8x8xf32> -> vector<8x32xf32>
    %616 = arith.truncf %615 : vector<8x32xf32> to vector<8x32xbf16>
    %cst_160 = arith.constant dense<0.000000e+00> : vector<8x32xf32>
    %617 = tpu.matmul %616, %1, %cst_160 {dimension_numbers = #tpu.dot_dimension_numbers<[1], [0], [0], [1], [0, 0, 1, 1], [], []>} : vector<8x32xbf16>, vector<32x32xbf16>, vector<8x32xf32> -> vector<8x32xf32>
    %618 = arith.addf %617, %7 : vector<8x32xf32>
    %619 = math.tanh %618 : vector<8x32xf32>
    %cst_161 = arith.constant 0.166666672 : f32
    %620 = vector.broadcast %cst_161 : f32 to vector<8x32xf32>
    %621 = arith.mulf %620, %619 : vector<8x32xf32>
    %622 = arith.addf %502, %621 : vector<8x32xf32>
    %623 = arith.truncf %622 : vector<8x32xf32> to vector<8x32xbf16>
    %cst_162 = arith.constant dense<0.000000e+00> : vector<8x96xf32>
    %624 = tpu.matmul %623, %0, %cst_162 {dimension_numbers = #tpu.dot_dimension_numbers<[1], [0], [0], [1], [0, 0, 1, 1], [], []>} : vector<8x32xbf16>, vector<32x96xbf16>, vector<8x96xf32> -> vector<8x96xf32>
    %625 = arith.addf %624, %4 : vector<8x96xf32>
    %626 = arith.truncf %625 : vector<8x96xf32> to vector<8x96xbf16>
    %627 = vector.extract_strided_slice %626 {offsets = [0, 0], sizes = [8, 8], strides = [1, 1]} : vector<8x96xbf16> to vector<8x8xbf16>
    %628 = vector.extract_strided_slice %626 {offsets = [0, 32], sizes = [8, 8], strides = [1, 1]} : vector<8x96xbf16> to vector<8x8xbf16>
    %629 = vector.extract_strided_slice %626 {offsets = [0, 64], sizes = [8, 8], strides = [1, 1]} : vector<8x96xbf16> to vector<8x8xbf16>
    %cst_163 = arith.constant dense<0.000000e+00> : vector<8x8xf32>
    %630 = tpu.matmul %627, %628, %cst_163 {dimension_numbers = #tpu.dot_dimension_numbers<[1], [1], [0], [0], [0, 0, 1, 0], [], []>} : vector<8x8xbf16>, vector<8x8xbf16>, vector<8x8xf32> -> vector<8x8xf32>
    %631 = math.exp %630 : vector<8x8xf32>
    %cst_164 = arith.constant dense<0.000000e+00> : vector<8xf32>
    %632 = vector.multi_reduction <add>, %631, %cst_164 [1] : vector<8x8xf32> to vector<8xf32>
    %633 = vector.shape_cast %632 : vector<8xf32> to vector<8x1xf32>
    %634 = tpu.reciprocal %633 {approx = true} : vector<8x1xf32> -> vector<8x1xf32>
    %635 = vector.broadcast %634 : vector<8x1xf32> to vector<8x8xf32>
    %636 = arith.mulf %631, %635 : vector<8x8xf32>
    %637 = arith.truncf %636 : vector<8x8xf32> to vector<8x8xbf16>
    %cst_165 = arith.constant dense<0.000000e+00> : vector<8x8xf32>
    %638 = tpu.matmul %637, %629, %cst_165 {dimension_numbers = #tpu.dot_dimension_numbers<[1], [0], [0], [1], [0, 0, 1, 1], [], []>} : vector<8x8xbf16>, vector<8x8xbf16>, vector<8x8xf32> -> vector<8x8xf32>
    %639 = vector.extract_strided_slice %626 {offsets = [0, 8], sizes = [8, 8], strides = [1, 1]} : vector<8x96xbf16> to vector<8x8xbf16>
    %640 = vector.extract_strided_slice %626 {offsets = [0, 40], sizes = [8, 8], strides = [1, 1]} : vector<8x96xbf16> to vector<8x8xbf16>
    %641 = vector.extract_strided_slice %626 {offsets = [0, 72], sizes = [8, 8], strides = [1, 1]} : vector<8x96xbf16> to vector<8x8xbf16>
    %cst_166 = arith.constant dense<0.000000e+00> : vector<8x8xf32>
    %642 = tpu.matmul %639, %640, %cst_166 {dimension_numbers = #tpu.dot_dimension_numbers<[1], [1], [0], [0], [0, 0, 1, 0], [], []>} : vector<8x8xbf16>, vector<8x8xbf16>, vector<8x8xf32> -> vector<8x8xf32>
    %643 = math.exp %642 : vector<8x8xf32>
    %cst_167 = arith.constant dense<0.000000e+00> : vector<8xf32>
    %644 = vector.multi_reduction <add>, %643, %cst_167 [1] : vector<8x8xf32> to vector<8xf32>
    %645 = vector.shape_cast %644 : vector<8xf32> to vector<8x1xf32>
    %646 = tpu.reciprocal %645 {approx = true} : vector<8x1xf32> -> vector<8x1xf32>
    %647 = vector.broadcast %646 : vector<8x1xf32> to vector<8x8xf32>
    %648 = arith.mulf %643, %647 : vector<8x8xf32>
    %649 = arith.truncf %648 : vector<8x8xf32> to vector<8x8xbf16>
    %cst_168 = arith.constant dense<0.000000e+00> : vector<8x8xf32>
    %650 = tpu.matmul %649, %641, %cst_168 {dimension_numbers = #tpu.dot_dimension_numbers<[1], [0], [0], [1], [0, 0, 1, 1], [], []>} : vector<8x8xbf16>, vector<8x8xbf16>, vector<8x8xf32> -> vector<8x8xf32>
    %651 = vector.extract_strided_slice %626 {offsets = [0, 16], sizes = [8, 8], strides = [1, 1]} : vector<8x96xbf16> to vector<8x8xbf16>
    %652 = vector.extract_strided_slice %626 {offsets = [0, 48], sizes = [8, 8], strides = [1, 1]} : vector<8x96xbf16> to vector<8x8xbf16>
    %653 = vector.extract_strided_slice %626 {offsets = [0, 80], sizes = [8, 8], strides = [1, 1]} : vector<8x96xbf16> to vector<8x8xbf16>
    %cst_169 = arith.constant dense<0.000000e+00> : vector<8x8xf32>
    %654 = tpu.matmul %651, %652, %cst_169 {dimension_numbers = #tpu.dot_dimension_numbers<[1], [1], [0], [0], [0, 0, 1, 0], [], []>} : vector<8x8xbf16>, vector<8x8xbf16>, vector<8x8xf32> -> vector<8x8xf32>
    %655 = math.exp %654 : vector<8x8xf32>
    %cst_170 = arith.constant dense<0.000000e+00> : vector<8xf32>
    %656 = vector.multi_reduction <add>, %655, %cst_170 [1] : vector<8x8xf32> to vector<8xf32>
    %657 = vector.shape_cast %656 : vector<8xf32> to vector<8x1xf32>
    %658 = tpu.reciprocal %657 {approx = true} : vector<8x1xf32> -> vector<8x1xf32>
    %659 = vector.broadcast %658 : vector<8x1xf32> to vector<8x8xf32>
    %660 = arith.mulf %655, %659 : vector<8x8xf32>
    %661 = arith.truncf %660 : vector<8x8xf32> to vector<8x8xbf16>
    %cst_171 = arith.constant dense<0.000000e+00> : vector<8x8xf32>
    %662 = tpu.matmul %661, %653, %cst_171 {dimension_numbers = #tpu.dot_dimension_numbers<[1], [0], [0], [1], [0, 0, 1, 1], [], []>} : vector<8x8xbf16>, vector<8x8xbf16>, vector<8x8xf32> -> vector<8x8xf32>
    %663 = vector.extract_strided_slice %626 {offsets = [0, 24], sizes = [8, 8], strides = [1, 1]} : vector<8x96xbf16> to vector<8x8xbf16>
    %664 = vector.extract_strided_slice %626 {offsets = [0, 56], sizes = [8, 8], strides = [1, 1]} : vector<8x96xbf16> to vector<8x8xbf16>
    %665 = vector.extract_strided_slice %626 {offsets = [0, 88], sizes = [8, 8], strides = [1, 1]} : vector<8x96xbf16> to vector<8x8xbf16>
    %cst_172 = arith.constant dense<0.000000e+00> : vector<8x8xf32>
    %666 = tpu.matmul %663, %664, %cst_172 {dimension_numbers = #tpu.dot_dimension_numbers<[1], [1], [0], [0], [0, 0, 1, 0], [], []>} : vector<8x8xbf16>, vector<8x8xbf16>, vector<8x8xf32> -> vector<8x8xf32>
    %667 = math.exp %666 : vector<8x8xf32>
    %cst_173 = arith.constant dense<0.000000e+00> : vector<8xf32>
    %668 = vector.multi_reduction <add>, %667, %cst_173 [1] : vector<8x8xf32> to vector<8xf32>
    %669 = vector.shape_cast %668 : vector<8xf32> to vector<8x1xf32>
    %670 = tpu.reciprocal %669 {approx = true} : vector<8x1xf32> -> vector<8x1xf32>
    %671 = vector.broadcast %670 : vector<8x1xf32> to vector<8x8xf32>
    %672 = arith.mulf %667, %671 : vector<8x8xf32>
    %673 = arith.truncf %672 : vector<8x8xf32> to vector<8x8xbf16>
    %cst_174 = arith.constant dense<0.000000e+00> : vector<8x8xf32>
    %674 = tpu.matmul %673, %665, %cst_174 {dimension_numbers = #tpu.dot_dimension_numbers<[1], [0], [0], [1], [0, 0, 1, 1], [], []>} : vector<8x8xbf16>, vector<8x8xbf16>, vector<8x8xf32> -> vector<8x8xf32>
    %675 = tpu.concatenate %638, %650, %662, %674 in 1 : vector<8x8xf32>, vector<8x8xf32>, vector<8x8xf32>, vector<8x8xf32> -> vector<8x32xf32>
    %676 = arith.truncf %675 : vector<8x32xf32> to vector<8x32xbf16>
    %cst_175 = arith.constant dense<0.000000e+00> : vector<8x32xf32>
    %677 = tpu.matmul %676, %1, %cst_175 {dimension_numbers = #tpu.dot_dimension_numbers<[1], [0], [0], [1], [0, 0, 1, 1], [], []>} : vector<8x32xbf16>, vector<32x32xbf16>, vector<8x32xf32> -> vector<8x32xf32>
    %678 = arith.addf %677, %7 : vector<8x32xf32>
    %679 = math.tanh %678 : vector<8x32xf32>
    %cst_176 = arith.constant 0.333333343 : f32
    %680 = vector.broadcast %cst_176 : f32 to vector<8x32xf32>
    %681 = arith.mulf %680, %679 : vector<8x32xf32>
    %682 = arith.addf %502, %681 : vector<8x32xf32>
    %683 = arith.truncf %682 : vector<8x32xf32> to vector<8x32xbf16>
    %cst_177 = arith.constant dense<0.000000e+00> : vector<8x96xf32>
    %684 = tpu.matmul %683, %0, %cst_177 {dimension_numbers = #tpu.dot_dimension_numbers<[1], [0], [0], [1], [0, 0, 1, 1], [], []>} : vector<8x32xbf16>, vector<32x96xbf16>, vector<8x96xf32> -> vector<8x96xf32>
    %685 = arith.addf %684, %4 : vector<8x96xf32>
    %686 = arith.truncf %685 : vector<8x96xf32> to vector<8x96xbf16>
    %687 = vector.extract_strided_slice %686 {offsets = [0, 0], sizes = [8, 8], strides = [1, 1]} : vector<8x96xbf16> to vector<8x8xbf16>
    %688 = vector.extract_strided_slice %686 {offsets = [0, 32], sizes = [8, 8], strides = [1, 1]} : vector<8x96xbf16> to vector<8x8xbf16>
    %689 = vector.extract_strided_slice %686 {offsets = [0, 64], sizes = [8, 8], strides = [1, 1]} : vector<8x96xbf16> to vector<8x8xbf16>
    %cst_178 = arith.constant dense<0.000000e+00> : vector<8x8xf32>
    %690 = tpu.matmul %687, %688, %cst_178 {dimension_numbers = #tpu.dot_dimension_numbers<[1], [1], [0], [0], [0, 0, 1, 0], [], []>} : vector<8x8xbf16>, vector<8x8xbf16>, vector<8x8xf32> -> vector<8x8xf32>
    %691 = math.exp %690 : vector<8x8xf32>
    %cst_179 = arith.constant dense<0.000000e+00> : vector<8xf32>
    %692 = vector.multi_reduction <add>, %691, %cst_179 [1] : vector<8x8xf32> to vector<8xf32>
    %693 = vector.shape_cast %692 : vector<8xf32> to vector<8x1xf32>
    %694 = tpu.reciprocal %693 {approx = true} : vector<8x1xf32> -> vector<8x1xf32>
    %695 = vector.broadcast %694 : vector<8x1xf32> to vector<8x8xf32>
    %696 = arith.mulf %691, %695 : vector<8x8xf32>
    %697 = arith.truncf %696 : vector<8x8xf32> to vector<8x8xbf16>
    %cst_180 = arith.constant dense<0.000000e+00> : vector<8x8xf32>
    %698 = tpu.matmul %697, %689, %cst_180 {dimension_numbers = #tpu.dot_dimension_numbers<[1], [0], [0], [1], [0, 0, 1, 1], [], []>} : vector<8x8xbf16>, vector<8x8xbf16>, vector<8x8xf32> -> vector<8x8xf32>
    %699 = vector.extract_strided_slice %686 {offsets = [0, 8], sizes = [8, 8], strides = [1, 1]} : vector<8x96xbf16> to vector<8x8xbf16>
    %700 = vector.extract_strided_slice %686 {offsets = [0, 40], sizes = [8, 8], strides = [1, 1]} : vector<8x96xbf16> to vector<8x8xbf16>
    %701 = vector.extract_strided_slice %686 {offsets = [0, 72], sizes = [8, 8], strides = [1, 1]} : vector<8x96xbf16> to vector<8x8xbf16>
    %cst_181 = arith.constant dense<0.000000e+00> : vector<8x8xf32>
    %702 = tpu.matmul %699, %700, %cst_181 {dimension_numbers = #tpu.dot_dimension_numbers<[1], [1], [0], [0], [0, 0, 1, 0], [], []>} : vector<8x8xbf16>, vector<8x8xbf16>, vector<8x8xf32> -> vector<8x8xf32>
    %703 = math.exp %702 : vector<8x8xf32>
    %cst_182 = arith.constant dense<0.000000e+00> : vector<8xf32>
    %704 = vector.multi_reduction <add>, %703, %cst_182 [1] : vector<8x8xf32> to vector<8xf32>
    %705 = vector.shape_cast %704 : vector<8xf32> to vector<8x1xf32>
    %706 = tpu.reciprocal %705 {approx = true} : vector<8x1xf32> -> vector<8x1xf32>
    %707 = vector.broadcast %706 : vector<8x1xf32> to vector<8x8xf32>
    %708 = arith.mulf %703, %707 : vector<8x8xf32>
    %709 = arith.truncf %708 : vector<8x8xf32> to vector<8x8xbf16>
    %cst_183 = arith.constant dense<0.000000e+00> : vector<8x8xf32>
    %710 = tpu.matmul %709, %701, %cst_183 {dimension_numbers = #tpu.dot_dimension_numbers<[1], [0], [0], [1], [0, 0, 1, 1], [], []>} : vector<8x8xbf16>, vector<8x8xbf16>, vector<8x8xf32> -> vector<8x8xf32>
    %711 = vector.extract_strided_slice %686 {offsets = [0, 16], sizes = [8, 8], strides = [1, 1]} : vector<8x96xbf16> to vector<8x8xbf16>
    %712 = vector.extract_strided_slice %686 {offsets = [0, 48], sizes = [8, 8], strides = [1, 1]} : vector<8x96xbf16> to vector<8x8xbf16>
    %713 = vector.extract_strided_slice %686 {offsets = [0, 80], sizes = [8, 8], strides = [1, 1]} : vector<8x96xbf16> to vector<8x8xbf16>
    %cst_184 = arith.constant dense<0.000000e+00> : vector<8x8xf32>
    %714 = tpu.matmul %711, %712, %cst_184 {dimension_numbers = #tpu.dot_dimension_numbers<[1], [1], [0], [0], [0, 0, 1, 0], [], []>} : vector<8x8xbf16>, vector<8x8xbf16>, vector<8x8xf32> -> vector<8x8xf32>
    %715 = math.exp %714 : vector<8x8xf32>
    %cst_185 = arith.constant dense<0.000000e+00> : vector<8xf32>
    %716 = vector.multi_reduction <add>, %715, %cst_185 [1] : vector<8x8xf32> to vector<8xf32>
    %717 = vector.shape_cast %716 : vector<8xf32> to vector<8x1xf32>
    %718 = tpu.reciprocal %717 {approx = true} : vector<8x1xf32> -> vector<8x1xf32>
    %719 = vector.broadcast %718 : vector<8x1xf32> to vector<8x8xf32>
    %720 = arith.mulf %715, %719 : vector<8x8xf32>
    %721 = arith.truncf %720 : vector<8x8xf32> to vector<8x8xbf16>
    %cst_186 = arith.constant dense<0.000000e+00> : vector<8x8xf32>
    %722 = tpu.matmul %721, %713, %cst_186 {dimension_numbers = #tpu.dot_dimension_numbers<[1], [0], [0], [1], [0, 0, 1, 1], [], []>} : vector<8x8xbf16>, vector<8x8xbf16>, vector<8x8xf32> -> vector<8x8xf32>
    %723 = vector.extract_strided_slice %686 {offsets = [0, 24], sizes = [8, 8], strides = [1, 1]} : vector<8x96xbf16> to vector<8x8xbf16>
    %724 = vector.extract_strided_slice %686 {offsets = [0, 56], sizes = [8, 8], strides = [1, 1]} : vector<8x96xbf16> to vector<8x8xbf16>
    %725 = vector.extract_strided_slice %686 {offsets = [0, 88], sizes = [8, 8], strides = [1, 1]} : vector<8x96xbf16> to vector<8x8xbf16>
    %cst_187 = arith.constant dense<0.000000e+00> : vector<8x8xf32>
    %726 = tpu.matmul %723, %724, %cst_187 {dimension_numbers = #tpu.dot_dimension_numbers<[1], [1], [0], [0], [0, 0, 1, 0], [], []>} : vector<8x8xbf16>, vector<8x8xbf16>, vector<8x8xf32> -> vector<8x8xf32>
    %727 = math.exp %726 : vector<8x8xf32>
    %cst_188 = arith.constant dense<0.000000e+00> : vector<8xf32>
    %728 = vector.multi_reduction <add>, %727, %cst_188 [1] : vector<8x8xf32> to vector<8xf32>
    %729 = vector.shape_cast %728 : vector<8xf32> to vector<8x1xf32>
    %730 = tpu.reciprocal %729 {approx = true} : vector<8x1xf32> -> vector<8x1xf32>
    %731 = vector.broadcast %730 : vector<8x1xf32> to vector<8x8xf32>
    %732 = arith.mulf %727, %731 : vector<8x8xf32>
    %733 = arith.truncf %732 : vector<8x8xf32> to vector<8x8xbf16>
    %cst_189 = arith.constant dense<0.000000e+00> : vector<8x8xf32>
    %734 = tpu.matmul %733, %725, %cst_189 {dimension_numbers = #tpu.dot_dimension_numbers<[1], [0], [0], [1], [0, 0, 1, 1], [], []>} : vector<8x8xbf16>, vector<8x8xbf16>, vector<8x8xf32> -> vector<8x8xf32>
    %735 = tpu.concatenate %698, %710, %722, %734 in 1 : vector<8x8xf32>, vector<8x8xf32>, vector<8x8xf32>, vector<8x8xf32> -> vector<8x32xf32>
    %736 = arith.truncf %735 : vector<8x32xf32> to vector<8x32xbf16>
    %cst_190 = arith.constant dense<0.000000e+00> : vector<8x32xf32>
    %737 = tpu.matmul %736, %1, %cst_190 {dimension_numbers = #tpu.dot_dimension_numbers<[1], [0], [0], [1], [0, 0, 1, 1], [], []>} : vector<8x32xbf16>, vector<32x32xbf16>, vector<8x32xf32> -> vector<8x32xf32>
    %738 = arith.addf %737, %7 : vector<8x32xf32>
    %739 = math.tanh %738 : vector<8x32xf32>
    %cst_191 = arith.constant 2.000000e+00 : f32
    %740 = vector.broadcast %cst_191 : f32 to vector<8x32xf32>
    %741 = arith.mulf %740, %619 : vector<8x32xf32>
    %742 = arith.addf %559, %741 : vector<8x32xf32>
    %cst_192 = arith.constant 2.000000e+00 : f32
    %743 = vector.broadcast %cst_192 : f32 to vector<8x32xf32>
    %744 = arith.mulf %743, %679 : vector<8x32xf32>
    %745 = arith.addf %742, %744 : vector<8x32xf32>
    %746 = arith.addf %745, %739 : vector<8x32xf32>
    %cst_193 = arith.constant 0.055555556 : f32
    %747 = vector.broadcast %cst_193 : f32 to vector<8x32xf32>
    %748 = arith.mulf %747, %746 : vector<8x32xf32>
    %749 = arith.addf %502, %748 : vector<8x32xf32>
    %c0_194 = arith.constant 0 : index
    %c0_195 = arith.constant 0 : index
    %750 = vector.load %arg5[%c0_194, %c0_195] : memref<8x32xf32, #tpu.memory_space<vmem>>, vector<8x32xf32>
    tpu.vector_store %arg5[%c0_194, %c0_195], %749 {strides = array<i32>} : memref<8x32xf32, #tpu.memory_space<vmem>>, vector<8x32xf32>,
    return
  }
}

</mosaic_0001>

<llo_original>
// kernel: nightclub_ode_forward.1
$region0: #{nightclub_ode_forward.1}
  #allocation0 [shape = 'u32[]', space=smem, size = 0x4, offset = 0x4, fixed_abs, tag = 'smem constant byte address 0x4 - core index']
  #allocation1 [shape = 'u32[72,128]{1,0:T(1,128)}', space=vmem, size = 0x9000, scoped, tag = 'internal scratch']
  %s0 = inlined_call_operand.hbm [shape: f32[8,32], index: 0, kind: input, shape index: {}]
  %s1 = inlined_call_operand.hbm [shape: bf16[32,96], index: 1, kind: input, shape index: {}]
  %s2 = inlined_call_operand.vmem [shape: f32[1,96], index: 2, kind: input, shape index: {}]
  %s3 = inlined_call_operand.hbm [shape: bf16[32,32], index: 3, kind: input, shape index: {}]
  %s4 = inlined_call_operand.vmem [shape: f32[1,32], index: 4, kind: input, shape index: {}]
  %s5 = inlined_call_operand.hbm [shape: f32[8,32], index: 5, kind: output, shape index: {}]
  %s6 = sld [smem:[#allocation0]]
  $region42: #{nightclub_ode_forward.1} parent=0
    _
  %s8 = ssub.s32 1, %s6
  %s9 = scalar_select 0, %s8, %s6
  $region1: #{nightclub_ode_forward.1} parent=0
    #allocation2 [shape = 'u8[4096]{0}', space=vmem, size = 0x1000, scoped, tag = 'input window, operand 0, single buffered']
    #allocation3 [shape = 's32[1]{0}', space=sflag, size = 0x4, scoped, tag = 'scoped memory for nightclub_ode_forward.1']
    #allocation4 [shape = 's32[1]{0}', space=sflag, size = 0x4, scoped, tag = 'scoped memory for nightclub_ode_forward.1']
    #allocation5 [shape = 'u8[8192]{0}', space=vmem, size = 0x2000, scoped, tag = 'input window, operand 1, single buffered']
    #allocation6 [shape = 's32[1]{0}', space=sflag, size = 0x4, scoped, tag = 'scoped memory for nightclub_ode_forward.1']
    #allocation7 [shape = 'u8[8192]{0}', space=vmem, size = 0x2000, scoped, tag = 'input window, operand 3, single buffered']
    #allocation8 [shape = 'u8[4096]{0}', space=vmem, size = 0x1000, scoped, tag = 'output window, operand 0, single buffered']
    %10 = vsyncpa [#allocation3], 0
    %11 = vsyncpa [#allocation6], 0
    %12 = vsyncpa [#allocation4], 0
    // Predicated region
    $region2: #{nightclub_ode_forward.1} parent=1 // pred_check
      _
    $region3: #{nightclub_ode_forward.1} parent=1 // pred_check_branch
      %14 = sbr.rel (0) target = $region5
    $region4: #{nightclub_ode_forward.1} parent=1 // pred_region
      %16 = vsyncadd [#allocation3], 0
      %s18 = sshll.u32 %s0, 4
      %s19 = int_to_ptr.hbm [resolvable:$true] %s18
      %s20 = sshll.u32 [#allocation2], 4
      %s21 = int_to_ptr.vmem [resolvable:$true] %s20
      %23 = dma.hbm_to_vmem [thread:$0]  %s19, 128, %s21, [#allocation3]
    $region5: #{nightclub_ode_forward.1} parent=1 // pred_fallthru
      _
    // Predicated region
    $region6: #{nightclub_ode_forward.1} parent=1 // pred_check
      _
    $region7: #{nightclub_ode_forward.1} parent=1 // pred_check_branch
      %25 = sbr.rel (0) target = $region9
    $region8: #{nightclub_ode_forward.1} parent=1 // pred_region
      %27 = vsyncadd [#allocation6], 0
      %s28 = sshll.u32 %s1, 4
      %s29 = int_to_ptr.hbm [resolvable:$true] %s28
      %s30 = sshll.u32 [#allocation5], 4
      %s31 = int_to_ptr.vmem [resolvable:$true] %s30
      %36 = dma.hbm_to_vmem [thread:$0]  %s29, 256, %s31, [#allocation6], 64, 64, 4
    $region9: #{nightclub_ode_forward.1} parent=1 // pred_fallthru
      _
    // Predicated region
    $region10: #{nightclub_ode_forward.1} parent=1 // pred_check
      _
    $region11: #{nightclub_ode_forward.1} parent=1 // pred_check_branch
      %38 = sbr.rel (0) target = $region13
    $region12: #{nightclub_ode_forward.1} parent=1 // pred_region
      _
    $region13: #{nightclub_ode_forward.1} parent=1 // pred_fallthru
      _
    // Predicated region
    $region14: #{nightclub_ode_forward.1} parent=1 // pred_check
      _
    $region15: #{nightclub_ode_forward.1} parent=1 // pred_check_branch
      %40 = sbr.rel (0) target = $region17
    $region16: #{nightclub_ode_forward.1} parent=1 // pred_region
      %42 = vsyncadd [#allocation6], 0
      %s43 = sshll.u32 %s3, 4
      %s44 = int_to_ptr.hbm [resolvable:$true] %s43
      %s45 = sshll.u32 [#allocation7], 4
      %s46 = int_to_ptr.vmem [resolvable:$true] %s45
      %51 = dma.hbm_to_vmem [thread:$0]  %s44, 256, %s46, [#allocation6], 64, 64, 4
    $region17: #{nightclub_ode_forward.1} parent=1 // pred_fallthru
      _
    // Predicated region
    $region18: #{nightclub_ode_forward.1} parent=1 // pred_check
      _
    $region19: #{nightclub_ode_forward.1} parent=1 // pred_check_branch
      %53 = sbr.rel (0) target = $region21
    $region20: #{nightclub_ode_forward.1} parent=1 // pred_region
      _
    $region21: #{nightclub_ode_forward.1} parent=1 // pred_fallthru
      _
    // Predicated region
    $region22: #{nightclub_ode_forward.1} parent=1 // pred_check
      _
    $region23: #{nightclub_ode_forward.1} parent=1 // pred_check_branch
      %55 = sbr.rel (0) target = $region25
    $region24: #{nightclub_ode_forward.1} parent=1 // pred_region
      %57 = dma.done [#allocation3], 128
    $region25: #{nightclub_ode_forward.1} parent=1 // pred_fallthru
      _
    // Predicated region
    $region26: #{nightclub_ode_forward.1} parent=1 // pred_check
      _
    $region27: #{nightclub_ode_forward.1} parent=1 // pred_check_branch
      %59 = sbr.rel (0) target = $region29
    $region28: #{nightclub_ode_forward.1} parent=1 // pred_region
      %61 = dma.done [#allocation6], 256
    $region29: #{nightclub_ode_forward.1} parent=1 // pred_fallthru
      _
    // Predicated region
    $region30: #{nightclub_ode_forward.1} parent=1 // pred_check
      _
    $region31: #{nightclub_ode_forward.1} parent=1 // pred_check_branch
      %63 = sbr.rel (0) target = $region33
    $region32: #{nightclub_ode_forward.1} parent=1 // pred_region
      %65 = dma.done [#allocation6], 256
    $region33: #{nightclub_ode_forward.1} parent=1 // pred_fallthru
      _
    %v67 = vld [vmem:[#allocation5] sm:$0xf]
    %v68 = vld [vmem:[#allocation5 + $0x4] sm:$0xf]
    %v69 = vld [vmem:[#allocation5 + $0x8] sm:$0xf]
    %v70 = vld [vmem:[#allocation5 + $0xc] sm:$0xf]
    %v71 = vld [vmem:[#allocation7] sm:$0xf]
    %v72 = vld [vmem:[#allocation7 + $0x4] sm:$0xf]
    %v73 = vld [vmem:[#allocation7 + $0x8] sm:$0xf]
    %v74 = vld [vmem:[#allocation7 + $0xc] sm:$0xf]
    %v75 = vld [vmem:[%s2] sm:$0x1]
    %v77 = vperm.slane %v75, 0
    %v79 = vld [vmem:[%s4] sm:$0x1]
    %v81 = vperm.slane %v79, 0
    %v83 = vld [vmem:[#allocation2] sm:$0xff]
    %v84 = vpack.c.bf16 %v83, %v83
    %v89 = vunpack.c.l.b16 %v67
    %v90 = vunpack.c.l.b16 %v68
    %v91 = vunpack.c.l.b16 %v69
    %v92 = vunpack.c.l.b16 %v70
    %v93 = vpack.c.b16 %v90, %v89
    %v94 = vpack.c.b16 %v92, %v91
    %vm97 = vcmask 261120
    %v99 = vsel %vm97, %v84, 0
    %101 = vmatpush.bf16.msra.mxu0 0
    %102 = vmatpush.bf16.msra.mxu0 0
    %103 = vmatpush.bf16.msra.mxu0 0
    %104 = vmatpush.bf16.msra.mxu0 0
    %105 = vmatpush.bf16.msra.mxu0 0
    %106 = vmatpush.bf16.msra.mxu0 0
    %107 = vmatpush.bf16.msra.mxu0 %v94
    %108 = vmatpush.bf16.msra.mxu0 %v93
    %109 = vmatmul.bf16.gmra.mxu0 %v99
    %v110 = vpop.f32.mrf.mxu0
    %v111 = vadd.f32 %v77, %v110
    %v112 = vpop.f32.mrf.mxu0
    %113 = vdwg.mxu0
    %v114 = vpack.c.bf16 %v111, %v111
    %v116 = vunpack.c.l.b16 %v114
    %v117 = vpack.c.b16 %v116, %v116
    %118 = vrot.lane.b32.xlu0 %v117, 96
    %v119 = vpop.permute.xlu0 %118
    %vm120 = vcmask 64512
    %v122 = vsel %vm120, %v114, 0
    %v125 = vsel %vm120, %v119, 0
    %127 = vmatpush.bf16.xpose.msra.mxu0 0
    %128 = vmatpush.bf16.xpose.msra.mxu0 0
    %129 = vmatpush.bf16.xpose.msra.mxu0 0
    %130 = vmatpush.bf16.xpose.msra.mxu0 0
    %131 = vmatpush.bf16.xpose.msra.mxu0 0
    %132 = vmatpush.bf16.xpose.msra.mxu0 0
    %133 = vmatpush.bf16.xpose.msra.mxu0 0
    %134 = vmatpush.bf16.xpose.msra.mxu0 %v125
    %135 = vmatmul.bf16.gmra.mxu0 %v122
    %v136 = vpop.f32.mrf.mxu0
    %v137 = vadd.f32 0.0, %v136
    %v138 = vpop.f32.mrf.mxu0
    %139 = vdwg.mxu0
    %v140 = vmul.f32 %v137, 1.442695
    %v141 = vpow.pop %v140
    %v142 = vsel %vm120, %v141, 0.0
    %143 = vadd.xlane.f32.xlu0 %v142
    %v144 = vpop.xlane.xlu0 %143
    %v145 = vrcp.pop %v144
    %v146 = vmul.f32 %v141, %v145
    %v147 = vpack.c.bf16 %v146, %v146
    %148 = vrot.lane.b32.xlu0 %v117, 64
    %v149 = vpop.permute.xlu0 %148
    %v151 = vsel %vm120, %v147, 0
    %vm153 = vcmask 1043456
    %v155 = vsel %vm153, %v149, 0
    %157 = vmatpush.bf16.msra.mxu0 0
    %158 = vmatpush.bf16.msra.mxu0 0
    %159 = vmatpush.bf16.msra.mxu0 0
    %160 = vmatpush.bf16.msra.mxu0 0
    %161 = vmatpush.bf16.msra.mxu0 0
    %162 = vmatpush.bf16.msra.mxu0 0
    %163 = vmatpush.bf16.msra.mxu0 0
    %164 = vmatpush.bf16.msra.mxu0 %v155
    %165 = vmatmul.bf16.gmra.mxu0 %v151
    %v166 = vpop.f32.mrf.mxu0
    %v167 = vadd.f32 0.0, %v166
    %v168 = vpop.f32.mrf.mxu0
    %169 = vdwg.mxu0
    %170 = vrot.lane.b32.xlu0 %v117, 120
    %v171 = vpop.permute.xlu0 %170
    %172 = vrot.lane.b32.xlu0 %v117, 88
    %v173 = vpop.permute.xlu0 %172
    %v175 = vsel %vm120, %v171, 0
    %v178 = vsel %vm120, %v173, 0
    %180 = vmatpush.bf16.xpose.msra.mxu0 0
    %181 = vmatpush.bf16.xpose.msra.mxu0 0
    %182 = vmatpush.bf16.xpose.msra.mxu0 0
    %183 = vmatpush.bf16.xpose.msra.mxu0 0
    %184 = vmatpush.bf16.xpose.msra.mxu0 0
    %185 = vmatpush.bf16.xpose.msra.mxu0 0
    %186 = vmatpush.bf16.xpose.msra.mxu0 0
    %187 = vmatpush.bf16.xpose.msra.mxu0 %v178
    %188 = vmatmul.bf16.gmra.mxu0 %v175
    %v189 = vpop.f32.mrf.mxu0
    %v190 = vadd.f32 0.0, %v189
    %v191 = vpop.f32.mrf.mxu0
    %192 = vdwg.mxu0
    %v193 = vmul.f32 %v190, 1.442695
    %v194 = vpow.pop %v193
    %v195 = vsel %vm120, %v194, 0.0
    %196 = vadd.xlane.f32.xlu0 %v195
    %v197 = vpop.xlane.xlu0 %196
    %v198 = vrcp.pop %v197
    %v199 = vmul.f32 %v194, %v198
    %v200 = vpack.c.bf16 %v199, %v199
    %201 = vrot.lane.b32.xlu0 %v117, 56
    %v202 = vpop.permute.xlu0 %201
    %v204 = vsel %vm120, %v200, 0
    %v207 = vsel %vm153, %v202, 0
    %209 = vmatpush.bf16.msra.mxu0 0
    %210 = vmatpush.bf16.msra.mxu0 0
    %211 = vmatpush.bf16.msra.mxu0 0
    %212 = vmatpush.bf16.msra.mxu0 0
    %213 = vmatpush.bf16.msra.mxu0 0
    %214 = vmatpush.bf16.msra.mxu0 0
    %215 = vmatpush.bf16.msra.mxu0 0
    %216 = vmatpush.bf16.msra.mxu0 %v207
    %217 = vmatmul.bf16.gmra.mxu0 %v204
    %v218 = vpop.f32.mrf.mxu0
    %v219 = vadd.f32 0.0, %v218
    %v220 = vpop.f32.mrf.mxu0
    %221 = vdwg.mxu0
    %222 = vrot.lane.b32.xlu0 %v117, 112
    %v223 = vpop.permute.xlu0 %222
    %224 = vrot.lane.b32.xlu0 %v117, 80
    %v225 = vpop.permute.xlu0 %224
    %v227 = vsel %vm120, %v223, 0
    %v230 = vsel %vm120, %v225, 0
    %232 = vmatpush.bf16.xpose.msra.mxu0 0
    %233 = vmatpush.bf16.xpose.msra.mxu0 0
    %234 = vmatpush.bf16.xpose.msra.mxu0 0
    %235 = vmatpush.bf16.xpose.msra.mxu0 0
    %236 = vmatpush.bf16.xpose.msra.mxu0 0
    %237 = vmatpush.bf16.xpose.msra.mxu0 0
    %238 = vmatpush.bf16.xpose.msra.mxu0 0
    %239 = vmatpush.bf16.xpose.msra.mxu0 %v230
    %240 = vmatmul.bf16.gmra.mxu0 %v227
    %v241 = vpop.f32.mrf.mxu0
    %v242 = vadd.f32 0.0, %v241
    %v243 = vpop.f32.mrf.mxu0
    %244 = vdwg.mxu0
    %v245 = vmul.f32 %v242, 1.442695
    %v246 = vpow.pop %v245
    %v247 = vsel %vm120, %v246, 0.0
    %248 = vadd.xlane.f32.xlu0 %v247
    %v249 = vpop.xlane.xlu0 %248
    %v250 = vrcp.pop %v249
    %v251 = vmul.f32 %v246, %v250
    %v252 = vpack.c.bf16 %v251, %v251
    %253 = vrot.lane.b32.xlu0 %v117, 48
    %v254 = vpop.permute.xlu0 %253
    %v256 = vsel %vm120, %v252, 0
    %v259 = vsel %vm153, %v254, 0
    %261 = vmatpush.bf16.msra.mxu0 0
    %262 = vmatpush.bf16.msra.mxu0 0
    %263 = vmatpush.bf16.msra.mxu0 0
    %264 = vmatpush.bf16.msra.mxu0 0
    %265 = vmatpush.bf16.msra.mxu0 0
    %266 = vmatpush.bf16.msra.mxu0 0
    %267 = vmatpush.bf16.msra.mxu0 0
    %268 = vmatpush.bf16.msra.mxu0 %v259
    %269 = vmatmul.bf16.gmra.mxu0 %v256
    %v270 = vpop.f32.mrf.mxu0
    %v271 = vadd.f32 0.0, %v270
    %v272 = vpop.f32.mrf.mxu0
    %273 = vdwg.mxu0
    %274 = vrot.lane.b32.xlu0 %v117, 104
    %v275 = vpop.permute.xlu0 %274
    %276 = vrot.lane.b32.xlu0 %v117, 72
    %v277 = vpop.permute.xlu0 %276
    %v279 = vsel %vm120, %v275, 0
    %v282 = vsel %vm120, %v277, 0
    %284 = vmatpush.bf16.xpose.msra.mxu0 0
    %285 = vmatpush.bf16.xpose.msra.mxu0 0
    %286 = vmatpush.bf16.xpose.msra.mxu0 0
    %287 = vmatpush.bf16.xpose.msra.mxu0 0
    %288 = vmatpush.bf16.xpose.msra.mxu0 0
    %289 = vmatpush.bf16.xpose.msra.mxu0 0
    %290 = vmatpush.bf16.xpose.msra.mxu0 0
    %291 = vmatpush.bf16.xpose.msra.mxu0 %v282
    %292 = vmatmul.bf16.gmra.mxu0 %v279
    %v293 = vpop.f32.mrf.mxu0
    %v294 = vadd.f32 0.0, %v293
    %v295 = vpop.f32.mrf.mxu0
    %296 = vdwg.mxu0
    %v297 = vmul.f32 %v294, 1.442695
    %v298 = vpow.pop %v297
    %v299 = vsel %vm120, %v298, 0.0
    %300 = vadd.xlane.f32.xlu0 %v299
    %v301 = vpop.xlane.xlu0 %300
    %v302 = vrcp.pop %v301
    %v303 = vmul.f32 %v298, %v302
    %v304 = vpack.c.bf16 %v303, %v303
    %305 = vrot.lane.b32.xlu0 %v117, 40
    %v306 = vpop.permute.xlu0 %305
    %v308 = vsel %vm120, %v304, 0
    %v311 = vsel %vm153, %v306, 0
    %313 = vmatpush.bf16.msra.mxu0 0
    %314 = vmatpush.bf16.msra.mxu0 0
    %315 = vmatpush.bf16.msra.mxu0 0
    %316 = vmatpush.bf16.msra.mxu0 0
    %317 = vmatpush.bf16.msra.mxu0 0
    %318 = vmatpush.bf16.msra.mxu0 0
    %319 = vmatpush.bf16.msra.mxu0 0
    %320 = vmatpush.bf16.msra.mxu0 %v311
    %321 = vmatmul.bf16.gmra.mxu0 %v308
    %v322 = vpop.f32.mrf.mxu0
    %v323 = vadd.f32 0.0, %v322
    %v324 = vpop.f32.mrf.mxu0
    %325 = vdwg.mxu0
    %327 = vrot.lane.b32.xlu0 %v219, 8
    %v328 = vpop.permute.xlu0 %327
    %331 = vrot.lane.b32.xlu0 %v271, 16
    %v332 = vpop.permute.xlu0 %331
    %335 = vrot.lane.b32.xlu0 %v323, 24
    %v336 = vpop.permute.xlu0 %335
    %v338 = vsel %vm120, %v167, %v328
    %vm339 = vcmask 130048
    %v340 = vsel %vm339, %v338, %v332
    %vm341 = vcmask 195584
    %v342 = vsel %vm341, %v340, %v336
    %v343 = vpack.c.bf16 %v342, %v342
    %v348 = vunpack.c.l.b16 %v71
    %v349 = vunpack.c.l.b16 %v72
    %v350 = vunpack.c.l.b16 %v73
    %v351 = vunpack.c.l.b16 %v74
    %v352 = vpack.c.b16 %v349, %v348
    %v353 = vpack.c.b16 %v351, %v350
    %v357 = vsel %vm97, %v343, 0
    %359 = vmatpush.bf16.msra.mxu0 0
    %360 = vmatpush.bf16.msra.mxu0 0
    %361 = vmatpush.bf16.msra.mxu0 0
    %362 = vmatpush.bf16.msra.mxu0 0
    %363 = vmatpush.bf16.msra.mxu0 0
    %364 = vmatpush.bf16.msra.mxu0 0
    %365 = vmatpush.bf16.msra.mxu0 %v353
    %366 = vmatpush.bf16.msra.mxu0 %v352
    %367 = vmatmul.bf16.gmra.mxu0 %v357
    %v368 = vpop.f32.mrf.mxu0
    %v369 = vadd.f32 %v81, %v368
    %v370 = vpop.f32.mrf.mxu0
    %371 = vdwg.mxu0
    %v372 = vtanh.pop %v369
    %v373 = vmul.f32 %v372, 0.16666667
    %v374 = vadd.f32 %v83, %v373
    %v375 = vpack.c.bf16 %v374, %v374
    %v377 = vsel %vm97, %v375, 0
    %379 = vmatpush.bf16.msra.mxu0 0
    %380 = vmatpush.bf16.msra.mxu0 0
    %381 = vmatpush.bf16.msra.mxu0 0
    %382 = vmatpush.bf16.msra.mxu0 0
    %383 = vmatpush.bf16.msra.mxu0 0
    %384 = vmatpush.bf16.msra.mxu0 0
    %385 = vmatpush.bf16.msra.mxu0 %v94
    %386 = vmatpush.bf16.msra.mxu0 %v93
    %387 = vmatmul.bf16.gmra.mxu0 %v377
    %v388 = vpop.f32.mrf.mxu0
    %v389 = vadd.f32 %v77, %v388
    %v390 = vpop.f32.mrf.mxu0
    %391 = vdwg.mxu0
    %v392 = vpack.c.bf16 %v389, %v389
    %v394 = vunpack.c.l.b16 %v392
    %v395 = vpack.c.b16 %v394, %v394
    %396 = vrot.lane.b32.xlu0 %v395, 96
    %v397 = vpop.permute.xlu0 %396
    %v399 = vsel %vm120, %v392, 0
    %v402 = vsel %vm120, %v397, 0
    %404 = vmatpush.bf16.xpose.msra.mxu0 0
    %405 = vmatpush.bf16.xpose.msra.mxu0 0
    %406 = vmatpush.bf16.xpose.msra.mxu0 0
    %407 = vmatpush.bf16.xpose.msra.mxu0 0
    %408 = vmatpush.bf16.xpose.msra.mxu0 0
    %409 = vmatpush.bf16.xpose.msra.mxu0 0
    %410 = vmatpush.bf16.xpose.msra.mxu0 0
    %411 = vmatpush.bf16.xpose.msra.mxu0 %v402
    %412 = vmatmul.bf16.gmra.mxu0 %v399
    %v413 = vpop.f32.mrf.mxu0
    %v414 = vadd.f32 0.0, %v413
    %v415 = vpop.f32.mrf.mxu0
    %416 = vdwg.mxu0
    %v417 = vmul.f32 %v414, 1.442695
    %v418 = vpow.pop %v417
    %v419 = vsel %vm120, %v418, 0.0
    %420 = vadd.xlane.f32.xlu0 %v419
    %v421 = vpop.xlane.xlu0 %420
    %v422 = vrcp.pop %v421
    %v423 = vmul.f32 %v418, %v422
    %v424 = vpack.c.bf16 %v423, %v423
    %425 = vrot.lane.b32.xlu0 %v395, 64
    %v426 = vpop.permute.xlu0 %425
    %v428 = vsel %vm120, %v424, 0
    %v431 = vsel %vm153, %v426, 0
    %433 = vmatpush.bf16.msra.mxu0 0
    %434 = vmatpush.bf16.msra.mxu0 0
    %435 = vmatpush.bf16.msra.mxu0 0
    %436 = vmatpush.bf16.msra.mxu0 0
    %437 = vmatpush.bf16.msra.mxu0 0
    %438 = vmatpush.bf16.msra.mxu0 0
    %439 = vmatpush.bf16.msra.mxu0 0
    %440 = vmatpush.bf16.msra.mxu0 %v431
    %441 = vmatmul.bf16.gmra.mxu0 %v428
    %v442 = vpop.f32.mrf.mxu0
    %v443 = vadd.f32 0.0, %v442
    %v444 = vpop.f32.mrf.mxu0
    %445 = vdwg.mxu0
    %446 = vrot.lane.b32.xlu0 %v395, 120
    %v447 = vpop.permute.xlu0 %446
    %448 = vrot.lane.b32.xlu0 %v395, 88
    %v449 = vpop.permute.xlu0 %448
    %v451 = vsel %vm120, %v447, 0
    %v454 = vsel %vm120, %v449, 0
    %456 = vmatpush.bf16.xpose.msra.mxu0 0
    %457 = vmatpush.bf16.xpose.msra.mxu0 0
    %458 = vmatpush.bf16.xpose.msra.mxu0 0
    %459 = vmatpush.bf16.xpose.msra.mxu0 0
    %460 = vmatpush.bf16.xpose.msra.mxu0 0
    %461 = vmatpush.bf16.xpose.msra.mxu0 0
    %462 = vmatpush.bf16.xpose.msra.mxu0 0
    %463 = vmatpush.bf16.xpose.msra.mxu0 %v454
    %464 = vmatmul.bf16.gmra.mxu0 %v451
    %v465 = vpop.f32.mrf.mxu0
    %v466 = vadd.f32 0.0, %v465
    %v467 = vpop.f32.mrf.mxu0
    %468 = vdwg.mxu0
    %v469 = vmul.f32 %v466, 1.442695
    %v470 = vpow.pop %v469
    %v471 = vsel %vm120, %v470, 0.0
    %472 = vadd.xlane.f32.xlu0 %v471
    %v473 = vpop.xlane.xlu0 %472
    %v474 = vrcp.pop %v473
    %v475 = vmul.f32 %v470, %v474
    %v476 = vpack.c.bf16 %v475, %v475
    %477 = vrot.lane.b32.xlu0 %v395, 56
    %v478 = vpop.permute.xlu0 %477
    %v480 = vsel %vm120, %v476, 0
    %v483 = vsel %vm153, %v478, 0
    %485 = vmatpush.bf16.msra.mxu0 0
    %486 = vmatpush.bf16.msra.mxu0 0
    %487 = vmatpush.bf16.msra.mxu0 0
    %488 = vmatpush.bf16.msra.mxu0 0
    %489 = vmatpush.bf16.msra.mxu0 0
    %490 = vmatpush.bf16.msra.mxu0 0
    %491 = vmatpush.bf16.msra.mxu0 0
    %492 = vmatpush.bf16.msra.mxu0 %v483
    %493 = vmatmul.bf16.gmra.mxu0 %v480
    %v494 = vpop.f32.mrf.mxu0
    %v495 = vadd.f32 0.0, %v494
    %v496 = vpop.f32.mrf.mxu0
    %497 = vdwg.mxu0
    %498 = vrot.lane.b32.xlu0 %v395, 112
    %v499 = vpop.permute.xlu0 %498
    %500 = vrot.lane.b32.xlu0 %v395, 80
    %v501 = vpop.permute.xlu0 %500
    %v503 = vsel %vm120, %v499, 0
    %v506 = vsel %vm120, %v501, 0
    %508 = vmatpush.bf16.xpose.msra.mxu0 0
    %509 = vmatpush.bf16.xpose.msra.mxu0 0
    %510 = vmatpush.bf16.xpose.msra.mxu0 0
    %511 = vmatpush.bf16.xpose.msra.mxu0 0
    %512 = vmatpush.bf16.xpose.msra.mxu0 0
    %513 = vmatpush.bf16.xpose.msra.mxu0 0
    %514 = vmatpush.bf16.xpose.msra.mxu0 0
    %515 = vmatpush.bf16.xpose.msra.mxu0 %v506
    %516 = vmatmul.bf16.gmra.mxu0 %v503
    %v517 = vpop.f32.mrf.mxu0
    %v518 = vadd.f32 0.0, %v517
    %v519 = vpop.f32.mrf.mxu0
    %520 = vdwg.mxu0
    %v521 = vmul.f32 %v518, 1.442695
    %v522 = vpow.pop %v521
    %v523 = vsel %vm120, %v522, 0.0
    %524 = vadd.xlane.f32.xlu0 %v523
    %v525 = vpop.xlane.xlu0 %524
    %v526 = vrcp.pop %v525
    %v527 = vmul.f32 %v522, %v526
    %v528 = vpack.c.bf16 %v527, %v527
    %529 = vrot.lane.b32.xlu0 %v395, 48
    %v530 = vpop.permute.xlu0 %529
    %v532 = vsel %vm120, %v528, 0
    %v535 = vsel %vm153, %v530, 0
    %537 = vmatpush.bf16.msra.mxu0 0
    %538 = vmatpush.bf16.msra.mxu0 0
    %539 = vmatpush.bf16.msra.mxu0 0
    %540 = vmatpush.bf16.msra.mxu0 0
    %541 = vmatpush.bf16.msra.mxu0 0
    %542 = vmatpush.bf16.msra.mxu0 0
    %543 = vmatpush.bf16.msra.mxu0 0
    %544 = vmatpush.bf16.msra.mxu0 %v535
    %545 = vmatmul.bf16.gmra.mxu0 %v532
    %v546 = vpop.f32.mrf.mxu0
    %v547 = vadd.f32 0.0, %v546
    %v548 = vpop.f32.mrf.mxu0
    %549 = vdwg.mxu0
    %550 = vrot.lane.b32.xlu0 %v395, 104
    %v551 = vpop.permute.xlu0 %550
    %552 = vrot.lane.b32.xlu0 %v395, 72
    %v553 = vpop.permute.xlu0 %552
    %v555 = vsel %vm120, %v551, 0
    %v558 = vsel %vm120, %v553, 0
    %560 = vmatpush.bf16.xpose.msra.mxu0 0
    %561 = vmatpush.bf16.xpose.msra.mxu0 0
    %562 = vmatpush.bf16.xpose.msra.mxu0 0
    %563 = vmatpush.bf16.xpose.msra.mxu0 0
    %564 = vmatpush.bf16.xpose.msra.mxu0 0
    %565 = vmatpush.bf16.xpose.msra.mxu0 0
    %566 = vmatpush.bf16.xpose.msra.mxu0 0
    %567 = vmatpush.bf16.xpose.msra.mxu0 %v558
    %568 = vmatmul.bf16.gmra.mxu0 %v555
    %v569 = vpop.f32.mrf.mxu0
    %v570 = vadd.f32 0.0, %v569
    %v571 = vpop.f32.mrf.mxu0
    %572 = vdwg.mxu0
    %v573 = vmul.f32 %v570, 1.442695
    %v574 = vpow.pop %v573
    %v575 = vsel %vm120, %v574, 0.0
    %576 = vadd.xlane.f32.xlu0 %v575
    %v577 = vpop.xlane.xlu0 %576
    %v578 = vrcp.pop %v577
    %v579 = vmul.f32 %v574, %v578
    %v580 = vpack.c.bf16 %v579, %v579
    %581 = vrot.lane.b32.xlu0 %v395, 40
    %v582 = vpop.permute.xlu0 %581
    %v584 = vsel %vm120, %v580, 0
    %v587 = vsel %vm153, %v582, 0
    %589 = vmatpush.bf16.msra.mxu0 0
    %590 = vmatpush.bf16.msra.mxu0 0
    %591 = vmatpush.bf16.msra.mxu0 0
    %592 = vmatpush.bf16.msra.mxu0 0
    %593 = vmatpush.bf16.msra.mxu0 0
    %594 = vmatpush.bf16.msra.mxu0 0
    %595 = vmatpush.bf16.msra.mxu0 0
    %596 = vmatpush.bf16.msra.mxu0 %v587
    %597 = vmatmul.bf16.gmra.mxu0 %v584
    %v598 = vpop.f32.mrf.mxu0
    %v599 = vadd.f32 0.0, %v598
    %v600 = vpop.f32.mrf.mxu0
    %601 = vdwg.mxu0
    %603 = vrot.lane.b32.xlu0 %v495, 8
    %v604 = vpop.permute.xlu0 %603
    %607 = vrot.lane.b32.xlu0 %v547, 16
    %v608 = vpop.permute.xlu0 %607
    %611 = vrot.lane.b32.xlu0 %v599, 24
    %v612 = vpop.permute.xlu0 %611
    %v614 = vsel %vm120, %v443, %v604
    %v615 = vsel %vm339, %v614, %v608
    %v616 = vsel %vm341, %v615, %v612
    %v617 = vpack.c.bf16 %v616, %v616
    %v619 = vsel %vm97, %v617, 0
    %621 = vmatpush.bf16.msra.mxu0 0
    %622 = vmatpush.bf16.msra.mxu0 0
    %623 = vmatpush.bf16.msra.mxu0 0
    %624 = vmatpush.bf16.msra.mxu0 0
    %625 = vmatpush.bf16.msra.mxu0 0
    %626 = vmatpush.bf16.msra.mxu0 0
    %627 = vmatpush.bf16.msra.mxu0 %v353
    %628 = vmatpush.bf16.msra.mxu0 %v352
    %629 = vmatmul.bf16.gmra.mxu0 %v619
    %v630 = vpop.f32.mrf.mxu0
    %v631 = vadd.f32 %v81, %v630
    %v632 = vpop.f32.mrf.mxu0
    %633 = vdwg.mxu0
    %v634 = vtanh.pop %v631
    %v635 = vmul.f32 %v634, 0.16666667
    %v636 = vadd.f32 %v83, %v635
    %v637 = vpack.c.bf16 %v636, %v636
    %v639 = vsel %vm97, %v637, 0
    %641 = vmatpush.bf16.msra.mxu0 0
    %642 = vmatpush.bf16.msra.mxu0 0
    %643 = vmatpush.bf16.msra.mxu0 0
    %644 = vmatpush.bf16.msra.mxu0 0
    %645 = vmatpush.bf16.msra.mxu0 0
    %646 = vmatpush.bf16.msra.mxu0 0
    %647 = vmatpush.bf16.msra.mxu0 %v94
    %648 = vmatpush.bf16.msra.mxu0 %v93
    %649 = vmatmul.bf16.gmra.mxu0 %v639
    %v650 = vpop.f32.mrf.mxu0
    %v651 = vadd.f32 %v77, %v650
    %v652 = vpop.f32.mrf.mxu0
    %653 = vdwg.mxu0
    %v654 = vpack.c.bf16 %v651, %v651
    %v656 = vunpack.c.l.b16 %v654
    %v657 = vpack.c.b16 %v656, %v656
    %658 = vrot.lane.b32.xlu0 %v657, 96
    %v659 = vpop.permute.xlu0 %658
    %v661 = vsel %vm120, %v654, 0
    %v664 = vsel %vm120, %v659, 0
    %666 = vmatpush.bf16.xpose.msra.mxu0 0
    %667 = vmatpush.bf16.xpose.msra.mxu0 0
    %668 = vmatpush.bf16.xpose.msra.mxu0 0
    %669 = vmatpush.bf16.xpose.msra.mxu0 0
    %670 = vmatpush.bf16.xpose.msra.mxu0 0
    %671 = vmatpush.bf16.xpose.msra.mxu0 0
    %672 = vmatpush.bf16.xpose.msra.mxu0 0
    %673 = vmatpush.bf16.xpose.msra.mxu0 %v664
    %674 = vmatmul.bf16.gmra.mxu0 %v661
    %v675 = vpop.f32.mrf.mxu0
    %v676 = vadd.f32 0.0, %v675
    %v677 = vpop.f32.mrf.mxu0
    %678 = vdwg.mxu0
    %v679 = vmul.f32 %v676, 1.442695
    %v680 = vpow.pop %v679
    %v681 = vsel %vm120, %v680, 0.0
    %682 = vadd.xlane.f32.xlu0 %v681
    %v683 = vpop.xlane.xlu0 %682
    %v684 = vrcp.pop %v683
    %v685 = vmul.f32 %v680, %v684
    %v686 = vpack.c.bf16 %v685, %v685
    %687 = vrot.lane.b32.xlu0 %v657, 64
    %v688 = vpop.permute.xlu0 %687
    %v690 = vsel %vm120, %v686, 0
    %v693 = vsel %vm153, %v688, 0
    %695 = vmatpush.bf16.msra.mxu0 0
    %696 = vmatpush.bf16.msra.mxu0 0
    %697 = vmatpush.bf16.msra.mxu0 0
    %698 = vmatpush.bf16.msra.mxu0 0
    %699 = vmatpush.bf16.msra.mxu0 0
    %700 = vmatpush.bf16.msra.mxu0 0
    %701 = vmatpush.bf16.msra.mxu0 0
    %702 = vmatpush.bf16.msra.mxu0 %v693
    %703 = vmatmul.bf16.gmra.mxu0 %v690
    %v704 = vpop.f32.mrf.mxu0
    %v705 = vadd.f32 0.0, %v704
    %v706 = vpop.f32.mrf.mxu0
    %707 = vdwg.mxu0
    %708 = vrot.lane.b32.xlu0 %v657, 120
    %v709 = vpop.permute.xlu0 %708
    %710 = vrot.lane.b32.xlu0 %v657, 88
    %v711 = vpop.permute.xlu0 %710
    %v713 = vsel %vm120, %v709, 0
    %v716 = vsel %vm120, %v711, 0
    %718 = vmatpush.bf16.xpose.msra.mxu0 0
    %719 = vmatpush.bf16.xpose.msra.mxu0 0
    %720 = vmatpush.bf16.xpose.msra.mxu0 0
    %721 = vmatpush.bf16.xpose.msra.mxu0 0
    %722 = vmatpush.bf16.xpose.msra.mxu0 0
    %723 = vmatpush.bf16.xpose.msra.mxu0 0
    %724 = vmatpush.bf16.xpose.msra.mxu0 0
    %725 = vmatpush.bf16.xpose.msra.mxu0 %v716
    %726 = vmatmul.bf16.gmra.mxu0 %v713
    %v727 = vpop.f32.mrf.mxu0
    %v728 = vadd.f32 0.0, %v727
    %v729 = vpop.f32.mrf.mxu0
    %730 = vdwg.mxu0
    %v731 = vmul.f32 %v728, 1.442695
    %v732 = vpow.pop %v731
    %v733 = vsel %vm120, %v732, 0.0
    %734 = vadd.xlane.f32.xlu0 %v733
    %v735 = vpop.xlane.xlu0 %734
    %v736 = vrcp.pop %v735
    %v737 = vmul.f32 %v732, %v736
    %v738 = vpack.c.bf16 %v737, %v737
    %739 = vrot.lane.b32.xlu0 %v657, 56
    %v740 = vpop.permute.xlu0 %739
    %v742 = vsel %vm120, %v738, 0
    %v745 = vsel %vm153, %v740, 0
    %747 = vmatpush.bf16.msra.mxu0 0
    %748 = vmatpush.bf16.msra.mxu0 0
    %749 = vmatpush.bf16.msra.mxu0 0
    %750 = vmatpush.bf16.msra.mxu0 0
    %751 = vmatpush.bf16.msra.mxu0 0
    %752 = vmatpush.bf16.msra.mxu0 0
    %753 = vmatpush.bf16.msra.mxu0 0
    %754 = vmatpush.bf16.msra.mxu0 %v745
    %755 = vmatmul.bf16.gmra.mxu0 %v742
    %v756 = vpop.f32.mrf.mxu0
    %v757 = vadd.f32 0.0, %v756
    %v758 = vpop.f32.mrf.mxu0
    %759 = vdwg.mxu0
    %760 = vrot.lane.b32.xlu0 %v657, 112
    %v761 = vpop.permute.xlu0 %760
    %762 = vrot.lane.b32.xlu0 %v657, 80
    %v763 = vpop.permute.xlu0 %762
    %v765 = vsel %vm120, %v761, 0
    %v768 = vsel %vm120, %v763, 0
    %770 = vmatpush.bf16.xpose.msra.mxu0 0
    %771 = vmatpush.bf16.xpose.msra.mxu0 0
    %772 = vmatpush.bf16.xpose.msra.mxu0 0
    %773 = vmatpush.bf16.xpose.msra.mxu0 0
    %774 = vmatpush.bf16.xpose.msra.mxu0 0
    %775 = vmatpush.bf16.xpose.msra.mxu0 0
    %776 = vmatpush.bf16.xpose.msra.mxu0 0
    %777 = vmatpush.bf16.xpose.msra.mxu0 %v768
    %778 = vmatmul.bf16.gmra.mxu0 %v765
    %v779 = vpop.f32.mrf.mxu0
    %v780 = vadd.f32 0.0, %v779
    %v781 = vpop.f32.mrf.mxu0
    %782 = vdwg.mxu0
    %v783 = vmul.f32 %v780, 1.442695
    %v784 = vpow.pop %v783
    %v785 = vsel %vm120, %v784, 0.0
    %786 = vadd.xlane.f32.xlu0 %v785
    %v787 = vpop.xlane.xlu0 %786
    %v788 = vrcp.pop %v787
    %v789 = vmul.f32 %v784, %v788
    %v790 = vpack.c.bf16 %v789, %v789
    %791 = vrot.lane.b32.xlu0 %v657, 48
    %v792 = vpop.permute.xlu0 %791
    %v794 = vsel %vm120, %v790, 0
    %v797 = vsel %vm153, %v792, 0
    %799 = vmatpush.bf16.msra.mxu0 0
    %800 = vmatpush.bf16.msra.mxu0 0
    %801 = vmatpush.bf16.msra.mxu0 0
    %802 = vmatpush.bf16.msra.mxu0 0
    %803 = vmatpush.bf16.msra.mxu0 0
    %804 = vmatpush.bf16.msra.mxu0 0
    %805 = vmatpush.bf16.msra.mxu0 0
    %806 = vmatpush.bf16.msra.mxu0 %v797
    %807 = vmatmul.bf16.gmra.mxu0 %v794
    %v808 = vpop.f32.mrf.mxu0
    %v809 = vadd.f32 0.0, %v808
    %v810 = vpop.f32.mrf.mxu0
    %811 = vdwg.mxu0
    %812 = vrot.lane.b32.xlu0 %v657, 104
    %v813 = vpop.permute.xlu0 %812
    %814 = vrot.lane.b32.xlu0 %v657, 72
    %v815 = vpop.permute.xlu0 %814
    %v817 = vsel %vm120, %v813, 0
    %v820 = vsel %vm120, %v815, 0
    %822 = vmatpush.bf16.xpose.msra.mxu0 0
    %823 = vmatpush.bf16.xpose.msra.mxu0 0
    %824 = vmatpush.bf16.xpose.msra.mxu0 0
    %825 = vmatpush.bf16.xpose.msra.mxu0 0
    %826 = vmatpush.bf16.xpose.msra.mxu0 0
    %827 = vmatpush.bf16.xpose.msra.mxu0 0
    %828 = vmatpush.bf16.xpose.msra.mxu0 0
    %829 = vmatpush.bf16.xpose.msra.mxu0 %v820
    %830 = vmatmul.bf16.gmra.mxu0 %v817
    %v831 = vpop.f32.mrf.mxu0
    %v832 = vadd.f32 0.0, %v831
    %v833 = vpop.f32.mrf.mxu0
    %834 = vdwg.mxu0
    %v835 = vmul.f32 %v832, 1.442695
    %v836 = vpow.pop %v835
    %v837 = vsel %vm120, %v836, 0.0
    %838 = vadd.xlane.f32.xlu0 %v837
    %v839 = vpop.xlane.xlu0 %838
    %v840 = vrcp.pop %v839
    %v841 = vmul.f32 %v836, %v840
    %v842 = vpack.c.bf16 %v841, %v841
    %843 = vrot.lane.b32.xlu0 %v657, 40
    %v844 = vpop.permute.xlu0 %843
    %v846 = vsel %vm120, %v842, 0
    %v849 = vsel %vm153, %v844, 0
    %851 = vmatpush.bf16.msra.mxu0 0
    %852 = vmatpush.bf16.msra.mxu0 0
    %853 = vmatpush.bf16.msra.mxu0 0
    %854 = vmatpush.bf16.msra.mxu0 0
    %855 = vmatpush.bf16.msra.mxu0 0
    %856 = vmatpush.bf16.msra.mxu0 0
    %857 = vmatpush.bf16.msra.mxu0 0
    %858 = vmatpush.bf16.msra.mxu0 %v849
    %859 = vmatmul.bf16.gmra.mxu0 %v846
    %v860 = vpop.f32.mrf.mxu0
    %v861 = vadd.f32 0.0, %v860
    %v862 = vpop.f32.mrf.mxu0
    %863 = vdwg.mxu0
    %865 = vrot.lane.b32.xlu0 %v757, 8
    %v866 = vpop.permute.xlu0 %865
    %869 = vrot.lane.b32.xlu0 %v809, 16
    %v870 = vpop.permute.xlu0 %869
    %873 = vrot.lane.b32.xlu0 %v861, 24
    %v874 = vpop.permute.xlu0 %873
    %v876 = vsel %vm120, %v705, %v866
    %v877 = vsel %vm339, %v876, %v870
    %v878 = vsel %vm341, %v877, %v874
    %v879 = vpack.c.bf16 %v878, %v878
    %v881 = vsel %vm97, %v879, 0
    %883 = vmatpush.bf16.msra.mxu0 0
    %884 = vmatpush.bf16.msra.mxu0 0
    %885 = vmatpush.bf16.msra.mxu0 0
    %886 = vmatpush.bf16.msra.mxu0 0
    %887 = vmatpush.bf16.msra.mxu0 0
    %888 = vmatpush.bf16.msra.mxu0 0
    %889 = vmatpush.bf16.msra.mxu0 %v353
    %890 = vmatpush.bf16.msra.mxu0 %v352
    %891 = vmatmul.bf16.gmra.mxu0 %v881
    %v892 = vpop.f32.mrf.mxu0
    %v893 = vadd.f32 %v81, %v892
    %v894 = vpop.f32.mrf.mxu0
    %895 = vdwg.mxu0
    %v896 = vtanh.pop %v893
    %v897 = vmul.f32 %v896, 0.33333334
    %v898 = vadd.f32 %v83, %v897
    %v899 = vpack.c.bf16 %v898, %v898
    %v901 = vsel %vm97, %v899, 0
    %903 = vmatpush.bf16.msra.mxu0 0
    %904 = vmatpush.bf16.msra.mxu0 0
    %905 = vmatpush.bf16.msra.mxu0 0
    %906 = vmatpush.bf16.msra.mxu0 0
    %907 = vmatpush.bf16.msra.mxu0 0
    %908 = vmatpush.bf16.msra.mxu0 0
    %909 = vmatpush.bf16.msra.mxu0 %v94
    %910 = vmatpush.bf16.msra.mxu0 %v93
    %911 = vmatmul.bf16.gmra.mxu0 %v901
    %v912 = vpop.f32.mrf.mxu0
    %v913 = vadd.f32 %v77, %v912
    %v914 = vpop.f32.mrf.mxu0
    %915 = vdwg.mxu0
    %v916 = vpack.c.bf16 %v913, %v913
    %v918 = vunpack.c.l.b16 %v916
    %v919 = vpack.c.b16 %v918, %v918
    %920 = vrot.lane.b32.xlu0 %v919, 96
    %v921 = vpop.permute.xlu0 %920
    %v923 = vsel %vm120, %v916, 0
    %v926 = vsel %vm120, %v921, 0
    %928 = vmatpush.bf16.xpose.msra.mxu0 0
    %929 = vmatpush.bf16.xpose.msra.mxu0 0
    %930 = vmatpush.bf16.xpose.msra.mxu0 0
    %931 = vmatpush.bf16.xpose.msra.mxu0 0
    %932 = vmatpush.bf16.xpose.msra.mxu0 0
    %933 = vmatpush.bf16.xpose.msra.mxu0 0
    %934 = vmatpush.bf16.xpose.msra.mxu0 0
    %935 = vmatpush.bf16.xpose.msra.mxu0 %v926
    %936 = vmatmul.bf16.gmra.mxu0 %v923
    %v937 = vpop.f32.mrf.mxu0
    %v938 = vadd.f32 0.0, %v937
    %v939 = vpop.f32.mrf.mxu0
    %940 = vdwg.mxu0
    %v941 = vmul.f32 %v938, 1.442695
    %v942 = vpow.pop %v941
    %v943 = vsel %vm120, %v942, 0.0
    %944 = vadd.xlane.f32.xlu0 %v943
    %v945 = vpop.xlane.xlu0 %944
    %v946 = vrcp.pop %v945
    %v947 = vmul.f32 %v942, %v946
    %v948 = vpack.c.bf16 %v947, %v947
    %949 = vrot.lane.b32.xlu0 %v919, 64
    %v950 = vpop.permute.xlu0 %949
    %v952 = vsel %vm120, %v948, 0
    %v955 = vsel %vm153, %v950, 0
    %957 = vmatpush.bf16.msra.mxu0 0
    %958 = vmatpush.bf16.msra.mxu0 0
    %959 = vmatpush.bf16.msra.mxu0 0
    %960 = vmatpush.bf16.msra.mxu0 0
    %961 = vmatpush.bf16.msra.mxu0 0
    %962 = vmatpush.bf16.msra.mxu0 0
    %963 = vmatpush.bf16.msra.mxu0 0
    %964 = vmatpush.bf16.msra.mxu0 %v955
    %965 = vmatmul.bf16.gmra.mxu0 %v952
    %v966 = vpop.f32.mrf.mxu0
    %v967 = vadd.f32 0.0, %v966
    %v968 = vpop.f32.mrf.mxu0
    %969 = vdwg.mxu0
    %970 = vrot.lane.b32.xlu0 %v919, 120
    %v971 = vpop.permute.xlu0 %970
    %972 = vrot.lane.b32.xlu0 %v919, 88
    %v973 = vpop.permute.xlu0 %972
    %v975 = vsel %vm120, %v971, 0
    %v978 = vsel %vm120, %v973, 0
    %980 = vmatpush.bf16.xpose.msra.mxu0 0
    %981 = vmatpush.bf16.xpose.msra.mxu0 0
    %982 = vmatpush.bf16.xpose.msra.mxu0 0
    %983 = vmatpush.bf16.xpose.msra.mxu0 0
    %984 = vmatpush.bf16.xpose.msra.mxu0 0
    %985 = vmatpush.bf16.xpose.msra.mxu0 0
    %986 = vmatpush.bf16.xpose.msra.mxu0 0
    %987 = vmatpush.bf16.xpose.msra.mxu0 %v978
    %988 = vmatmul.bf16.gmra.mxu0 %v975
    %v989 = vpop.f32.mrf.mxu0
    %v990 = vadd.f32 0.0, %v989
    %v991 = vpop.f32.mrf.mxu0
    %992 = vdwg.mxu0
    %v993 = vmul.f32 %v990, 1.442695
    %v994 = vpow.pop %v993
    %v995 = vsel %vm120, %v994, 0.0
    %996 = vadd.xlane.f32.xlu0 %v995
    %v997 = vpop.xlane.xlu0 %996
    %v998 = vrcp.pop %v997
    %v999 = vmul.f32 %v994, %v998
    %v1000 = vpack.c.bf16 %v999, %v999
    %1001 = vrot.lane.b32.xlu0 %v919, 56
    %v1002 = vpop.permute.xlu0 %1001
    %v1004 = vsel %vm120, %v1000, 0
    %v1007 = vsel %vm153, %v1002, 0
    %1009 = vmatpush.bf16.msra.mxu0 0
    %1010 = vmatpush.bf16.msra.mxu0 0
    %1011 = vmatpush.bf16.msra.mxu0 0
    %1012 = vmatpush.bf16.msra.mxu0 0
    %1013 = vmatpush.bf16.msra.mxu0 0
    %1014 = vmatpush.bf16.msra.mxu0 0
    %1015 = vmatpush.bf16.msra.mxu0 0
    %1016 = vmatpush.bf16.msra.mxu0 %v1007
    %1017 = vmatmul.bf16.gmra.mxu0 %v1004
    %v1018 = vpop.f32.mrf.mxu0
    %v1019 = vadd.f32 0.0, %v1018
    %v1020 = vpop.f32.mrf.mxu0
    %1021 = vdwg.mxu0
    %1022 = vrot.lane.b32.xlu0 %v919, 112
    %v1023 = vpop.permute.xlu0 %1022
    %1024 = vrot.lane.b32.xlu0 %v919, 80
    %v1025 = vpop.permute.xlu0 %1024
    %v1027 = vsel %vm120, %v1023, 0
    %v1030 = vsel %vm120, %v1025, 0
    %1032 = vmatpush.bf16.xpose.msra.mxu0 0
    %1033 = vmatpush.bf16.xpose.msra.mxu0 0
    %1034 = vmatpush.bf16.xpose.msra.mxu0 0
    %1035 = vmatpush.bf16.xpose.msra.mxu0 0
    %1036 = vmatpush.bf16.xpose.msra.mxu0 0
    %1037 = vmatpush.bf16.xpose.msra.mxu0 0
    %1038 = vmatpush.bf16.xpose.msra.mxu0 0
    %1039 = vmatpush.bf16.xpose.msra.mxu0 %v1030
    %1040 = vmatmul.bf16.gmra.mxu0 %v1027
    %v1041 = vpop.f32.mrf.mxu0
    %v1042 = vadd.f32 0.0, %v1041
    %v1043 = vpop.f32.mrf.mxu0
    %1044 = vdwg.mxu0
    %v1045 = vmul.f32 %v1042, 1.442695
    %v1046 = vpow.pop %v1045
    %v1047 = vsel %vm120, %v1046, 0.0
    %1048 = vadd.xlane.f32.xlu0 %v1047
    %v1049 = vpop.xlane.xlu0 %1048
    %v1050 = vrcp.pop %v1049
    %v1051 = vmul.f32 %v1046, %v1050
    %v1052 = vpack.c.bf16 %v1051, %v1051
    %1053 = vrot.lane.b32.xlu0 %v919, 48
    %v1054 = vpop.permute.xlu0 %1053
    %v1056 = vsel %vm120, %v1052, 0
    %v1059 = vsel %vm153, %v1054, 0
    %1061 = vmatpush.bf16.msra.mxu0 0
    %1062 = vmatpush.bf16.msra.mxu0 0
    %1063 = vmatpush.bf16.msra.mxu0 0
    %1064 = vmatpush.bf16.msra.mxu0 0
    %1065 = vmatpush.bf16.msra.mxu0 0
    %1066 = vmatpush.bf16.msra.mxu0 0
    %1067 = vmatpush.bf16.msra.mxu0 0
    %1068 = vmatpush.bf16.msra.mxu0 %v1059
    %1069 = vmatmul.bf16.gmra.mxu0 %v1056
    %v1070 = vpop.f32.mrf.mxu0
    %v1071 = vadd.f32 0.0, %v1070
    %v1072 = vpop.f32.mrf.mxu0
    %1073 = vdwg.mxu0
    %1074 = vrot.lane.b32.xlu0 %v919, 104
    %v1075 = vpop.permute.xlu0 %1074
    %1076 = vrot.lane.b32.xlu0 %v919, 72
    %v1077 = vpop.permute.xlu0 %1076
    %v1079 = vsel %vm120, %v1075, 0
    %v1082 = vsel %vm120, %v1077, 0
    %1084 = vmatpush.bf16.xpose.msra.mxu0 0
    %1085 = vmatpush.bf16.xpose.msra.mxu0 0
    %1086 = vmatpush.bf16.xpose.msra.mxu0 0
    %1087 = vmatpush.bf16.xpose.msra.mxu0 0
    %1088 = vmatpush.bf16.xpose.msra.mxu0 0
    %1089 = vmatpush.bf16.xpose.msra.mxu0 0
    %1090 = vmatpush.bf16.xpose.msra.mxu0 0
    %1091 = vmatpush.bf16.xpose.msra.mxu0 %v1082
    %1092 = vmatmul.bf16.gmra.mxu0 %v1079
    %v1093 = vpop.f32.mrf.mxu0
    %v1094 = vadd.f32 0.0, %v1093
    %v1095 = vpop.f32.mrf.mxu0
    %1096 = vdwg.mxu0
    %v1097 = vmul.f32 %v1094, 1.442695
    %v1098 = vpow.pop %v1097
    %v1099 = vsel %vm120, %v1098, 0.0
    %1100 = vadd.xlane.f32.xlu0 %v1099
    %v1101 = vpop.xlane.xlu0 %1100
    %v1102 = vrcp.pop %v1101
    %v1103 = vmul.f32 %v1098, %v1102
    %v1104 = vpack.c.bf16 %v1103, %v1103
    %1105 = vrot.lane.b32.xlu0 %v919, 40
    %v1106 = vpop.permute.xlu0 %1105
    %v1108 = vsel %vm120, %v1104, 0
    %v1111 = vsel %vm153, %v1106, 0
    %1113 = vmatpush.bf16.msra.mxu0 0
    %1114 = vmatpush.bf16.msra.mxu0 0
    %1115 = vmatpush.bf16.msra.mxu0 0
    %1116 = vmatpush.bf16.msra.mxu0 0
    %1117 = vmatpush.bf16.msra.mxu0 0
    %1118 = vmatpush.bf16.msra.mxu0 0
    %1119 = vmatpush.bf16.msra.mxu0 0
    %1120 = vmatpush.bf16.msra.mxu0 %v1111
    %1121 = vmatmul.bf16.gmra.mxu0 %v1108
    %v1122 = vpop.f32.mrf.mxu0
    %v1123 = vadd.f32 0.0, %v1122
    %v1124 = vpop.f32.mrf.mxu0
    %1125 = vdwg.mxu0
    %1127 = vrot.lane.b32.xlu0 %v1019, 8
    %v1128 = vpop.permute.xlu0 %1127
    %1131 = vrot.lane.b32.xlu0 %v1071, 16
    %v1132 = vpop.permute.xlu0 %1131
    %1135 = vrot.lane.b32.xlu0 %v1123, 24
    %v1136 = vpop.permute.xlu0 %1135
    %v1138 = vsel %vm120, %v967, %v1128
    %v1139 = vsel %vm339, %v1138, %v1132
    %v1140 = vsel %vm341, %v1139, %v1136
    %v1141 = vpack.c.bf16 %v1140, %v1140
    %v1143 = vsel %vm97, %v1141, 0
    %1145 = vmatpush.bf16.msra.mxu0 0
    %1146 = vmatpush.bf16.msra.mxu0 0
    %1147 = vmatpush.bf16.msra.mxu0 0
    %1148 = vmatpush.bf16.msra.mxu0 0
    %1149 = vmatpush.bf16.msra.mxu0 0
    %1150 = vmatpush.bf16.msra.mxu0 0
    %1151 = vmatpush.bf16.msra.mxu0 %v353
    %1152 = vmatpush.bf16.msra.mxu0 %v352
    %1153 = vmatmul.bf16.gmra.mxu0 %v1143
    %v1154 = vpop.f32.mrf.mxu0
    %v1155 = vadd.f32 %v81, %v1154
    %v1156 = vpop.f32.mrf.mxu0
    %1157 = vdwg.mxu0
    %v1158 = vtanh.pop %v1155
    %v1159 = vmul.f32 %v634, 2.0
    %v1160 = vadd.f32 %v372, %v1159
    %v1161 = vmul.f32 %v896, 2.0
    %v1162 = vadd.f32 %v1160, %v1161
    %v1163 = vadd.f32 %v1162, %v1158
    %v1164 = vmul.f32 %v1163, 0.055555556
    %v1165 = vadd.f32 %v83, %v1164
    %v1166 = vpack.c.bf16 %v1165, %v1165
    %v1168 = vsel %vm97, %v1166, 0
    %1170 = vmatpush.bf16.msra.mxu0 0
    %1171 = vmatpush.bf16.msra.mxu0 0
    %1172 = vmatpush.bf16.msra.mxu0 0
    %1173 = vmatpush.bf16.msra.mxu0 0
    %1174 = vmatpush.bf16.msra.mxu0 0
    %1175 = vmatpush.bf16.msra.mxu0 0
    %1176 = vmatpush.bf16.msra.mxu0 %v94
    %1177 = vmatpush.bf16.msra.mxu0 %v93
    %1178 = vmatmul.bf16.gmra.mxu0 %v1168
    %v1179 = vpop.f32.mrf.mxu0
    %v1180 = vadd.f32 %v77, %v1179
    %v1181 = vpop.f32.mrf.mxu0
    %1182 = vdwg.mxu0
    %v1183 = vpack.c.bf16 %v1180, %v1180
    %v1185 = vunpack.c.l.b16 %v1183
    %v1186 = vpack.c.b16 %v1185, %v1185
    %1187 = vrot.lane.b32.xlu0 %v1186, 96
    %v1188 = vpop.permute.xlu0 %1187
    %v1190 = vsel %vm120, %v1183, 0
    %v1193 = vsel %vm120, %v1188, 0
    %1195 = vmatpush.bf16.xpose.msra.mxu0 0
    %1196 = vmatpush.bf16.xpose.msra.mxu0 0
    %1197 = vmatpush.bf16.xpose.msra.mxu0 0
    %1198 = vmatpush.bf16.xpose.msra.mxu0 0
    %1199 = vmatpush.bf16.xpose.msra.mxu0 0
    %1200 = vmatpush.bf16.xpose.msra.mxu0 0
    %1201 = vmatpush.bf16.xpose.msra.mxu0 0
    %1202 = vmatpush.bf16.xpose.msra.mxu0 %v1193
    %1203 = vmatmul.bf16.gmra.mxu0 %v1190
    %v1204 = vpop.f32.mrf.mxu0
    %v1205 = vadd.f32 0.0, %v1204
    %v1206 = vpop.f32.mrf.mxu0
    %1207 = vdwg.mxu0
    %v1208 = vmul.f32 %v1205, 1.442695
    %v1209 = vpow.pop %v1208
    %v1210 = vsel %vm120, %v1209, 0.0
    %1211 = vadd.xlane.f32.xlu0 %v1210
    %v1212 = vpop.xlane.xlu0 %1211
    %v1213 = vrcp.pop %v1212
    %v1214 = vmul.f32 %v1209, %v1213
    %v1215 = vpack.c.bf16 %v1214, %v1214
    %1216 = vrot.lane.b32.xlu0 %v1186, 64
    %v1217 = vpop.permute.xlu0 %1216
    %v1219 = vsel %vm120, %v1215, 0
    %v1222 = vsel %vm153, %v1217, 0
    %1224 = vmatpush.bf16.msra.mxu0 0
    %1225 = vmatpush.bf16.msra.mxu0 0
    %1226 = vmatpush.bf16.msra.mxu0 0
    %1227 = vmatpush.bf16.msra.mxu0 0
    %1228 = vmatpush.bf16.msra.mxu0 0
    %1229 = vmatpush.bf16.msra.mxu0 0
    %1230 = vmatpush.bf16.msra.mxu0 0
    %1231 = vmatpush.bf16.msra.mxu0 %v1222
    %1232 = vmatmul.bf16.gmra.mxu0 %v1219
    %v1233 = vpop.f32.mrf.mxu0
    %v1234 = vadd.f32 0.0, %v1233
    %v1235 = vpop.f32.mrf.mxu0
    %1236 = vdwg.mxu0
    %1237 = vrot.lane.b32.xlu0 %v1186, 120
    %v1238 = vpop.permute.xlu0 %1237
    %1239 = vrot.lane.b32.xlu0 %v1186, 88
    %v1240 = vpop.permute.xlu0 %1239
    %v1242 = vsel %vm120, %v1238, 0
    %v1245 = vsel %vm120, %v1240, 0
    %1247 = vmatpush.bf16.xpose.msra.mxu0 0
    %1248 = vmatpush.bf16.xpose.msra.mxu0 0
    %1249 = vmatpush.bf16.xpose.msra.mxu0 0
    %1250 = vmatpush.bf16.xpose.msra.mxu0 0
    %1251 = vmatpush.bf16.xpose.msra.mxu0 0
    %1252 = vmatpush.bf16.xpose.msra.mxu0 0
    %1253 = vmatpush.bf16.xpose.msra.mxu0 0
    %1254 = vmatpush.bf16.xpose.msra.mxu0 %v1245
    %1255 = vmatmul.bf16.gmra.mxu0 %v1242
    %v1256 = vpop.f32.mrf.mxu0
    %v1257 = vadd.f32 0.0, %v1256
    %v1258 = vpop.f32.mrf.mxu0
    %1259 = vdwg.mxu0
    %v1260 = vmul.f32 %v1257, 1.442695
    %v1261 = vpow.pop %v1260
    %v1262 = vsel %vm120, %v1261, 0.0
    %1263 = vadd.xlane.f32.xlu0 %v1262
    %v1264 = vpop.xlane.xlu0 %1263
    %v1265 = vrcp.pop %v1264
    %v1266 = vmul.f32 %v1261, %v1265
    %v1267 = vpack.c.bf16 %v1266, %v1266
    %1268 = vrot.lane.b32.xlu0 %v1186, 56
    %v1269 = vpop.permute.xlu0 %1268
    %v1271 = vsel %vm120, %v1267, 0
    %v1274 = vsel %vm153, %v1269, 0
    %1276 = vmatpush.bf16.msra.mxu0 0
    %1277 = vmatpush.bf16.msra.mxu0 0
    %1278 = vmatpush.bf16.msra.mxu0 0
    %1279 = vmatpush.bf16.msra.mxu0 0
    %1280 = vmatpush.bf16.msra.mxu0 0
    %1281 = vmatpush.bf16.msra.mxu0 0
    %1282 = vmatpush.bf16.msra.mxu0 0
    %1283 = vmatpush.bf16.msra.mxu0 %v1274
    %1284 = vmatmul.bf16.gmra.mxu0 %v1271
    %v1285 = vpop.f32.mrf.mxu0
    %v1286 = vadd.f32 0.0, %v1285
    %v1287 = vpop.f32.mrf.mxu0
    %1288 = vdwg.mxu0
    %1289 = vrot.lane.b32.xlu0 %v1186, 112
    %v1290 = vpop.permute.xlu0 %1289
    %1291 = vrot.lane.b32.xlu0 %v1186, 80
    %v1292 = vpop.permute.xlu0 %1291
    %v1294 = vsel %vm120, %v1290, 0
    %v1297 = vsel %vm120, %v1292, 0
    %1299 = vmatpush.bf16.xpose.msra.mxu0 0
    %1300 = vmatpush.bf16.xpose.msra.mxu0 0
    %1301 = vmatpush.bf16.xpose.msra.mxu0 0
    %1302 = vmatpush.bf16.xpose.msra.mxu0 0
    %1303 = vmatpush.bf16.xpose.msra.mxu0 0
    %1304 = vmatpush.bf16.xpose.msra.mxu0 0
    %1305 = vmatpush.bf16.xpose.msra.mxu0 0
    %1306 = vmatpush.bf16.xpose.msra.mxu0 %v1297
    %1307 = vmatmul.bf16.gmra.mxu0 %v1294
    %v1308 = vpop.f32.mrf.mxu0
    %v1309 = vadd.f32 0.0, %v1308
    %v1310 = vpop.f32.mrf.mxu0
    %1311 = vdwg.mxu0
    %v1312 = vmul.f32 %v1309, 1.442695
    %v1313 = vpow.pop %v1312
    %v1314 = vsel %vm120, %v1313, 0.0
    %1315 = vadd.xlane.f32.xlu0 %v1314
    %v1316 = vpop.xlane.xlu0 %1315
    %v1317 = vrcp.pop %v1316
    %v1318 = vmul.f32 %v1313, %v1317
    %v1319 = vpack.c.bf16 %v1318, %v1318
    %1320 = vrot.lane.b32.xlu0 %v1186, 48
    %v1321 = vpop.permute.xlu0 %1320
    %v1323 = vsel %vm120, %v1319, 0
    %v1326 = vsel %vm153, %v1321, 0
    %1328 = vmatpush.bf16.msra.mxu0 0
    %1329 = vmatpush.bf16.msra.mxu0 0
    %1330 = vmatpush.bf16.msra.mxu0 0
    %1331 = vmatpush.bf16.msra.mxu0 0
    %1332 = vmatpush.bf16.msra.mxu0 0
    %1333 = vmatpush.bf16.msra.mxu0 0
    %1334 = vmatpush.bf16.msra.mxu0 0
    %1335 = vmatpush.bf16.msra.mxu0 %v1326
    %1336 = vmatmul.bf16.gmra.mxu0 %v1323
    %v1337 = vpop.f32.mrf.mxu0
    %v1338 = vadd.f32 0.0, %v1337
    %v1339 = vpop.f32.mrf.mxu0
    %1340 = vdwg.mxu0
    %1341 = vrot.lane.b32.xlu0 %v1186, 104
    %v1342 = vpop.permute.xlu0 %1341
    %1343 = vrot.lane.b32.xlu0 %v1186, 72
    %v1344 = vpop.permute.xlu0 %1343
    %v1346 = vsel %vm120, %v1342, 0
    %v1349 = vsel %vm120, %v1344, 0
    %1351 = vmatpush.bf16.xpose.msra.mxu0 0
    %1352 = vmatpush.bf16.xpose.msra.mxu0 0
    %1353 = vmatpush.bf16.xpose.msra.mxu0 0
    %1354 = vmatpush.bf16.xpose.msra.mxu0 0
    %1355 = vmatpush.bf16.xpose.msra.mxu0 0
    %1356 = vmatpush.bf16.xpose.msra.mxu0 0
    %1357 = vmatpush.bf16.xpose.msra.mxu0 0
    %1358 = vmatpush.bf16.xpose.msra.mxu0 %v1349
    %1359 = vmatmul.bf16.gmra.mxu0 %v1346
    %v1360 = vpop.f32.mrf.mxu0
    %v1361 = vadd.f32 0.0, %v1360
    %v1362 = vpop.f32.mrf.mxu0
    %1363 = vdwg.mxu0
    %v1364 = vmul.f32 %v1361, 1.442695
    %v1365 = vpow.pop %v1364
    %v1366 = vsel %vm120, %v1365, 0.0
    %1367 = vadd.xlane.f32.xlu0 %v1366
    %v1368 = vpop.xlane.xlu0 %1367
    %v1369 = vrcp.pop %v1368
    %v1370 = vmul.f32 %v1365, %v1369
    %v1371 = vpack.c.bf16 %v1370, %v1370
    %1372 = vrot.lane.b32.xlu0 %v1186, 40
    %v1373 = vpop.permute.xlu0 %1372
    %v1375 = vsel %vm120, %v1371, 0
    %v1378 = vsel %vm153, %v1373, 0
    %1380 = vmatpush.bf16.msra.mxu0 0
    %1381 = vmatpush.bf16.msra.mxu0 0
    %1382 = vmatpush.bf16.msra.mxu0 0
    %1383 = vmatpush.bf16.msra.mxu0 0
    %1384 = vmatpush.bf16.msra.mxu0 0
    %1385 = vmatpush.bf16.msra.mxu0 0
    %1386 = vmatpush.bf16.msra.mxu0 0
    %1387 = vmatpush.bf16.msra.mxu0 %v1378
    %1388 = vmatmul.bf16.gmra.mxu0 %v1375
    %v1389 = vpop.f32.mrf.mxu0
    %v1390 = vadd.f32 0.0, %v1389
    %v1391 = vpop.f32.mrf.mxu0
    %1392 = vdwg.mxu0
    %1394 = vrot.lane.b32.xlu0 %v1286, 8
    %v1395 = vpop.permute.xlu0 %1394
    %1398 = vrot.lane.b32.xlu0 %v1338, 16
    %v1399 = vpop.permute.xlu0 %1398
    %1402 = vrot.lane.b32.xlu0 %v1390, 24
    %v1403 = vpop.permute.xlu0 %1402
    %v1405 = vsel %vm120, %v1234, %v1395
    %v1406 = vsel %vm339, %v1405, %v1399
    %v1407 = vsel %vm341, %v1406, %v1403
    %v1408 = vpack.c.bf16 %v1407, %v1407
    %v1410 = vsel %vm97, %v1408, 0
    %1412 = vmatpush.bf16.msra.mxu0 0
    %1413 = vmatpush.bf16.msra.mxu0 0
    %1414 = vmatpush.bf16.msra.mxu0 0
    %1415 = vmatpush.bf16.msra.mxu0 0
    %1416 = vmatpush.bf16.msra.mxu0 0
    %1417 = vmatpush.bf16.msra.mxu0 0
    %1418 = vmatpush.bf16.msra.mxu0 %v353
    %1419 = vmatpush.bf16.msra.mxu0 %v352
    %1420 = vmatmul.bf16.gmra.mxu0 %v1410
    %v1421 = vpop.f32.mrf.mxu0
    %v1422 = vadd.f32 %v81, %v1421
    %v1423 = vpop.f32.mrf.mxu0
    %1424 = vdwg.mxu0
    %v1425 = vtanh.pop %v1422
    %v1426 = vmul.f32 %v1425, 0.16666667
    %v1427 = vadd.f32 %v1165, %v1426
    %v1428 = vpack.c.bf16 %v1427, %v1427
    %v1430 = vsel %vm97, %v1428, 0
    %1432 = vmatpush.bf16.msra.mxu0 0
    %1433 = vmatpush.bf16.msra.mxu0 0
    %1434 = vmatpush.bf16.msra.mxu0 0
    %1435 = vmatpush.bf16.msra.mxu0 0
    %1436 = vmatpush.bf16.msra.mxu0 0
    %1437 = vmatpush.bf16.msra.mxu0 0
    %1438 = vmatpush.bf16.msra.mxu0 %v94
    %1439 = vmatpush.bf16.msra.mxu0 %v93
    %1440 = vmatmul.bf16.gmra.mxu0 %v1430
    %v1441 = vpop.f32.mrf.mxu0
    %v1442 = vadd.f32 %v77, %v1441
    %v1443 = vpop.f32.mrf.mxu0
    %1444 = vdwg.mxu0
    %v1445 = vpack.c.bf16 %v1442, %v1442
    %v1447 = vunpack.c.l.b16 %v1445
    %v1448 = vpack.c.b16 %v1447, %v1447
    %1449 = vrot.lane.b32.xlu0 %v1448, 96
    %v1450 = vpop.permute.xlu0 %1449
    %v1452 = vsel %vm120, %v1445, 0
    %v1455 = vsel %vm120, %v1450, 0
    %1457 = vmatpush.bf16.xpose.msra.mxu0 0
    %1458 = vmatpush.bf16.xpose.msra.mxu0 0
    %1459 = vmatpush.bf16.xpose.msra.mxu0 0
    %1460 = vmatpush.bf16.xpose.msra.mxu0 0
    %1461 = vmatpush.bf16.xpose.msra.mxu0 0
    %1462 = vmatpush.bf16.xpose.msra.mxu0 0
    %1463 = vmatpush.bf16.xpose.msra.mxu0 0
    %1464 = vmatpush.bf16.xpose.msra.mxu0 %v1455
    %1465 = vmatmul.bf16.gmra.mxu0 %v1452
    %v1466 = vpop.f32.mrf.mxu0
    %v1467 = vadd.f32 0.0, %v1466
    %v1468 = vpop.f32.mrf.mxu0
    %1469 = vdwg.mxu0
    %v1470 = vmul.f32 %v1467, 1.442695
    %v1471 = vpow.pop %v1470
    %v1472 = vsel %vm120, %v1471, 0.0
    %1473 = vadd.xlane.f32.xlu0 %v1472
    %v1474 = vpop.xlane.xlu0 %1473
    %v1475 = vrcp.pop %v1474
    %v1476 = vmul.f32 %v1471, %v1475
    %v1477 = vpack.c.bf16 %v1476, %v1476
    %1478 = vrot.lane.b32.xlu0 %v1448, 64
    %v1479 = vpop.permute.xlu0 %1478
    %v1481 = vsel %vm120, %v1477, 0
    %v1484 = vsel %vm153, %v1479, 0
    %1486 = vmatpush.bf16.msra.mxu0 0
    %1487 = vmatpush.bf16.msra.mxu0 0
    %1488 = vmatpush.bf16.msra.mxu0 0
    %1489 = vmatpush.bf16.msra.mxu0 0
    %1490 = vmatpush.bf16.msra.mxu0 0
    %1491 = vmatpush.bf16.msra.mxu0 0
    %1492 = vmatpush.bf16.msra.mxu0 0
    %1493 = vmatpush.bf16.msra.mxu0 %v1484
    %1494 = vmatmul.bf16.gmra.mxu0 %v1481
    %v1495 = vpop.f32.mrf.mxu0
    %v1496 = vadd.f32 0.0, %v1495
    %v1497 = vpop.f32.mrf.mxu0
    %1498 = vdwg.mxu0
    %1499 = vrot.lane.b32.xlu0 %v1448, 120
    %v1500 = vpop.permute.xlu0 %1499
    %1501 = vrot.lane.b32.xlu0 %v1448, 88
    %v1502 = vpop.permute.xlu0 %1501
    %v1504 = vsel %vm120, %v1500, 0
    %v1507 = vsel %vm120, %v1502, 0
    %1509 = vmatpush.bf16.xpose.msra.mxu0 0
    %1510 = vmatpush.bf16.xpose.msra.mxu0 0
    %1511 = vmatpush.bf16.xpose.msra.mxu0 0
    %1512 = vmatpush.bf16.xpose.msra.mxu0 0
    %1513 = vmatpush.bf16.xpose.msra.mxu0 0
    %1514 = vmatpush.bf16.xpose.msra.mxu0 0
    %1515 = vmatpush.bf16.xpose.msra.mxu0 0
    %1516 = vmatpush.bf16.xpose.msra.mxu0 %v1507
    %1517 = vmatmul.bf16.gmra.mxu0 %v1504
    %v1518 = vpop.f32.mrf.mxu0
    %v1519 = vadd.f32 0.0, %v1518
    %v1520 = vpop.f32.mrf.mxu0
    %1521 = vdwg.mxu0
    %v1522 = vmul.f32 %v1519, 1.442695
    %v1523 = vpow.pop %v1522
    %v1524 = vsel %vm120, %v1523, 0.0
    %1525 = vadd.xlane.f32.xlu0 %v1524
    %v1526 = vpop.xlane.xlu0 %1525
    %v1527 = vrcp.pop %v1526
    %v1528 = vmul.f32 %v1523, %v1527
    %v1529 = vpack.c.bf16 %v1528, %v1528
    %1530 = vrot.lane.b32.xlu0 %v1448, 56
    %v1531 = vpop.permute.xlu0 %1530
    %v1533 = vsel %vm120, %v1529, 0
    %v1536 = vsel %vm153, %v1531, 0
    %1538 = vmatpush.bf16.msra.mxu0 0
    %1539 = vmatpush.bf16.msra.mxu0 0
    %1540 = vmatpush.bf16.msra.mxu0 0
    %1541 = vmatpush.bf16.msra.mxu0 0
    %1542 = vmatpush.bf16.msra.mxu0 0
    %1543 = vmatpush.bf16.msra.mxu0 0
    %1544 = vmatpush.bf16.msra.mxu0 0
    %1545 = vmatpush.bf16.msra.mxu0 %v1536
    %1546 = vmatmul.bf16.gmra.mxu0 %v1533
    %v1547 = vpop.f32.mrf.mxu0
    %v1548 = vadd.f32 0.0, %v1547
    %v1549 = vpop.f32.mrf.mxu0
    %1550 = vdwg.mxu0
    %1551 = vrot.lane.b32.xlu0 %v1448, 112
    %v1552 = vpop.permute.xlu0 %1551
    %1553 = vrot.lane.b32.xlu0 %v1448, 80
    %v1554 = vpop.permute.xlu0 %1553
    %v1556 = vsel %vm120, %v1552, 0
    %v1559 = vsel %vm120, %v1554, 0
    %1561 = vmatpush.bf16.xpose.msra.mxu0 0
    %1562 = vmatpush.bf16.xpose.msra.mxu0 0
    %1563 = vmatpush.bf16.xpose.msra.mxu0 0
    %1564 = vmatpush.bf16.xpose.msra.mxu0 0
    %1565 = vmatpush.bf16.xpose.msra.mxu0 0
    %1566 = vmatpush.bf16.xpose.msra.mxu0 0
    %1567 = vmatpush.bf16.xpose.msra.mxu0 0
    %1568 = vmatpush.bf16.xpose.msra.mxu0 %v1559
    %1569 = vmatmul.bf16.gmra.mxu0 %v1556
    %v1570 = vpop.f32.mrf.mxu0
    %v1571 = vadd.f32 0.0, %v1570
    %v1572 = vpop.f32.mrf.mxu0
    %1573 = vdwg.mxu0
    %v1574 = vmul.f32 %v1571, 1.442695
    %v1575 = vpow.pop %v1574
    %v1576 = vsel %vm120, %v1575, 0.0
    %1577 = vadd.xlane.f32.xlu0 %v1576
    %v1578 = vpop.xlane.xlu0 %1577
    %v1579 = vrcp.pop %v1578
    %v1580 = vmul.f32 %v1575, %v1579
    %v1581 = vpack.c.bf16 %v1580, %v1580
    %1582 = vrot.lane.b32.xlu0 %v1448, 48
    %v1583 = vpop.permute.xlu0 %1582
    %v1585 = vsel %vm120, %v1581, 0
    %v1588 = vsel %vm153, %v1583, 0
    %1590 = vmatpush.bf16.msra.mxu0 0
    %1591 = vmatpush.bf16.msra.mxu0 0
    %1592 = vmatpush.bf16.msra.mxu0 0
    %1593 = vmatpush.bf16.msra.mxu0 0
    %1594 = vmatpush.bf16.msra.mxu0 0
    %1595 = vmatpush.bf16.msra.mxu0 0
    %1596 = vmatpush.bf16.msra.mxu0 0
    %1597 = vmatpush.bf16.msra.mxu0 %v1588
    %1598 = vmatmul.bf16.gmra.mxu0 %v1585
    %v1599 = vpop.f32.mrf.mxu0
    %v1600 = vadd.f32 0.0, %v1599
    %v1601 = vpop.f32.mrf.mxu0
    %1602 = vdwg.mxu0
    %1603 = vrot.lane.b32.xlu0 %v1448, 104
    %v1604 = vpop.permute.xlu0 %1603
    %1605 = vrot.lane.b32.xlu0 %v1448, 72
    %v1606 = vpop.permute.xlu0 %1605
    %v1608 = vsel %vm120, %v1604, 0
    %v1611 = vsel %vm120, %v1606, 0
    %1613 = vmatpush.bf16.xpose.msra.mxu0 0
    %1614 = vmatpush.bf16.xpose.msra.mxu0 0
    %1615 = vmatpush.bf16.xpose.msra.mxu0 0
    %1616 = vmatpush.bf16.xpose.msra.mxu0 0
    %1617 = vmatpush.bf16.xpose.msra.mxu0 0
    %1618 = vmatpush.bf16.xpose.msra.mxu0 0
    %1619 = vmatpush.bf16.xpose.msra.mxu0 0
    %1620 = vmatpush.bf16.xpose.msra.mxu0 %v1611
    %1621 = vmatmul.bf16.gmra.mxu0 %v1608
    %v1622 = vpop.f32.mrf.mxu0
    %v1623 = vadd.f32 0.0, %v1622
    %v1624 = vpop.f32.mrf.mxu0
    %1625 = vdwg.mxu0
    %v1626 = vmul.f32 %v1623, 1.442695
    %v1627 = vpow.pop %v1626
    %v1628 = vsel %vm120, %v1627, 0.0
    %1629 = vadd.xlane.f32.xlu0 %v1628
    %v1630 = vpop.xlane.xlu0 %1629
    %v1631 = vrcp.pop %v1630
    %v1632 = vmul.f32 %v1627, %v1631
    %v1633 = vpack.c.bf16 %v1632, %v1632
    %1634 = vrot.lane.b32.xlu0 %v1448, 40
    %v1635 = vpop.permute.xlu0 %1634
    %v1637 = vsel %vm120, %v1633, 0
    %v1640 = vsel %vm153, %v1635, 0
    %1642 = vmatpush.bf16.msra.mxu0 0
    %1643 = vmatpush.bf16.msra.mxu0 0
    %1644 = vmatpush.bf16.msra.mxu0 0
    %1645 = vmatpush.bf16.msra.mxu0 0
    %1646 = vmatpush.bf16.msra.mxu0 0
    %1647 = vmatpush.bf16.msra.mxu0 0
    %1648 = vmatpush.bf16.msra.mxu0 0
    %1649 = vmatpush.bf16.msra.mxu0 %v1640
    %1650 = vmatmul.bf16.gmra.mxu0 %v1637
    %v1651 = vpop.f32.mrf.mxu0
    %v1652 = vadd.f32 0.0, %v1651
    %v1653 = vpop.f32.mrf.mxu0
    %1654 = vdwg.mxu0
    %1656 = vrot.lane.b32.xlu0 %v1548, 8
    %v1657 = vpop.permute.xlu0 %1656
    %1660 = vrot.lane.b32.xlu0 %v1600, 16
    %v1661 = vpop.permute.xlu0 %1660
    %1664 = vrot.lane.b32.xlu0 %v1652, 24
    %v1665 = vpop.permute.xlu0 %1664
    %v1667 = vsel %vm120, %v1496, %v1657
    %v1668 = vsel %vm339, %v1667, %v1661
    %v1669 = vsel %vm341, %v1668, %v1665
    %v1670 = vpack.c.bf16 %v1669, %v1669
    %v1672 = vsel %vm97, %v1670, 0
    %1674 = vmatpush.bf16.msra.mxu0 0
    %1675 = vmatpush.bf16.msra.mxu0 0
    %1676 = vmatpush.bf16.msra.mxu0 0
    %1677 = vmatpush.bf16.msra.mxu0 0
    %1678 = vmatpush.bf16.msra.mxu0 0
    %1679 = vmatpush.bf16.msra.mxu0 0
    %1680 = vmatpush.bf16.msra.mxu0 %v353
    %1681 = vmatpush.bf16.msra.mxu0 %v352
    %1682 = vmatmul.bf16.gmra.mxu0 %v1672
    %v1683 = vpop.f32.mrf.mxu0
    %v1684 = vadd.f32 %v81, %v1683
    %v1685 = vpop.f32.mrf.mxu0
    %1686 = vdwg.mxu0
    %v1687 = vtanh.pop %v1684
    %v1688 = vmul.f32 %v1687, 0.16666667
    %v1689 = vadd.f32 %v1165, %v1688
    %v1690 = vpack.c.bf16 %v1689, %v1689
    %v1692 = vsel %vm97, %v1690, 0
    %1694 = vmatpush.bf16.msra.mxu0 0
    %1695 = vmatpush.bf16.msra.mxu0 0
    %1696 = vmatpush.bf16.msra.mxu0 0
    %1697 = vmatpush.bf16.msra.mxu0 0
    %1698 = vmatpush.bf16.msra.mxu0 0
    %1699 = vmatpush.bf16.msra.mxu0 0
    %1700 = vmatpush.bf16.msra.mxu0 %v94
    %1701 = vmatpush.bf16.msra.mxu0 %v93
    %1702 = vmatmul.bf16.gmra.mxu0 %v1692
    %v1703 = vpop.f32.mrf.mxu0
    %v1704 = vadd.f32 %v77, %v1703
    %v1705 = vpop.f32.mrf.mxu0
    %1706 = vdwg.mxu0
    %v1707 = vpack.c.bf16 %v1704, %v1704
    %v1709 = vunpack.c.l.b16 %v1707
    %v1710 = vpack.c.b16 %v1709, %v1709
    %1711 = vrot.lane.b32.xlu0 %v1710, 96
    %v1712 = vpop.permute.xlu0 %1711
    %v1714 = vsel %vm120, %v1707, 0
    %v1717 = vsel %vm120, %v1712, 0
    %1719 = vmatpush.bf16.xpose.msra.mxu0 0
    %1720 = vmatpush.bf16.xpose.msra.mxu0 0
    %1721 = vmatpush.bf16.xpose.msra.mxu0 0
    %1722 = vmatpush.bf16.xpose.msra.mxu0 0
    %1723 = vmatpush.bf16.xpose.msra.mxu0 0
    %1724 = vmatpush.bf16.xpose.msra.mxu0 0
    %1725 = vmatpush.bf16.xpose.msra.mxu0 0
    %1726 = vmatpush.bf16.xpose.msra.mxu0 %v1717
    %1727 = vmatmul.bf16.gmra.mxu0 %v1714
    %v1728 = vpop.f32.mrf.mxu0
    %v1729 = vadd.f32 0.0, %v1728
    %v1730 = vpop.f32.mrf.mxu0
    %1731 = vdwg.mxu0
    %v1732 = vmul.f32 %v1729, 1.442695
    %v1733 = vpow.pop %v1732
    %v1734 = vsel %vm120, %v1733, 0.0
    %1735 = vadd.xlane.f32.xlu0 %v1734
    %v1736 = vpop.xlane.xlu0 %1735
    %v1737 = vrcp.pop %v1736
    %v1738 = vmul.f32 %v1733, %v1737
    %v1739 = vpack.c.bf16 %v1738, %v1738
    %1740 = vrot.lane.b32.xlu0 %v1710, 64
    %v1741 = vpop.permute.xlu0 %1740
    %v1743 = vsel %vm120, %v1739, 0
    %v1746 = vsel %vm153, %v1741, 0
    %1748 = vmatpush.bf16.msra.mxu0 0
    %1749 = vmatpush.bf16.msra.mxu0 0
    %1750 = vmatpush.bf16.msra.mxu0 0
    %1751 = vmatpush.bf16.msra.mxu0 0
    %1752 = vmatpush.bf16.msra.mxu0 0
    %1753 = vmatpush.bf16.msra.mxu0 0
    %1754 = vmatpush.bf16.msra.mxu0 0
    %1755 = vmatpush.bf16.msra.mxu0 %v1746
    %1756 = vmatmul.bf16.gmra.mxu0 %v1743
    %v1757 = vpop.f32.mrf.mxu0
    %v1758 = vadd.f32 0.0, %v1757
    %v1759 = vpop.f32.mrf.mxu0
    %1760 = vdwg.mxu0
    %1761 = vrot.lane.b32.xlu0 %v1710, 120
    %v1762 = vpop.permute.xlu0 %1761
    %1763 = vrot.lane.b32.xlu0 %v1710, 88
    %v1764 = vpop.permute.xlu0 %1763
    %v1766 = vsel %vm120, %v1762, 0
    %v1769 = vsel %vm120, %v1764, 0
    %1771 = vmatpush.bf16.xpose.msra.mxu0 0
    %1772 = vmatpush.bf16.xpose.msra.mxu0 0
    %1773 = vmatpush.bf16.xpose.msra.mxu0 0
    %1774 = vmatpush.bf16.xpose.msra.mxu0 0
    %1775 = vmatpush.bf16.xpose.msra.mxu0 0
    %1776 = vmatpush.bf16.xpose.msra.mxu0 0
    %1777 = vmatpush.bf16.xpose.msra.mxu0 0
    %1778 = vmatpush.bf16.xpose.msra.mxu0 %v1769
    %1779 = vmatmul.bf16.gmra.mxu0 %v1766
    %v1780 = vpop.f32.mrf.mxu0
    %v1781 = vadd.f32 0.0, %v1780
    %v1782 = vpop.f32.mrf.mxu0
    %1783 = vdwg.mxu0
    %v1784 = vmul.f32 %v1781, 1.442695
    %v1785 = vpow.pop %v1784
    %v1786 = vsel %vm120, %v1785, 0.0
    %1787 = vadd.xlane.f32.xlu0 %v1786
    %v1788 = vpop.xlane.xlu0 %1787
    %v1789 = vrcp.pop %v1788
    %v1790 = vmul.f32 %v1785, %v1789
    %v1791 = vpack.c.bf16 %v1790, %v1790
    %1792 = vrot.lane.b32.xlu0 %v1710, 56
    %v1793 = vpop.permute.xlu0 %1792
    %v1795 = vsel %vm120, %v1791, 0
    %v1798 = vsel %vm153, %v1793, 0
    %1800 = vmatpush.bf16.msra.mxu0 0
    %1801 = vmatpush.bf16.msra.mxu0 0
    %1802 = vmatpush.bf16.msra.mxu0 0
    %1803 = vmatpush.bf16.msra.mxu0 0
    %1804 = vmatpush.bf16.msra.mxu0 0
    %1805 = vmatpush.bf16.msra.mxu0 0
    %1806 = vmatpush.bf16.msra.mxu0 0
    %1807 = vmatpush.bf16.msra.mxu0 %v1798
    %1808 = vmatmul.bf16.gmra.mxu0 %v1795
    %v1809 = vpop.f32.mrf.mxu0
    %v1810 = vadd.f32 0.0, %v1809
    %v1811 = vpop.f32.mrf.mxu0
    %1812 = vdwg.mxu0
    %1813 = vrot.lane.b32.xlu0 %v1710, 112
    %v1814 = vpop.permute.xlu0 %1813
    %1815 = vrot.lane.b32.xlu0 %v1710, 80
    %v1816 = vpop.permute.xlu0 %1815
    %v1818 = vsel %vm120, %v1814, 0
    %v1821 = vsel %vm120, %v1816, 0
    %1823 = vmatpush.bf16.xpose.msra.mxu0 0
    %1824 = vmatpush.bf16.xpose.msra.mxu0 0
    %1825 = vmatpush.bf16.xpose.msra.mxu0 0
    %1826 = vmatpush.bf16.xpose.msra.mxu0 0
    %1827 = vmatpush.bf16.xpose.msra.mxu0 0
    %1828 = vmatpush.bf16.xpose.msra.mxu0 0
    %1829 = vmatpush.bf16.xpose.msra.mxu0 0
    %1830 = vmatpush.bf16.xpose.msra.mxu0 %v1821
    %1831 = vmatmul.bf16.gmra.mxu0 %v1818
    %v1832 = vpop.f32.mrf.mxu0
    %v1833 = vadd.f32 0.0, %v1832
    %v1834 = vpop.f32.mrf.mxu0
    %1835 = vdwg.mxu0
    %v1836 = vmul.f32 %v1833, 1.442695
    %v1837 = vpow.pop %v1836
    %v1838 = vsel %vm120, %v1837, 0.0
    %1839 = vadd.xlane.f32.xlu0 %v1838
    %v1840 = vpop.xlane.xlu0 %1839
    %v1841 = vrcp.pop %v1840
    %v1842 = vmul.f32 %v1837, %v1841
    %v1843 = vpack.c.bf16 %v1842, %v1842
    %1844 = vrot.lane.b32.xlu0 %v1710, 48
    %v1845 = vpop.permute.xlu0 %1844
    %v1847 = vsel %vm120, %v1843, 0
    %v1850 = vsel %vm153, %v1845, 0
    %1852 = vmatpush.bf16.msra.mxu0 0
    %1853 = vmatpush.bf16.msra.mxu0 0
    %1854 = vmatpush.bf16.msra.mxu0 0
    %1855 = vmatpush.bf16.msra.mxu0 0
    %1856 = vmatpush.bf16.msra.mxu0 0
    %1857 = vmatpush.bf16.msra.mxu0 0
    %1858 = vmatpush.bf16.msra.mxu0 0
    %1859 = vmatpush.bf16.msra.mxu0 %v1850
    %1860 = vmatmul.bf16.gmra.mxu0 %v1847
    %v1861 = vpop.f32.mrf.mxu0
    %v1862 = vadd.f32 0.0, %v1861
    %v1863 = vpop.f32.mrf.mxu0
    %1864 = vdwg.mxu0
    %1865 = vrot.lane.b32.xlu0 %v1710, 104
    %v1866 = vpop.permute.xlu0 %1865
    %1867 = vrot.lane.b32.xlu0 %v1710, 72
    %v1868 = vpop.permute.xlu0 %1867
    %v1870 = vsel %vm120, %v1866, 0
    %v1873 = vsel %vm120, %v1868, 0
    %1875 = vmatpush.bf16.xpose.msra.mxu0 0
    %1876 = vmatpush.bf16.xpose.msra.mxu0 0
    %1877 = vmatpush.bf16.xpose.msra.mxu0 0
    %1878 = vmatpush.bf16.xpose.msra.mxu0 0
    %1879 = vmatpush.bf16.xpose.msra.mxu0 0
    %1880 = vmatpush.bf16.xpose.msra.mxu0 0
    %1881 = vmatpush.bf16.xpose.msra.mxu0 0
    %1882 = vmatpush.bf16.xpose.msra.mxu0 %v1873
    %1883 = vmatmul.bf16.gmra.mxu0 %v1870
    %v1884 = vpop.f32.mrf.mxu0
    %v1885 = vadd.f32 0.0, %v1884
    %v1886 = vpop.f32.mrf.mxu0
    %1887 = vdwg.mxu0
    %v1888 = vmul.f32 %v1885, 1.442695
    %v1889 = vpow.pop %v1888
    %v1890 = vsel %vm120, %v1889, 0.0
    %1891 = vadd.xlane.f32.xlu0 %v1890
    %v1892 = vpop.xlane.xlu0 %1891
    %v1893 = vrcp.pop %v1892
    %v1894 = vmul.f32 %v1889, %v1893
    %v1895 = vpack.c.bf16 %v1894, %v1894
    %1896 = vrot.lane.b32.xlu0 %v1710, 40
    %v1897 = vpop.permute.xlu0 %1896
    %v1899 = vsel %vm120, %v1895, 0
    %v1902 = vsel %vm153, %v1897, 0
    %1904 = vmatpush.bf16.msra.mxu0 0
    %1905 = vmatpush.bf16.msra.mxu0 0
    %1906 = vmatpush.bf16.msra.mxu0 0
    %1907 = vmatpush.bf16.msra.mxu0 0
    %1908 = vmatpush.bf16.msra.mxu0 0
    %1909 = vmatpush.bf16.msra.mxu0 0
    %1910 = vmatpush.bf16.msra.mxu0 0
    %1911 = vmatpush.bf16.msra.mxu0 %v1902
    %1912 = vmatmul.bf16.gmra.mxu0 %v1899
    %v1913 = vpop.f32.mrf.mxu0
    %v1914 = vadd.f32 0.0, %v1913
    %v1915 = vpop.f32.mrf.mxu0
    %1916 = vdwg.mxu0
    %1918 = vrot.lane.b32.xlu0 %v1810, 8
    %v1919 = vpop.permute.xlu0 %1918
    %1922 = vrot.lane.b32.xlu0 %v1862, 16
    %v1923 = vpop.permute.xlu0 %1922
    %1926 = vrot.lane.b32.xlu0 %v1914, 24
    %v1927 = vpop.permute.xlu0 %1926
    %v1929 = vsel %vm120, %v1758, %v1919
    %v1930 = vsel %vm339, %v1929, %v1923
    %v1931 = vsel %vm341, %v1930, %v1927
    %v1932 = vpack.c.bf16 %v1931, %v1931
    %v1934 = vsel %vm97, %v1932, 0
    %1936 = vmatpush.bf16.msra.mxu0 0
    %1937 = vmatpush.bf16.msra.mxu0 0
    %1938 = vmatpush.bf16.msra.mxu0 0
    %1939 = vmatpush.bf16.msra.mxu0 0
    %1940 = vmatpush.bf16.msra.mxu0 0
    %1941 = vmatpush.bf16.msra.mxu0 0
    %1942 = vmatpush.bf16.msra.mxu0 %v353
    %1943 = vmatpush.bf16.msra.mxu0 %v352
    %1944 = vmatmul.bf16.gmra.mxu0 %v1934
    %v1945 = vpop.f32.mrf.mxu0
    %v1946 = vadd.f32 %v81, %v1945
    %v1947 = vpop.f32.mrf.mxu0
    %1948 = vdwg.mxu0
    %v1949 = vtanh.pop %v1946
    %v1950 = vmul.f32 %v1949, 0.33333334
    %v1951 = vadd.f32 %v1165, %v1950
    %v1952 = vpack.c.bf16 %v1951, %v1951
    %v1954 = vsel %vm97, %v1952, 0
    %1956 = vmatpush.bf16.msra.mxu0 0
    %1957 = vmatpush.bf16.msra.mxu0 0
    %1958 = vmatpush.bf16.msra.mxu0 0
    %1959 = vmatpush.bf16.msra.mxu0 0
    %1960 = vmatpush.bf16.msra.mxu0 0
    %1961 = vmatpush.bf16.msra.mxu0 0
    %1962 = vmatpush.bf16.msra.mxu0 %v94
    %1963 = vmatpush.bf16.msra.mxu0 %v93
    %1964 = vmatmul.bf16.gmra.mxu0 %v1954
    %v1965 = vpop.f32.mrf.mxu0
    %v1966 = vadd.f32 %v77, %v1965
    %v1967 = vpop.f32.mrf.mxu0
    %1968 = vdwg.mxu0
    %v1969 = vpack.c.bf16 %v1966, %v1966
    %v1971 = vunpack.c.l.b16 %v1969
    %v1972 = vpack.c.b16 %v1971, %v1971
    %1973 = vrot.lane.b32.xlu0 %v1972, 96
    %v1974 = vpop.permute.xlu0 %1973
    %v1976 = vsel %vm120, %v1969, 0
    %v1979 = vsel %vm120, %v1974, 0
    %1981 = vmatpush.bf16.xpose.msra.mxu0 0
    %1982 = vmatpush.bf16.xpose.msra.mxu0 0
    %1983 = vmatpush.bf16.xpose.msra.mxu0 0
    %1984 = vmatpush.bf16.xpose.msra.mxu0 0
    %1985 = vmatpush.bf16.xpose.msra.mxu0 0
    %1986 = vmatpush.bf16.xpose.msra.mxu0 0
    %1987 = vmatpush.bf16.xpose.msra.mxu0 0
    %1988 = vmatpush.bf16.xpose.msra.mxu0 %v1979
    %1989 = vmatmul.bf16.gmra.mxu0 %v1976
    %v1990 = vpop.f32.mrf.mxu0
    %v1991 = vadd.f32 0.0, %v1990
    %v1992 = vpop.f32.mrf.mxu0
    %1993 = vdwg.mxu0
    %v1994 = vmul.f32 %v1991, 1.442695
    %v1995 = vpow.pop %v1994
    %v1996 = vsel %vm120, %v1995, 0.0
    %1997 = vadd.xlane.f32.xlu0 %v1996
    %v1998 = vpop.xlane.xlu0 %1997
    %v1999 = vrcp.pop %v1998
    %v2000 = vmul.f32 %v1995, %v1999
    %v2001 = vpack.c.bf16 %v2000, %v2000
    %2002 = vrot.lane.b32.xlu0 %v1972, 64
    %v2003 = vpop.permute.xlu0 %2002
    %v2005 = vsel %vm120, %v2001, 0
    %v2008 = vsel %vm153, %v2003, 0
    %2010 = vmatpush.bf16.msra.mxu0 0
    %2011 = vmatpush.bf16.msra.mxu0 0
    %2012 = vmatpush.bf16.msra.mxu0 0
    %2013 = vmatpush.bf16.msra.mxu0 0
    %2014 = vmatpush.bf16.msra.mxu0 0
    %2015 = vmatpush.bf16.msra.mxu0 0
    %2016 = vmatpush.bf16.msra.mxu0 0
    %2017 = vmatpush.bf16.msra.mxu0 %v2008
    %2018 = vmatmul.bf16.gmra.mxu0 %v2005
    %v2019 = vpop.f32.mrf.mxu0
    %v2020 = vadd.f32 0.0, %v2019
    %v2021 = vpop.f32.mrf.mxu0
    %2022 = vdwg.mxu0
    %2023 = vrot.lane.b32.xlu0 %v1972, 120
    %v2024 = vpop.permute.xlu0 %2023
    %2025 = vrot.lane.b32.xlu0 %v1972, 88
    %v2026 = vpop.permute.xlu0 %2025
    %v2028 = vsel %vm120, %v2024, 0
    %v2031 = vsel %vm120, %v2026, 0
    %2033 = vmatpush.bf16.xpose.msra.mxu0 0
    %2034 = vmatpush.bf16.xpose.msra.mxu0 0
    %2035 = vmatpush.bf16.xpose.msra.mxu0 0
    %2036 = vmatpush.bf16.xpose.msra.mxu0 0
    %2037 = vmatpush.bf16.xpose.msra.mxu0 0
    %2038 = vmatpush.bf16.xpose.msra.mxu0 0
    %2039 = vmatpush.bf16.xpose.msra.mxu0 0
    %2040 = vmatpush.bf16.xpose.msra.mxu0 %v2031
    %2041 = vmatmul.bf16.gmra.mxu0 %v2028
    %v2042 = vpop.f32.mrf.mxu0
    %v2043 = vadd.f32 0.0, %v2042
    %v2044 = vpop.f32.mrf.mxu0
    %2045 = vdwg.mxu0
    %v2046 = vmul.f32 %v2043, 1.442695
    %v2047 = vpow.pop %v2046
    %v2048 = vsel %vm120, %v2047, 0.0
    %2049 = vadd.xlane.f32.xlu0 %v2048
    %v2050 = vpop.xlane.xlu0 %2049
    %v2051 = vrcp.pop %v2050
    %v2052 = vmul.f32 %v2047, %v2051
    %v2053 = vpack.c.bf16 %v2052, %v2052
    %2054 = vrot.lane.b32.xlu0 %v1972, 56
    %v2055 = vpop.permute.xlu0 %2054
    %v2057 = vsel %vm120, %v2053, 0
    %v2060 = vsel %vm153, %v2055, 0
    %2062 = vmatpush.bf16.msra.mxu0 0
    %2063 = vmatpush.bf16.msra.mxu0 0
    %2064 = vmatpush.bf16.msra.mxu0 0
    %2065 = vmatpush.bf16.msra.mxu0 0
    %2066 = vmatpush.bf16.msra.mxu0 0
    %2067 = vmatpush.bf16.msra.mxu0 0
    %2068 = vmatpush.bf16.msra.mxu0 0
    %2069 = vmatpush.bf16.msra.mxu0 %v2060
    %2070 = vmatmul.bf16.gmra.mxu0 %v2057
    %v2071 = vpop.f32.mrf.mxu0
    %v2072 = vadd.f32 0.0, %v2071
    %v2073 = vpop.f32.mrf.mxu0
    %2074 = vdwg.mxu0
    %2075 = vrot.lane.b32.xlu0 %v1972, 112
    %v2076 = vpop.permute.xlu0 %2075
    %2077 = vrot.lane.b32.xlu0 %v1972, 80
    %v2078 = vpop.permute.xlu0 %2077
    %v2080 = vsel %vm120, %v2076, 0
    %v2083 = vsel %vm120, %v2078, 0
    %2085 = vmatpush.bf16.xpose.msra.mxu0 0
    %2086 = vmatpush.bf16.xpose.msra.mxu0 0
    %2087 = vmatpush.bf16.xpose.msra.mxu0 0
    %2088 = vmatpush.bf16.xpose.msra.mxu0 0
    %2089 = vmatpush.bf16.xpose.msra.mxu0 0
    %2090 = vmatpush.bf16.xpose.msra.mxu0 0
    %2091 = vmatpush.bf16.xpose.msra.mxu0 0
    %2092 = vmatpush.bf16.xpose.msra.mxu0 %v2083
    %2093 = vmatmul.bf16.gmra.mxu0 %v2080
    %v2094 = vpop.f32.mrf.mxu0
    %v2095 = vadd.f32 0.0, %v2094
    %v2096 = vpop.f32.mrf.mxu0
    %2097 = vdwg.mxu0
    %v2098 = vmul.f32 %v2095, 1.442695
    %v2099 = vpow.pop %v2098
    %v2100 = vsel %vm120, %v2099, 0.0
    %2101 = vadd.xlane.f32.xlu0 %v2100
    %v2102 = vpop.xlane.xlu0 %2101
    %v2103 = vrcp.pop %v2102
    %v2104 = vmul.f32 %v2099, %v2103
    %v2105 = vpack.c.bf16 %v2104, %v2104
    %2106 = vrot.lane.b32.xlu0 %v1972, 48
    %v2107 = vpop.permute.xlu0 %2106
    %v2109 = vsel %vm120, %v2105, 0
    %v2112 = vsel %vm153, %v2107, 0
    %2114 = vmatpush.bf16.msra.mxu0 0
    %2115 = vmatpush.bf16.msra.mxu0 0
    %2116 = vmatpush.bf16.msra.mxu0 0
    %2117 = vmatpush.bf16.msra.mxu0 0
    %2118 = vmatpush.bf16.msra.mxu0 0
    %2119 = vmatpush.bf16.msra.mxu0 0
    %2120 = vmatpush.bf16.msra.mxu0 0
    %2121 = vmatpush.bf16.msra.mxu0 %v2112
    %2122 = vmatmul.bf16.gmra.mxu0 %v2109
    %v2123 = vpop.f32.mrf.mxu0
    %v2124 = vadd.f32 0.0, %v2123
    %v2125 = vpop.f32.mrf.mxu0
    %2126 = vdwg.mxu0
    %2127 = vrot.lane.b32.xlu0 %v1972, 104
    %v2128 = vpop.permute.xlu0 %2127
    %2129 = vrot.lane.b32.xlu0 %v1972, 72
    %v2130 = vpop.permute.xlu0 %2129
    %v2132 = vsel %vm120, %v2128, 0
    %v2135 = vsel %vm120, %v2130, 0
    %2137 = vmatpush.bf16.xpose.msra.mxu0 0
    %2138 = vmatpush.bf16.xpose.msra.mxu0 0
    %2139 = vmatpush.bf16.xpose.msra.mxu0 0
    %2140 = vmatpush.bf16.xpose.msra.mxu0 0
    %2141 = vmatpush.bf16.xpose.msra.mxu0 0
    %2142 = vmatpush.bf16.xpose.msra.mxu0 0
    %2143 = vmatpush.bf16.xpose.msra.mxu0 0
    %2144 = vmatpush.bf16.xpose.msra.mxu0 %v2135
    %2145 = vmatmul.bf16.gmra.mxu0 %v2132
    %v2146 = vpop.f32.mrf.mxu0
    %v2147 = vadd.f32 0.0, %v2146
    %v2148 = vpop.f32.mrf.mxu0
    %2149 = vdwg.mxu0
    %v2150 = vmul.f32 %v2147, 1.442695
    %v2151 = vpow.pop %v2150
    %v2152 = vsel %vm120, %v2151, 0.0
    %2153 = vadd.xlane.f32.xlu0 %v2152
    %v2154 = vpop.xlane.xlu0 %2153
    %v2155 = vrcp.pop %v2154
    %v2156 = vmul.f32 %v2151, %v2155
    %v2157 = vpack.c.bf16 %v2156, %v2156
    %2158 = vrot.lane.b32.xlu0 %v1972, 40
    %v2159 = vpop.permute.xlu0 %2158
    %v2161 = vsel %vm120, %v2157, 0
    %v2164 = vsel %vm153, %v2159, 0
    %2166 = vmatpush.bf16.msra.mxu0 0
    %2167 = vmatpush.bf16.msra.mxu0 0
    %2168 = vmatpush.bf16.msra.mxu0 0
    %2169 = vmatpush.bf16.msra.mxu0 0
    %2170 = vmatpush.bf16.msra.mxu0 0
    %2171 = vmatpush.bf16.msra.mxu0 0
    %2172 = vmatpush.bf16.msra.mxu0 0
    %2173 = vmatpush.bf16.msra.mxu0 %v2164
    %2174 = vmatmul.bf16.gmra.mxu0 %v2161
    %v2175 = vpop.f32.mrf.mxu0
    %v2176 = vadd.f32 0.0, %v2175
    %v2177 = vpop.f32.mrf.mxu0
    %2178 = vdwg.mxu0
    %2180 = vrot.lane.b32.xlu0 %v2072, 8
    %v2181 = vpop.permute.xlu0 %2180
    %2184 = vrot.lane.b32.xlu0 %v2124, 16
    %v2185 = vpop.permute.xlu0 %2184
    %2188 = vrot.lane.b32.xlu0 %v2176, 24
    %v2189 = vpop.permute.xlu0 %2188
    %v2191 = vsel %vm120, %v2020, %v2181
    %v2192 = vsel %vm339, %v2191, %v2185
    %v2193 = vsel %vm341, %v2192, %v2189
    %v2194 = vpack.c.bf16 %v2193, %v2193
    %v2196 = vsel %vm97, %v2194, 0
    %2198 = vmatpush.bf16.msra.mxu0 0
    %2199 = vmatpush.bf16.msra.mxu0 0
    %2200 = vmatpush.bf16.msra.mxu0 0
    %2201 = vmatpush.bf16.msra.mxu0 0
    %2202 = vmatpush.bf16.msra.mxu0 0
    %2203 = vmatpush.bf16.msra.mxu0 0
    %2204 = vmatpush.bf16.msra.mxu0 %v353
    %2205 = vmatpush.bf16.msra.mxu0 %v352
    %2206 = vmatmul.bf16.gmra.mxu0 %v2196
    %v2207 = vpop.f32.mrf.mxu0
    %v2208 = vadd.f32 %v81, %v2207
    %v2209 = vpop.f32.mrf.mxu0
    %2210 = vdwg.mxu0
    %v2211 = vtanh.pop %v2208
    %v2212 = vmul.f32 %v1687, 2.0
    %v2213 = vadd.f32 %v1425, %v2212
    %v2214 = vmul.f32 %v1949, 2.0
    %v2215 = vadd.f32 %v2213, %v2214
    %v2216 = vadd.f32 %v2215, %v2211
    %v2217 = vmul.f32 %v2216, 0.055555556
    %v2218 = vadd.f32 %v1165, %v2217
    %v2219 = vpack.c.bf16 %v2218, %v2218
    %v2221 = vsel %vm97, %v2219, 0
    %2223 = vmatpush.bf16.msra.mxu0 0
    %2224 = vmatpush.bf16.msra.mxu0 0
    %2225 = vmatpush.bf16.msra.mxu0 0
    %2226 = vmatpush.bf16.msra.mxu0 0
    %2227 = vmatpush.bf16.msra.mxu0 0
    %2228 = vmatpush.bf16.msra.mxu0 0
    %2229 = vmatpush.bf16.msra.mxu0 %v94
    %2230 = vmatpush.bf16.msra.mxu0 %v93
    %2231 = vmatmul.bf16.gmra.mxu0 %v2221
    %v2232 = vpop.f32.mrf.mxu0
    %v2233 = vadd.f32 %v77, %v2232
    %v2234 = vpop.f32.mrf.mxu0
    %2235 = vdwg.mxu0
    %v2236 = vpack.c.bf16 %v2233, %v2233
    %v2238 = vunpack.c.l.b16 %v2236
    %v2239 = vpack.c.b16 %v2238, %v2238
    %2240 = vrot.lane.b32.xlu0 %v2239, 96
    %v2241 = vpop.permute.xlu0 %2240
    %v2243 = vsel %vm120, %v2236, 0
    %v2246 = vsel %vm120, %v2241, 0
    %2248 = vmatpush.bf16.xpose.msra.mxu0 0
    %2249 = vmatpush.bf16.xpose.msra.mxu0 0
    %2250 = vmatpush.bf16.xpose.msra.mxu0 0
    %2251 = vmatpush.bf16.xpose.msra.mxu0 0
    %2252 = vmatpush.bf16.xpose.msra.mxu0 0
    %2253 = vmatpush.bf16.xpose.msra.mxu0 0
    %2254 = vmatpush.bf16.xpose.msra.mxu0 0
    %2255 = vmatpush.bf16.xpose.msra.mxu0 %v2246
    %2256 = vmatmul.bf16.gmra.mxu0 %v2243
    %v2257 = vpop.f32.mrf.mxu0
    %v2258 = vadd.f32 0.0, %v2257
    %v2259 = vpop.f32.mrf.mxu0
    %2260 = vdwg.mxu0
    %v2261 = vmul.f32 %v2258, 1.442695
    %v2262 = vpow.pop %v2261
    %v2263 = vsel %vm120, %v2262, 0.0
    %2264 = vadd.xlane.f32.xlu0 %v2263
    %v2265 = vpop.xlane.xlu0 %2264
    %v2266 = vrcp.pop %v2265
    %v2267 = vmul.f32 %v2262, %v2266
    %v2268 = vpack.c.bf16 %v2267, %v2267
    %2269 = vrot.lane.b32.xlu0 %v2239, 64
    %v2270 = vpop.permute.xlu0 %2269
    %v2272 = vsel %vm120, %v2268, 0
    %v2275 = vsel %vm153, %v2270, 0
    %2277 = vmatpush.bf16.msra.mxu0 0
    %2278 = vmatpush.bf16.msra.mxu0 0
    %2279 = vmatpush.bf16.msra.mxu0 0
    %2280 = vmatpush.bf16.msra.mxu0 0
    %2281 = vmatpush.bf16.msra.mxu0 0
    %2282 = vmatpush.bf16.msra.mxu0 0
    %2283 = vmatpush.bf16.msra.mxu0 0
    %2284 = vmatpush.bf16.msra.mxu0 %v2275
    %2285 = vmatmul.bf16.gmra.mxu0 %v2272
    %v2286 = vpop.f32.mrf.mxu0
    %v2287 = vadd.f32 0.0, %v2286
    %v2288 = vpop.f32.mrf.mxu0
    %2289 = vdwg.mxu0
    %2290 = vrot.lane.b32.xlu0 %v2239, 120
    %v2291 = vpop.permute.xlu0 %2290
    %2292 = vrot.lane.b32.xlu0 %v2239, 88
    %v2293 = vpop.permute.xlu0 %2292
    %v2295 = vsel %vm120, %v2291, 0
    %v2298 = vsel %vm120, %v2293, 0
    %2300 = vmatpush.bf16.xpose.msra.mxu0 0
    %2301 = vmatpush.bf16.xpose.msra.mxu0 0
    %2302 = vmatpush.bf16.xpose.msra.mxu0 0
    %2303 = vmatpush.bf16.xpose.msra.mxu0 0
    %2304 = vmatpush.bf16.xpose.msra.mxu0 0
    %2305 = vmatpush.bf16.xpose.msra.mxu0 0
    %2306 = vmatpush.bf16.xpose.msra.mxu0 0
    %2307 = vmatpush.bf16.xpose.msra.mxu0 %v2298
    %2308 = vmatmul.bf16.gmra.mxu0 %v2295
    %v2309 = vpop.f32.mrf.mxu0
    %v2310 = vadd.f32 0.0, %v2309
    %v2311 = vpop.f32.mrf.mxu0
    %2312 = vdwg.mxu0
    %v2313 = vmul.f32 %v2310, 1.442695
    %v2314 = vpow.pop %v2313
    %v2315 = vsel %vm120, %v2314, 0.0
    %2316 = vadd.xlane.f32.xlu0 %v2315
    %v2317 = vpop.xlane.xlu0 %2316
    %v2318 = vrcp.pop %v2317
    %v2319 = vmul.f32 %v2314, %v2318
    %v2320 = vpack.c.bf16 %v2319, %v2319
    %2321 = vrot.lane.b32.xlu0 %v2239, 56
    %v2322 = vpop.permute.xlu0 %2321
    %v2324 = vsel %vm120, %v2320, 0
    %v2327 = vsel %vm153, %v2322, 0
    %2329 = vmatpush.bf16.msra.mxu0 0
    %2330 = vmatpush.bf16.msra.mxu0 0
    %2331 = vmatpush.bf16.msra.mxu0 0
    %2332 = vmatpush.bf16.msra.mxu0 0
    %2333 = vmatpush.bf16.msra.mxu0 0
    %2334 = vmatpush.bf16.msra.mxu0 0
    %2335 = vmatpush.bf16.msra.mxu0 0
    %2336 = vmatpush.bf16.msra.mxu0 %v2327
    %2337 = vmatmul.bf16.gmra.mxu0 %v2324
    %v2338 = vpop.f32.mrf.mxu0
    %v2339 = vadd.f32 0.0, %v2338
    %v2340 = vpop.f32.mrf.mxu0
    %2341 = vdwg.mxu0
    %2342 = vrot.lane.b32.xlu0 %v2239, 112
    %v2343 = vpop.permute.xlu0 %2342
    %2344 = vrot.lane.b32.xlu0 %v2239, 80
    %v2345 = vpop.permute.xlu0 %2344
    %v2347 = vsel %vm120, %v2343, 0
    %v2350 = vsel %vm120, %v2345, 0
    %2352 = vmatpush.bf16.xpose.msra.mxu0 0
    %2353 = vmatpush.bf16.xpose.msra.mxu0 0
    %2354 = vmatpush.bf16.xpose.msra.mxu0 0
    %2355 = vmatpush.bf16.xpose.msra.mxu0 0
    %2356 = vmatpush.bf16.xpose.msra.mxu0 0
    %2357 = vmatpush.bf16.xpose.msra.mxu0 0
    %2358 = vmatpush.bf16.xpose.msra.mxu0 0
    %2359 = vmatpush.bf16.xpose.msra.mxu0 %v2350
    %2360 = vmatmul.bf16.gmra.mxu0 %v2347
    %v2361 = vpop.f32.mrf.mxu0
    %v2362 = vadd.f32 0.0, %v2361
    %v2363 = vpop.f32.mrf.mxu0
    %2364 = vdwg.mxu0
    %v2365 = vmul.f32 %v2362, 1.442695
    %v2366 = vpow.pop %v2365
    %v2367 = vsel %vm120, %v2366, 0.0
    %2368 = vadd.xlane.f32.xlu0 %v2367
    %v2369 = vpop.xlane.xlu0 %2368
    %v2370 = vrcp.pop %v2369
    %v2371 = vmul.f32 %v2366, %v2370
    %v2372 = vpack.c.bf16 %v2371, %v2371
    %2373 = vrot.lane.b32.xlu0 %v2239, 48
    %v2374 = vpop.permute.xlu0 %2373
    %v2376 = vsel %vm120, %v2372, 0
    %v2379 = vsel %vm153, %v2374, 0
    %2381 = vmatpush.bf16.msra.mxu0 0
    %2382 = vmatpush.bf16.msra.mxu0 0
    %2383 = vmatpush.bf16.msra.mxu0 0
    %2384 = vmatpush.bf16.msra.mxu0 0
    %2385 = vmatpush.bf16.msra.mxu0 0
    %2386 = vmatpush.bf16.msra.mxu0 0
    %2387 = vmatpush.bf16.msra.mxu0 0
    %2388 = vmatpush.bf16.msra.mxu0 %v2379
    %2389 = vmatmul.bf16.gmra.mxu0 %v2376
    %v2390 = vpop.f32.mrf.mxu0
    %v2391 = vadd.f32 0.0, %v2390
    %v2392 = vpop.f32.mrf.mxu0
    %2393 = vdwg.mxu0
    %2394 = vrot.lane.b32.xlu0 %v2239, 104
    %v2395 = vpop.permute.xlu0 %2394
    %2396 = vrot.lane.b32.xlu0 %v2239, 72
    %v2397 = vpop.permute.xlu0 %2396
    %v2399 = vsel %vm120, %v2395, 0
    %v2402 = vsel %vm120, %v2397, 0
    %2404 = vmatpush.bf16.xpose.msra.mxu0 0
    %2405 = vmatpush.bf16.xpose.msra.mxu0 0
    %2406 = vmatpush.bf16.xpose.msra.mxu0 0
    %2407 = vmatpush.bf16.xpose.msra.mxu0 0
    %2408 = vmatpush.bf16.xpose.msra.mxu0 0
    %2409 = vmatpush.bf16.xpose.msra.mxu0 0
    %2410 = vmatpush.bf16.xpose.msra.mxu0 0
    %2411 = vmatpush.bf16.xpose.msra.mxu0 %v2402
    %2412 = vmatmul.bf16.gmra.mxu0 %v2399
    %v2413 = vpop.f32.mrf.mxu0
    %v2414 = vadd.f32 0.0, %v2413
    %v2415 = vpop.f32.mrf.mxu0
    %2416 = vdwg.mxu0
    %v2417 = vmul.f32 %v2414, 1.442695
    %v2418 = vpow.pop %v2417
    %v2419 = vsel %vm120, %v2418, 0.0
    %2420 = vadd.xlane.f32.xlu0 %v2419
    %v2421 = vpop.xlane.xlu0 %2420
    %v2422 = vrcp.pop %v2421
    %v2423 = vmul.f32 %v2418, %v2422
    %v2424 = vpack.c.bf16 %v2423, %v2423
    %2425 = vrot.lane.b32.xlu0 %v2239, 40
    %v2426 = vpop.permute.xlu0 %2425
    %v2428 = vsel %vm120, %v2424, 0
    %v2431 = vsel %vm153, %v2426, 0
    %2433 = vmatpush.bf16.msra.mxu0 0
    %2434 = vmatpush.bf16.msra.mxu0 0
    %2435 = vmatpush.bf16.msra.mxu0 0
    %2436 = vmatpush.bf16.msra.mxu0 0
    %2437 = vmatpush.bf16.msra.mxu0 0
    %2438 = vmatpush.bf16.msra.mxu0 0
    %2439 = vmatpush.bf16.msra.mxu0 0
    %2440 = vmatpush.bf16.msra.mxu0 %v2431
    %2441 = vmatmul.bf16.gmra.mxu0 %v2428
    %v2442 = vpop.f32.mrf.mxu0
    %v2443 = vadd.f32 0.0, %v2442
    %v2444 = vpop.f32.mrf.mxu0
    %2445 = vdwg.mxu0
    %2447 = vrot.lane.b32.xlu0 %v2339, 8
    %v2448 = vpop.permute.xlu0 %2447
    %2451 = vrot.lane.b32.xlu0 %v2391, 16
    %v2452 = vpop.permute.xlu0 %2451
    %2455 = vrot.lane.b32.xlu0 %v2443, 24
    %v2456 = vpop.permute.xlu0 %2455
    %v2458 = vsel %vm120, %v2287, %v2448
    %v2459 = vsel %vm339, %v2458, %v2452
    %v2460 = vsel %vm341, %v2459, %v2456
    %v2461 = vpack.c.bf16 %v2460, %v2460
    %v2463 = vsel %vm97, %v2461, 0
    %2465 = vmatpush.bf16.msra.mxu0 0
    %2466 = vmatpush.bf16.msra.mxu0 0
    %2467 = vmatpush.bf16.msra.mxu0 0
    %2468 = vmatpush.bf16.msra.mxu0 0
    %2469 = vmatpush.bf16.msra.mxu0 0
    %2470 = vmatpush.bf16.msra.mxu0 0
    %2471 = vmatpush.bf16.msra.mxu0 %v353
    %2472 = vmatpush.bf16.msra.mxu0 %v352
    %2473 = vmatmul.bf16.gmra.mxu0 %v2463
    %v2474 = vpop.f32.mrf.mxu0
    %v2475 = vadd.f32 %v81, %v2474
    %v2476 = vpop.f32.mrf.mxu0
    %2477 = vdwg.mxu0
    %v2478 = vtanh.pop %v2475
    %v2479 = vmul.f32 %v2478, 0.16666667
    %v2480 = vadd.f32 %v2218, %v2479
    %v2481 = vpack.c.bf16 %v2480, %v2480
    %v2483 = vsel %vm97, %v2481, 0
    %2485 = vmatpush.bf16.msra.mxu0 0
    %2486 = vmatpush.bf16.msra.mxu0 0
    %2487 = vmatpush.bf16.msra.mxu0 0
    %2488 = vmatpush.bf16.msra.mxu0 0
    %2489 = vmatpush.bf16.msra.mxu0 0
    %2490 = vmatpush.bf16.msra.mxu0 0
    %2491 = vmatpush.bf16.msra.mxu0 %v94
    %2492 = vmatpush.bf16.msra.mxu0 %v93
    %2493 = vmatmul.bf16.gmra.mxu0 %v2483
    %v2494 = vpop.f32.mrf.mxu0
    %v2495 = vadd.f32 %v77, %v2494
    %v2496 = vpop.f32.mrf.mxu0
    %2497 = vdwg.mxu0
    %v2498 = vpack.c.bf16 %v2495, %v2495
    %v2500 = vunpack.c.l.b16 %v2498
    %v2501 = vpack.c.b16 %v2500, %v2500
    %2502 = vrot.lane.b32.xlu0 %v2501, 96
    %v2503 = vpop.permute.xlu0 %2502
    %v2505 = vsel %vm120, %v2498, 0
    %v2508 = vsel %vm120, %v2503, 0
    %2510 = vmatpush.bf16.xpose.msra.mxu0 0
    %2511 = vmatpush.bf16.xpose.msra.mxu0 0
    %2512 = vmatpush.bf16.xpose.msra.mxu0 0
    %2513 = vmatpush.bf16.xpose.msra.mxu0 0
    %2514 = vmatpush.bf16.xpose.msra.mxu0 0
    %2515 = vmatpush.bf16.xpose.msra.mxu0 0
    %2516 = vmatpush.bf16.xpose.msra.mxu0 0
    %2517 = vmatpush.bf16.xpose.msra.mxu0 %v2508
    %2518 = vmatmul.bf16.gmra.mxu0 %v2505
    %v2519 = vpop.f32.mrf.mxu0
    %v2520 = vadd.f32 0.0, %v2519
    %v2521 = vpop.f32.mrf.mxu0
    %2522 = vdwg.mxu0
    %v2523 = vmul.f32 %v2520, 1.442695
    %v2524 = vpow.pop %v2523
    %v2525 = vsel %vm120, %v2524, 0.0
    %2526 = vadd.xlane.f32.xlu0 %v2525
    %v2527 = vpop.xlane.xlu0 %2526
    %v2528 = vrcp.pop %v2527
    %v2529 = vmul.f32 %v2524, %v2528
    %v2530 = vpack.c.bf16 %v2529, %v2529
    %2531 = vrot.lane.b32.xlu0 %v2501, 64
    %v2532 = vpop.permute.xlu0 %2531
    %v2534 = vsel %vm120, %v2530, 0
    %v2537 = vsel %vm153, %v2532, 0
    %2539 = vmatpush.bf16.msra.mxu0 0
    %2540 = vmatpush.bf16.msra.mxu0 0
    %2541 = vmatpush.bf16.msra.mxu0 0
    %2542 = vmatpush.bf16.msra.mxu0 0
    %2543 = vmatpush.bf16.msra.mxu0 0
    %2544 = vmatpush.bf16.msra.mxu0 0
    %2545 = vmatpush.bf16.msra.mxu0 0
    %2546 = vmatpush.bf16.msra.mxu0 %v2537
    %2547 = vmatmul.bf16.gmra.mxu0 %v2534
    %v2548 = vpop.f32.mrf.mxu0
    %v2549 = vadd.f32 0.0, %v2548
    %v2550 = vpop.f32.mrf.mxu0
    %2551 = vdwg.mxu0
    %2552 = vrot.lane.b32.xlu0 %v2501, 120
    %v2553 = vpop.permute.xlu0 %2552
    %2554 = vrot.lane.b32.xlu0 %v2501, 88
    %v2555 = vpop.permute.xlu0 %2554
    %v2557 = vsel %vm120, %v2553, 0
    %v2560 = vsel %vm120, %v2555, 0
    %2562 = vmatpush.bf16.xpose.msra.mxu0 0
    %2563 = vmatpush.bf16.xpose.msra.mxu0 0
    %2564 = vmatpush.bf16.xpose.msra.mxu0 0
    %2565 = vmatpush.bf16.xpose.msra.mxu0 0
    %2566 = vmatpush.bf16.xpose.msra.mxu0 0
    %2567 = vmatpush.bf16.xpose.msra.mxu0 0
    %2568 = vmatpush.bf16.xpose.msra.mxu0 0
    %2569 = vmatpush.bf16.xpose.msra.mxu0 %v2560
    %2570 = vmatmul.bf16.gmra.mxu0 %v2557
    %v2571 = vpop.f32.mrf.mxu0
    %v2572 = vadd.f32 0.0, %v2571
    %v2573 = vpop.f32.mrf.mxu0
    %2574 = vdwg.mxu0
    %v2575 = vmul.f32 %v2572, 1.442695
    %v2576 = vpow.pop %v2575
    %v2577 = vsel %vm120, %v2576, 0.0
    %2578 = vadd.xlane.f32.xlu0 %v2577
    %v2579 = vpop.xlane.xlu0 %2578
    %v2580 = vrcp.pop %v2579
    %v2581 = vmul.f32 %v2576, %v2580
    %v2582 = vpack.c.bf16 %v2581, %v2581
    %2583 = vrot.lane.b32.xlu0 %v2501, 56
    %v2584 = vpop.permute.xlu0 %2583
    %v2586 = vsel %vm120, %v2582, 0
    %v2589 = vsel %vm153, %v2584, 0
    %2591 = vmatpush.bf16.msra.mxu0 0
    %2592 = vmatpush.bf16.msra.mxu0 0
    %2593 = vmatpush.bf16.msra.mxu0 0
    %2594 = vmatpush.bf16.msra.mxu0 0
    %2595 = vmatpush.bf16.msra.mxu0 0
    %2596 = vmatpush.bf16.msra.mxu0 0
    %2597 = vmatpush.bf16.msra.mxu0 0
    %2598 = vmatpush.bf16.msra.mxu0 %v2589
    %2599 = vmatmul.bf16.gmra.mxu0 %v2586
    %v2600 = vpop.f32.mrf.mxu0
    %v2601 = vadd.f32 0.0, %v2600
    %v2602 = vpop.f32.mrf.mxu0
    %2603 = vdwg.mxu0
    %2604 = vrot.lane.b32.xlu0 %v2501, 112
    %v2605 = vpop.permute.xlu0 %2604
    %2606 = vrot.lane.b32.xlu0 %v2501, 80
    %v2607 = vpop.permute.xlu0 %2606
    %v2609 = vsel %vm120, %v2605, 0
    %v2612 = vsel %vm120, %v2607, 0
    %2614 = vmatpush.bf16.xpose.msra.mxu0 0
    %2615 = vmatpush.bf16.xpose.msra.mxu0 0
    %2616 = vmatpush.bf16.xpose.msra.mxu0 0
    %2617 = vmatpush.bf16.xpose.msra.mxu0 0
    %2618 = vmatpush.bf16.xpose.msra.mxu0 0
    %2619 = vmatpush.bf16.xpose.msra.mxu0 0
    %2620 = vmatpush.bf16.xpose.msra.mxu0 0
    %2621 = vmatpush.bf16.xpose.msra.mxu0 %v2612
    %2622 = vmatmul.bf16.gmra.mxu0 %v2609
    %v2623 = vpop.f32.mrf.mxu0
    %v2624 = vadd.f32 0.0, %v2623
    %v2625 = vpop.f32.mrf.mxu0
    %2626 = vdwg.mxu0
    %v2627 = vmul.f32 %v2624, 1.442695
    %v2628 = vpow.pop %v2627
    %v2629 = vsel %vm120, %v2628, 0.0
    %2630 = vadd.xlane.f32.xlu0 %v2629
    %v2631 = vpop.xlane.xlu0 %2630
    %v2632 = vrcp.pop %v2631
    %v2633 = vmul.f32 %v2628, %v2632
    %v2634 = vpack.c.bf16 %v2633, %v2633
    %2635 = vrot.lane.b32.xlu0 %v2501, 48
    %v2636 = vpop.permute.xlu0 %2635
    %v2638 = vsel %vm120, %v2634, 0
    %v2641 = vsel %vm153, %v2636, 0
    %2643 = vmatpush.bf16.msra.mxu0 0
    %2644 = vmatpush.bf16.msra.mxu0 0
    %2645 = vmatpush.bf16.msra.mxu0 0
    %2646 = vmatpush.bf16.msra.mxu0 0
    %2647 = vmatpush.bf16.msra.mxu0 0
    %2648 = vmatpush.bf16.msra.mxu0 0
    %2649 = vmatpush.bf16.msra.mxu0 0
    %2650 = vmatpush.bf16.msra.mxu0 %v2641
    %2651 = vmatmul.bf16.gmra.mxu0 %v2638
    %v2652 = vpop.f32.mrf.mxu0
    %v2653 = vadd.f32 0.0, %v2652
    %v2654 = vpop.f32.mrf.mxu0
    %2655 = vdwg.mxu0
    %2656 = vrot.lane.b32.xlu0 %v2501, 104
    %v2657 = vpop.permute.xlu0 %2656
    %2658 = vrot.lane.b32.xlu0 %v2501, 72
    %v2659 = vpop.permute.xlu0 %2658
    %v2661 = vsel %vm120, %v2657, 0
    %v2664 = vsel %vm120, %v2659, 0
    %2666 = vmatpush.bf16.xpose.msra.mxu0 0
    %2667 = vmatpush.bf16.xpose.msra.mxu0 0
    %2668 = vmatpush.bf16.xpose.msra.mxu0 0
    %2669 = vmatpush.bf16.xpose.msra.mxu0 0
    %2670 = vmatpush.bf16.xpose.msra.mxu0 0
    %2671 = vmatpush.bf16.xpose.msra.mxu0 0
    %2672 = vmatpush.bf16.xpose.msra.mxu0 0
    %2673 = vmatpush.bf16.xpose.msra.mxu0 %v2664
    %2674 = vmatmul.bf16.gmra.mxu0 %v2661
    %v2675 = vpop.f32.mrf.mxu0
    %v2676 = vadd.f32 0.0, %v2675
    %v2677 = vpop.f32.mrf.mxu0
    %2678 = vdwg.mxu0
    %v2679 = vmul.f32 %v2676, 1.442695
    %v2680 = vpow.pop %v2679
    %v2681 = vsel %vm120, %v2680, 0.0
    %2682 = vadd.xlane.f32.xlu0 %v2681
    %v2683 = vpop.xlane.xlu0 %2682
    %v2684 = vrcp.pop %v2683
    %v2685 = vmul.f32 %v2680, %v2684
    %v2686 = vpack.c.bf16 %v2685, %v2685
    %2687 = vrot.lane.b32.xlu0 %v2501, 40
    %v2688 = vpop.permute.xlu0 %2687
    %v2690 = vsel %vm120, %v2686, 0
    %v2693 = vsel %vm153, %v2688, 0
    %2695 = vmatpush.bf16.msra.mxu0 0
    %2696 = vmatpush.bf16.msra.mxu0 0
    %2697 = vmatpush.bf16.msra.mxu0 0
    %2698 = vmatpush.bf16.msra.mxu0 0
    %2699 = vmatpush.bf16.msra.mxu0 0
    %2700 = vmatpush.bf16.msra.mxu0 0
    %2701 = vmatpush.bf16.msra.mxu0 0
    %2702 = vmatpush.bf16.msra.mxu0 %v2693
    %2703 = vmatmul.bf16.gmra.mxu0 %v2690
    %v2704 = vpop.f32.mrf.mxu0
    %v2705 = vadd.f32 0.0, %v2704
    %v2706 = vpop.f32.mrf.mxu0
    %2707 = vdwg.mxu0
    %2709 = vrot.lane.b32.xlu0 %v2601, 8
    %v2710 = vpop.permute.xlu0 %2709
    %2713 = vrot.lane.b32.xlu0 %v2653, 16
    %v2714 = vpop.permute.xlu0 %2713
    %2717 = vrot.lane.b32.xlu0 %v2705, 24
    %v2718 = vpop.permute.xlu0 %2717
    %v2720 = vsel %vm120, %v2549, %v2710
    %v2721 = vsel %vm339, %v2720, %v2714
    %v2722 = vsel %vm341, %v2721, %v2718
    %v2723 = vpack.c.bf16 %v2722, %v2722
    %v2725 = vsel %vm97, %v2723, 0
    %2727 = vmatpush.bf16.msra.mxu0 0
    %2728 = vmatpush.bf16.msra.mxu0 0
    %2729 = vmatpush.bf16.msra.mxu0 0
    %2730 = vmatpush.bf16.msra.mxu0 0
    %2731 = vmatpush.bf16.msra.mxu0 0
    %2732 = vmatpush.bf16.msra.mxu0 0
    %2733 = vmatpush.bf16.msra.mxu0 %v353
    %2734 = vmatpush.bf16.msra.mxu0 %v352
    %2735 = vmatmul.bf16.gmra.mxu0 %v2725
    %v2736 = vpop.f32.mrf.mxu0
    %v2737 = vadd.f32 %v81, %v2736
    %v2738 = vpop.f32.mrf.mxu0
    %2739 = vdwg.mxu0
    %v2740 = vtanh.pop %v2737
    %v2741 = vmul.f32 %v2740, 0.16666667
    %v2742 = vadd.f32 %v2218, %v2741
    %v2743 = vpack.c.bf16 %v2742, %v2742
    %v2745 = vsel %vm97, %v2743, 0
    %2747 = vmatpush.bf16.msra.mxu0 0
    %2748 = vmatpush.bf16.msra.mxu0 0
    %2749 = vmatpush.bf16.msra.mxu0 0
    %2750 = vmatpush.bf16.msra.mxu0 0
    %2751 = vmatpush.bf16.msra.mxu0 0
    %2752 = vmatpush.bf16.msra.mxu0 0
    %2753 = vmatpush.bf16.msra.mxu0 %v94
    %2754 = vmatpush.bf16.msra.mxu0 %v93
    %2755 = vmatmul.bf16.gmra.mxu0 %v2745
    %v2756 = vpop.f32.mrf.mxu0
    %v2757 = vadd.f32 %v77, %v2756
    %v2758 = vpop.f32.mrf.mxu0
    %2759 = vdwg.mxu0
    %v2760 = vpack.c.bf16 %v2757, %v2757
    %v2762 = vunpack.c.l.b16 %v2760
    %v2763 = vpack.c.b16 %v2762, %v2762
    %2764 = vrot.lane.b32.xlu0 %v2763, 96
    %v2765 = vpop.permute.xlu0 %2764
    %v2767 = vsel %vm120, %v2760, 0
    %v2770 = vsel %vm120, %v2765, 0
    %2772 = vmatpush.bf16.xpose.msra.mxu0 0
    %2773 = vmatpush.bf16.xpose.msra.mxu0 0
    %2774 = vmatpush.bf16.xpose.msra.mxu0 0
    %2775 = vmatpush.bf16.xpose.msra.mxu0 0
    %2776 = vmatpush.bf16.xpose.msra.mxu0 0
    %2777 = vmatpush.bf16.xpose.msra.mxu0 0
    %2778 = vmatpush.bf16.xpose.msra.mxu0 0
    %2779 = vmatpush.bf16.xpose.msra.mxu0 %v2770
    %2780 = vmatmul.bf16.gmra.mxu0 %v2767
    %v2781 = vpop.f32.mrf.mxu0
    %v2782 = vadd.f32 0.0, %v2781
    %v2783 = vpop.f32.mrf.mxu0
    %2784 = vdwg.mxu0
    %v2785 = vmul.f32 %v2782, 1.442695
    %v2786 = vpow.pop %v2785
    %v2787 = vsel %vm120, %v2786, 0.0
    %2788 = vadd.xlane.f32.xlu0 %v2787
    %v2789 = vpop.xlane.xlu0 %2788
    %v2790 = vrcp.pop %v2789
    %v2791 = vmul.f32 %v2786, %v2790
    %v2792 = vpack.c.bf16 %v2791, %v2791
    %2793 = vrot.lane.b32.xlu0 %v2763, 64
    %v2794 = vpop.permute.xlu0 %2793
    %v2796 = vsel %vm120, %v2792, 0
    %v2799 = vsel %vm153, %v2794, 0
    %2801 = vmatpush.bf16.msra.mxu0 0
    %2802 = vmatpush.bf16.msra.mxu0 0
    %2803 = vmatpush.bf16.msra.mxu0 0
    %2804 = vmatpush.bf16.msra.mxu0 0
    %2805 = vmatpush.bf16.msra.mxu0 0
    %2806 = vmatpush.bf16.msra.mxu0 0
    %2807 = vmatpush.bf16.msra.mxu0 0
    %2808 = vmatpush.bf16.msra.mxu0 %v2799
    %2809 = vmatmul.bf16.gmra.mxu0 %v2796
    %v2810 = vpop.f32.mrf.mxu0
    %v2811 = vadd.f32 0.0, %v2810
    %v2812 = vpop.f32.mrf.mxu0
    %2813 = vdwg.mxu0
    %2814 = vrot.lane.b32.xlu0 %v2763, 120
    %v2815 = vpop.permute.xlu0 %2814
    %2816 = vrot.lane.b32.xlu0 %v2763, 88
    %v2817 = vpop.permute.xlu0 %2816
    %v2819 = vsel %vm120, %v2815, 0
    %v2822 = vsel %vm120, %v2817, 0
    %2824 = vmatpush.bf16.xpose.msra.mxu0 0
    %2825 = vmatpush.bf16.xpose.msra.mxu0 0
    %2826 = vmatpush.bf16.xpose.msra.mxu0 0
    %2827 = vmatpush.bf16.xpose.msra.mxu0 0
    %2828 = vmatpush.bf16.xpose.msra.mxu0 0
    %2829 = vmatpush.bf16.xpose.msra.mxu0 0
    %2830 = vmatpush.bf16.xpose.msra.mxu0 0
    %2831 = vmatpush.bf16.xpose.msra.mxu0 %v2822
    %2832 = vmatmul.bf16.gmra.mxu0 %v2819
    %v2833 = vpop.f32.mrf.mxu0
    %v2834 = vadd.f32 0.0, %v2833
    %v2835 = vpop.f32.mrf.mxu0
    %2836 = vdwg.mxu0
    %v2837 = vmul.f32 %v2834, 1.442695
    %v2838 = vpow.pop %v2837
    %v2839 = vsel %vm120, %v2838, 0.0
    %2840 = vadd.xlane.f32.xlu0 %v2839
    %v2841 = vpop.xlane.xlu0 %2840
    %v2842 = vrcp.pop %v2841
    %v2843 = vmul.f32 %v2838, %v2842
    %v2844 = vpack.c.bf16 %v2843, %v2843
    %2845 = vrot.lane.b32.xlu0 %v2763, 56
    %v2846 = vpop.permute.xlu0 %2845
    %v2848 = vsel %vm120, %v2844, 0
    %v2851 = vsel %vm153, %v2846, 0
    %2853 = vmatpush.bf16.msra.mxu0 0
    %2854 = vmatpush.bf16.msra.mxu0 0
    %2855 = vmatpush.bf16.msra.mxu0 0
    %2856 = vmatpush.bf16.msra.mxu0 0
    %2857 = vmatpush.bf16.msra.mxu0 0
    %2858 = vmatpush.bf16.msra.mxu0 0
    %2859 = vmatpush.bf16.msra.mxu0 0
    %2860 = vmatpush.bf16.msra.mxu0 %v2851
    %2861 = vmatmul.bf16.gmra.mxu0 %v2848
    %v2862 = vpop.f32.mrf.mxu0
    %v2863 = vadd.f32 0.0, %v2862
    %v2864 = vpop.f32.mrf.mxu0
    %2865 = vdwg.mxu0
    %2866 = vrot.lane.b32.xlu0 %v2763, 112
    %v2867 = vpop.permute.xlu0 %2866
    %2868 = vrot.lane.b32.xlu0 %v2763, 80
    %v2869 = vpop.permute.xlu0 %2868
    %v2871 = vsel %vm120, %v2867, 0
    %v2874 = vsel %vm120, %v2869, 0
    %2876 = vmatpush.bf16.xpose.msra.mxu0 0
    %2877 = vmatpush.bf16.xpose.msra.mxu0 0
    %2878 = vmatpush.bf16.xpose.msra.mxu0 0
    %2879 = vmatpush.bf16.xpose.msra.mxu0 0
    %2880 = vmatpush.bf16.xpose.msra.mxu0 0
    %2881 = vmatpush.bf16.xpose.msra.mxu0 0
    %2882 = vmatpush.bf16.xpose.msra.mxu0 0
    %2883 = vmatpush.bf16.xpose.msra.mxu0 %v2874
    %2884 = vmatmul.bf16.gmra.mxu0 %v2871
    %v2885 = vpop.f32.mrf.mxu0
    %v2886 = vadd.f32 0.0, %v2885
    %v2887 = vpop.f32.mrf.mxu0
    %2888 = vdwg.mxu0
    %v2889 = vmul.f32 %v2886, 1.442695
    %v2890 = vpow.pop %v2889
    %v2891 = vsel %vm120, %v2890, 0.0
    %2892 = vadd.xlane.f32.xlu0 %v2891
    %v2893 = vpop.xlane.xlu0 %2892
    %v2894 = vrcp.pop %v2893
    %v2895 = vmul.f32 %v2890, %v2894
    %v2896 = vpack.c.bf16 %v2895, %v2895
    %2897 = vrot.lane.b32.xlu0 %v2763, 48
    %v2898 = vpop.permute.xlu0 %2897
    %v2900 = vsel %vm120, %v2896, 0
    %v2903 = vsel %vm153, %v2898, 0
    %2905 = vmatpush.bf16.msra.mxu0 0
    %2906 = vmatpush.bf16.msra.mxu0 0
    %2907 = vmatpush.bf16.msra.mxu0 0
    %2908 = vmatpush.bf16.msra.mxu0 0
    %2909 = vmatpush.bf16.msra.mxu0 0
    %2910 = vmatpush.bf16.msra.mxu0 0
    %2911 = vmatpush.bf16.msra.mxu0 0
    %2912 = vmatpush.bf16.msra.mxu0 %v2903
    %2913 = vmatmul.bf16.gmra.mxu0 %v2900
    %v2914 = vpop.f32.mrf.mxu0
    %v2915 = vadd.f32 0.0, %v2914
    %v2916 = vpop.f32.mrf.mxu0
    %2917 = vdwg.mxu0
    %2918 = vrot.lane.b32.xlu0 %v2763, 104
    %v2919 = vpop.permute.xlu0 %2918
    %2920 = vrot.lane.b32.xlu0 %v2763, 72
    %v2921 = vpop.permute.xlu0 %2920
    %v2923 = vsel %vm120, %v2919, 0
    %v2926 = vsel %vm120, %v2921, 0
    %2928 = vmatpush.bf16.xpose.msra.mxu0 0
    %2929 = vmatpush.bf16.xpose.msra.mxu0 0
    %2930 = vmatpush.bf16.xpose.msra.mxu0 0
    %2931 = vmatpush.bf16.xpose.msra.mxu0 0
    %2932 = vmatpush.bf16.xpose.msra.mxu0 0
    %2933 = vmatpush.bf16.xpose.msra.mxu0 0
    %2934 = vmatpush.bf16.xpose.msra.mxu0 0
    %2935 = vmatpush.bf16.xpose.msra.mxu0 %v2926
    %2936 = vmatmul.bf16.gmra.mxu0 %v2923
    %v2937 = vpop.f32.mrf.mxu0
    %v2938 = vadd.f32 0.0, %v2937
    %v2939 = vpop.f32.mrf.mxu0
    %2940 = vdwg.mxu0
    %v2941 = vmul.f32 %v2938, 1.442695
    %v2942 = vpow.pop %v2941
    %v2943 = vsel %vm120, %v2942, 0.0
    %2944 = vadd.xlane.f32.xlu0 %v2943
    %v2945 = vpop.xlane.xlu0 %2944
    %v2946 = vrcp.pop %v2945
    %v2947 = vmul.f32 %v2942, %v2946
    %v2948 = vpack.c.bf16 %v2947, %v2947
    %2949 = vrot.lane.b32.xlu0 %v2763, 40
    %v2950 = vpop.permute.xlu0 %2949
    %v2952 = vsel %vm120, %v2948, 0
    %v2955 = vsel %vm153, %v2950, 0
    %2957 = vmatpush.bf16.msra.mxu0 0
    %2958 = vmatpush.bf16.msra.mxu0 0
    %2959 = vmatpush.bf16.msra.mxu0 0
    %2960 = vmatpush.bf16.msra.mxu0 0
    %2961 = vmatpush.bf16.msra.mxu0 0
    %2962 = vmatpush.bf16.msra.mxu0 0
    %2963 = vmatpush.bf16.msra.mxu0 0
    %2964 = vmatpush.bf16.msra.mxu0 %v2955
    %2965 = vmatmul.bf16.gmra.mxu0 %v2952
    %v2966 = vpop.f32.mrf.mxu0
    %v2967 = vadd.f32 0.0, %v2966
    %v2968 = vpop.f32.mrf.mxu0
    %2969 = vdwg.mxu0
    %2971 = vrot.lane.b32.xlu0 %v2863, 8
    %v2972 = vpop.permute.xlu0 %2971
    %2975 = vrot.lane.b32.xlu0 %v2915, 16
    %v2976 = vpop.permute.xlu0 %2975
    %2979 = vrot.lane.b32.xlu0 %v2967, 24
    %v2980 = vpop.permute.xlu0 %2979
    %v2982 = vsel %vm120, %v2811, %v2972
    %v2983 = vsel %vm339, %v2982, %v2976
    %v2984 = vsel %vm341, %v2983, %v2980
    %v2985 = vpack.c.bf16 %v2984, %v2984
    %v2987 = vsel %vm97, %v2985, 0
    %2989 = vmatpush.bf16.msra.mxu0 0
    %2990 = vmatpush.bf16.msra.mxu0 0
    %2991 = vmatpush.bf16.msra.mxu0 0
    %2992 = vmatpush.bf16.msra.mxu0 0
    %2993 = vmatpush.bf16.msra.mxu0 0
    %2994 = vmatpush.bf16.msra.mxu0 0
    %2995 = vmatpush.bf16.msra.mxu0 %v353
    %2996 = vmatpush.bf16.msra.mxu0 %v352
    %2997 = vmatmul.bf16.gmra.mxu0 %v2987
    %v2998 = vpop.f32.mrf.mxu0
    %v2999 = vadd.f32 %v81, %v2998
    %v3000 = vpop.f32.mrf.mxu0
    %3001 = vdwg.mxu0
    %v3002 = vtanh.pop %v2999
    %v3003 = vmul.f32 %v3002, 0.33333334
    %v3004 = vadd.f32 %v2218, %v3003
    %v3005 = vpack.c.bf16 %v3004, %v3004
    %v3007 = vsel %vm97, %v3005, 0
    %3009 = vmatpush.bf16.msra.mxu0 0
    %3010 = vmatpush.bf16.msra.mxu0 0
    %3011 = vmatpush.bf16.msra.mxu0 0
    %3012 = vmatpush.bf16.msra.mxu0 0
    %3013 = vmatpush.bf16.msra.mxu0 0
    %3014 = vmatpush.bf16.msra.mxu0 0
    %3015 = vmatpush.bf16.msra.mxu0 %v94
    %3016 = vmatpush.bf16.msra.mxu0 %v93
    %3017 = vmatmul.bf16.gmra.mxu0 %v3007
    %v3018 = vpop.f32.mrf.mxu0
    %v3019 = vadd.f32 %v77, %v3018
    %v3020 = vpop.f32.mrf.mxu0
    %3021 = vdwg.mxu0
    %v3022 = vpack.c.bf16 %v3019, %v3019
    %v3024 = vunpack.c.l.b16 %v3022
    %v3025 = vpack.c.b16 %v3024, %v3024
    %3026 = vrot.lane.b32.xlu0 %v3025, 96
    %v3027 = vpop.permute.xlu0 %3026
    %v3029 = vsel %vm120, %v3022, 0
    %v3032 = vsel %vm120, %v3027, 0
    %3034 = vmatpush.bf16.xpose.msra.mxu0 0
    %3035 = vmatpush.bf16.xpose.msra.mxu0 0
    %3036 = vmatpush.bf16.xpose.msra.mxu0 0
    %3037 = vmatpush.bf16.xpose.msra.mxu0 0
    %3038 = vmatpush.bf16.xpose.msra.mxu0 0
    %3039 = vmatpush.bf16.xpose.msra.mxu0 0
    %3040 = vmatpush.bf16.xpose.msra.mxu0 0
    %3041 = vmatpush.bf16.xpose.msra.mxu0 %v3032
    %3042 = vmatmul.bf16.gmra.mxu0 %v3029
    %v3043 = vpop.f32.mrf.mxu0
    %v3044 = vadd.f32 0.0, %v3043
    %v3045 = vpop.f32.mrf.mxu0
    %3046 = vdwg.mxu0
    %v3047 = vmul.f32 %v3044, 1.442695
    %v3048 = vpow.pop %v3047
    %v3049 = vsel %vm120, %v3048, 0.0
    %3050 = vadd.xlane.f32.xlu0 %v3049
    %v3051 = vpop.xlane.xlu0 %3050
    %v3052 = vrcp.pop %v3051
    %v3053 = vmul.f32 %v3048, %v3052
    %v3054 = vpack.c.bf16 %v3053, %v3053
    %3055 = vrot.lane.b32.xlu0 %v3025, 64
    %v3056 = vpop.permute.xlu0 %3055
    %v3058 = vsel %vm120, %v3054, 0
    %v3061 = vsel %vm153, %v3056, 0
    %3063 = vmatpush.bf16.msra.mxu0 0
    %3064 = vmatpush.bf16.msra.mxu0 0
    %3065 = vmatpush.bf16.msra.mxu0 0
    %3066 = vmatpush.bf16.msra.mxu0 0
    %3067 = vmatpush.bf16.msra.mxu0 0
    %3068 = vmatpush.bf16.msra.mxu0 0
    %3069 = vmatpush.bf16.msra.mxu0 0
    %3070 = vmatpush.bf16.msra.mxu0 %v3061
    %3071 = vmatmul.bf16.gmra.mxu0 %v3058
    %v3072 = vpop.f32.mrf.mxu0
    %v3073 = vadd.f32 0.0, %v3072
    %v3074 = vpop.f32.mrf.mxu0
    %3075 = vdwg.mxu0
    %3076 = vrot.lane.b32.xlu0 %v3025, 120
    %v3077 = vpop.permute.xlu0 %3076
    %3078 = vrot.lane.b32.xlu0 %v3025, 88
    %v3079 = vpop.permute.xlu0 %3078
    %v3081 = vsel %vm120, %v3077, 0
    %v3084 = vsel %vm120, %v3079, 0
    %3086 = vmatpush.bf16.xpose.msra.mxu0 0
    %3087 = vmatpush.bf16.xpose.msra.mxu0 0
    %3088 = vmatpush.bf16.xpose.msra.mxu0 0
    %3089 = vmatpush.bf16.xpose.msra.mxu0 0
    %3090 = vmatpush.bf16.xpose.msra.mxu0 0
    %3091 = vmatpush.bf16.xpose.msra.mxu0 0
    %3092 = vmatpush.bf16.xpose.msra.mxu0 0
    %3093 = vmatpush.bf16.xpose.msra.mxu0 %v3084
    %3094 = vmatmul.bf16.gmra.mxu0 %v3081
    %v3095 = vpop.f32.mrf.mxu0
    %v3096 = vadd.f32 0.0, %v3095
    %v3097 = vpop.f32.mrf.mxu0
    %3098 = vdwg.mxu0
    %v3099 = vmul.f32 %v3096, 1.442695
    %v3100 = vpow.pop %v3099
    %v3101 = vsel %vm120, %v3100, 0.0
    %3102 = vadd.xlane.f32.xlu0 %v3101
    %v3103 = vpop.xlane.xlu0 %3102
    %v3104 = vrcp.pop %v3103
    %v3105 = vmul.f32 %v3100, %v3104
    %v3106 = vpack.c.bf16 %v3105, %v3105
    %3107 = vrot.lane.b32.xlu0 %v3025, 56
    %v3108 = vpop.permute.xlu0 %3107
    %v3110 = vsel %vm120, %v3106, 0
    %v3113 = vsel %vm153, %v3108, 0
    %3115 = vmatpush.bf16.msra.mxu0 0
    %3116 = vmatpush.bf16.msra.mxu0 0
    %3117 = vmatpush.bf16.msra.mxu0 0
    %3118 = vmatpush.bf16.msra.mxu0 0
    %3119 = vmatpush.bf16.msra.mxu0 0
    %3120 = vmatpush.bf16.msra.mxu0 0
    %3121 = vmatpush.bf16.msra.mxu0 0
    %3122 = vmatpush.bf16.msra.mxu0 %v3113
    %3123 = vmatmul.bf16.gmra.mxu0 %v3110
    %v3124 = vpop.f32.mrf.mxu0
    %v3125 = vadd.f32 0.0, %v3124
    %v3126 = vpop.f32.mrf.mxu0
    %3127 = vdwg.mxu0
    %3128 = vrot.lane.b32.xlu0 %v3025, 112
    %v3129 = vpop.permute.xlu0 %3128
    %3130 = vrot.lane.b32.xlu0 %v3025, 80
    %v3131 = vpop.permute.xlu0 %3130
    %v3133 = vsel %vm120, %v3129, 0
    %v3136 = vsel %vm120, %v3131, 0
    %3138 = vmatpush.bf16.xpose.msra.mxu0 0
    %3139 = vmatpush.bf16.xpose.msra.mxu0 0
    %3140 = vmatpush.bf16.xpose.msra.mxu0 0
    %3141 = vmatpush.bf16.xpose.msra.mxu0 0
    %3142 = vmatpush.bf16.xpose.msra.mxu0 0
    %3143 = vmatpush.bf16.xpose.msra.mxu0 0
    %3144 = vmatpush.bf16.xpose.msra.mxu0 0
    %3145 = vmatpush.bf16.xpose.msra.mxu0 %v3136
    %3146 = vmatmul.bf16.gmra.mxu0 %v3133
    %v3147 = vpop.f32.mrf.mxu0
    %v3148 = vadd.f32 0.0, %v3147
    %v3149 = vpop.f32.mrf.mxu0
    %3150 = vdwg.mxu0
    %v3151 = vmul.f32 %v3148, 1.442695
    %v3152 = vpow.pop %v3151
    %v3153 = vsel %vm120, %v3152, 0.0
    %3154 = vadd.xlane.f32.xlu0 %v3153
    %v3155 = vpop.xlane.xlu0 %3154
    %v3156 = vrcp.pop %v3155
    %v3157 = vmul.f32 %v3152, %v3156
    %v3158 = vpack.c.bf16 %v3157, %v3157
    %3159 = vrot.lane.b32.xlu0 %v3025, 48
    %v3160 = vpop.permute.xlu0 %3159
    %v3162 = vsel %vm120, %v3158, 0
    %v3165 = vsel %vm153, %v3160, 0
    %3167 = vmatpush.bf16.msra.mxu0 0
    %3168 = vmatpush.bf16.msra.mxu0 0
    %3169 = vmatpush.bf16.msra.mxu0 0
    %3170 = vmatpush.bf16.msra.mxu0 0
    %3171 = vmatpush.bf16.msra.mxu0 0
    %3172 = vmatpush.bf16.msra.mxu0 0
    %3173 = vmatpush.bf16.msra.mxu0 0
    %3174 = vmatpush.bf16.msra.mxu0 %v3165
    %3175 = vmatmul.bf16.gmra.mxu0 %v3162
    %v3176 = vpop.f32.mrf.mxu0
    %v3177 = vadd.f32 0.0, %v3176
    %v3178 = vpop.f32.mrf.mxu0
    %3179 = vdwg.mxu0
    %3180 = vrot.lane.b32.xlu0 %v3025, 104
    %v3181 = vpop.permute.xlu0 %3180
    %3182 = vrot.lane.b32.xlu0 %v3025, 72
    %v3183 = vpop.permute.xlu0 %3182
    %v3185 = vsel %vm120, %v3181, 0
    %v3188 = vsel %vm120, %v3183, 0
    %3190 = vmatpush.bf16.xpose.msra.mxu0 0
    %3191 = vmatpush.bf16.xpose.msra.mxu0 0
    %3192 = vmatpush.bf16.xpose.msra.mxu0 0
    %3193 = vmatpush.bf16.xpose.msra.mxu0 0
    %3194 = vmatpush.bf16.xpose.msra.mxu0 0
    %3195 = vmatpush.bf16.xpose.msra.mxu0 0
    %3196 = vmatpush.bf16.xpose.msra.mxu0 0
    %3197 = vmatpush.bf16.xpose.msra.mxu0 %v3188
    %3198 = vmatmul.bf16.gmra.mxu0 %v3185
    %v3199 = vpop.f32.mrf.mxu0
    %v3200 = vadd.f32 0.0, %v3199
    %v3201 = vpop.f32.mrf.mxu0
    %3202 = vdwg.mxu0
    %v3203 = vmul.f32 %v3200, 1.442695
    %v3204 = vpow.pop %v3203
    %v3205 = vsel %vm120, %v3204, 0.0
    %3206 = vadd.xlane.f32.xlu0 %v3205
    %v3207 = vpop.xlane.xlu0 %3206
    %v3208 = vrcp.pop %v3207
    %v3209 = vmul.f32 %v3204, %v3208
    %v3210 = vpack.c.bf16 %v3209, %v3209
    %3211 = vrot.lane.b32.xlu0 %v3025, 40
    %v3212 = vpop.permute.xlu0 %3211
    %v3214 = vsel %vm120, %v3210, 0
    %v3217 = vsel %vm153, %v3212, 0
    %3219 = vmatpush.bf16.msra.mxu0 0
    %3220 = vmatpush.bf16.msra.mxu0 0
    %3221 = vmatpush.bf16.msra.mxu0 0
    %3222 = vmatpush.bf16.msra.mxu0 0
    %3223 = vmatpush.bf16.msra.mxu0 0
    %3224 = vmatpush.bf16.msra.mxu0 0
    %3225 = vmatpush.bf16.msra.mxu0 0
    %3226 = vmatpush.bf16.msra.mxu0 %v3217
    %3227 = vmatmul.bf16.gmra.mxu0 %v3214
    %v3228 = vpop.f32.mrf.mxu0
    %v3229 = vadd.f32 0.0, %v3228
    %v3230 = vpop.f32.mrf.mxu0
    %3231 = vdwg.mxu0
    %3233 = vrot.lane.b32.xlu0 %v3125, 8
    %v3234 = vpop.permute.xlu0 %3233
    %3237 = vrot.lane.b32.xlu0 %v3177, 16
    %v3238 = vpop.permute.xlu0 %3237
    %3241 = vrot.lane.b32.xlu0 %v3229, 24
    %v3242 = vpop.permute.xlu0 %3241
    %v3244 = vsel %vm120, %v3073, %v3234
    %v3245 = vsel %vm339, %v3244, %v3238
    %v3246 = vsel %vm341, %v3245, %v3242
    %v3247 = vpack.c.bf16 %v3246, %v3246
    %v3249 = vsel %vm97, %v3247, 0
    %3251 = vmatpush.bf16.msra.mxu0 0
    %3252 = vmatpush.bf16.msra.mxu0 0
    %3253 = vmatpush.bf16.msra.mxu0 0
    %3254 = vmatpush.bf16.msra.mxu0 0
    %3255 = vmatpush.bf16.msra.mxu0 0
    %3256 = vmatpush.bf16.msra.mxu0 0
    %3257 = vmatpush.bf16.msra.mxu0 %v353
    %3258 = vmatpush.bf16.msra.mxu0 %v352
    %3259 = vmatmul.bf16.gmra.mxu0 %v3249
    %v3260 = vpop.f32.mrf.mxu0
    %v3261 = vadd.f32 %v81, %v3260
    %v3262 = vpop.f32.mrf.mxu0
    %3263 = vdwg.mxu0
    %v3264 = vtanh.pop %v3261
    %v3265 = vmul.f32 %v2740, 2.0
    %v3266 = vadd.f32 %v2478, %v3265
    %v3267 = vmul.f32 %v3002, 2.0
    %v3268 = vadd.f32 %v3266, %v3267
    %v3269 = vadd.f32 %v3268, %v3264
    %v3270 = vmul.f32 %v3269, 0.055555556
    %v3271 = vadd.f32 %v2218, %v3270
    %3272 = vst.msk [vmem:[#allocation8] sm:$0xff] %vm97, %v3271
    // Predicated region
    $region34: #{nightclub_ode_forward.1} parent=1 // pred_check
      _
    $region35: #{nightclub_ode_forward.1} parent=1 // pred_check_branch
      %3274 = sbr.rel (0) target = $region37
    $region36: #{nightclub_ode_forward.1} parent=1 // pred_region
      %3276 = vsyncadd [#allocation4], 0
      %s3278 = sshll.u32 [#allocation8], 4
      %s3279 = int_to_ptr.vmem [resolvable:$true] %s3278
      %s3280 = sshll.u32 %s5, 4
      %s3281 = int_to_ptr.hbm [resolvable:$true] %s3280
      %3283 = dma.vmem_to_hbm [thread:$0]  %s3279, 128, %s3281, [#allocation4]
    $region37: #{nightclub_ode_forward.1} parent=1 // pred_fallthru
      _
    // Predicated region
    $region38: #{nightclub_ode_forward.1} parent=1 // pred_check
      _
    $region39: #{nightclub_ode_forward.1} parent=1 // pred_check_branch
      %3285 = sbr.rel (0) target = $region41
    $region40: #{nightclub_ode_forward.1} parent=1 // pred_region
      %3287 = dma.done [#allocation4], 128
    $region41: #{nightclub_ode_forward.1} parent=1 // pred_fallthru
      _
    %3288 = vsyncpa [#allocation3], 1
    %3289 = vsyncpa [#allocation6], 1
    %3290 = vsyncpa [#allocation4], 1

</llo_original>
